<compile_context>
chip_gen: v7x
topology: tpu7x:2x2x1
jax: 0.10.0
libtpu: 0.0.40
codegen_flags: <defaults>
</compile_context>

<pallas_src>
import functools

import jax
import jax.numpy as jnp
from jax.experimental import pallas as pl
from jax.experimental.pallas import tpu as pltpu


# ------------------------------ fused encoder kernel ------------------------------

def _encoder_kernel(emb_ref, mask_ref, emb_g_ref, emb_b_ref,
                    wqkv_ref, bqkv_ref, wo_ref, bo_ref,
                    ln1_g_ref, ln1_b_ref, w1_ref, b1_ref,
                    w2_ref, b2_ref, ln2_g_ref, ln2_b_ref,
                    wp_ref, bp_ref,
                    out_ref,
                    x_scratch, ctx_scratch,
                    *, batch, seq, hidden, num_heads, head_dim, eps):
    l = pl.program_id(0)
    B, S, H = batch, seq, hidden
    nH, d = num_heads, head_dim
    scale = 1.0 / float(d) ** 0.5

    def layernorm(v, g, b):
        mu = jnp.mean(v, axis=-1, keepdims=True)
        var = jnp.mean(jnp.square(v - mu), axis=-1, keepdims=True)
        return (v - mu) * jax.lax.rsqrt(var + eps) * g + b

    def proj(v, w, b):
        # bf16 MXU inputs, f32 accumulation; bias add in f32.
        return jnp.dot(v.astype(jnp.bfloat16), w,
                       preferred_element_type=jnp.float32) + b

    # ---- layer 0 only: embedding sum (done in glue) -> LayerNorm, park in VMEM ----
    @pl.when(l == 0)
    def _():
        x_scratch[...] = layernorm(emb_ref[...], emb_g_ref[...], emb_b_ref[...])

    x = x_scratch[...]                                          # (B*S, H) f32, resident

    # ---- fused Q/K/V projection: one (B*S, H) x (H, 3H) MXU push ----
    qkv = proj(x, wqkv_ref[0], bqkv_ref[0])                     # (B*S, 3H) f32

    # ---- additive padding bias built in-kernel from the (B, S) mask (f32) ----
    neg_bias = (1.0 - mask_ref[...]) * -1e9                     # (B, S)
    bias = neg_bias[:, None, :]                                 # (B, 1, S)

    # ---- self-attention: static loop over heads, batched over B inside each head ----
    for h in range(nH):
        q = qkv[:, h * d:(h + 1) * d].reshape(B, S, d)
        k = qkv[:, H + h * d:H + (h + 1) * d].reshape(B, S, d)
        v = qkv[:, 2 * H + h * d:2 * H + (h + 1) * d].reshape(B, S, d)
        s = jnp.einsum("bqd,bkd->bqk", q, k,
                       preferred_element_type=jnp.float32) * scale + bias
        m = jnp.max(s, axis=-1, keepdims=True)
        p = jnp.exp(s - m)
        p = p * pl.reciprocal(jnp.sum(p, axis=-1, keepdims=True), approx=True)
        ctx_h = jnp.einsum("bqk,bkd->bqd", p, v,
                           preferred_element_type=jnp.float32)  # (B, S, d)
        ctx_scratch[:, h * d:(h + 1) * d] = ctx_h.reshape(B * S, d)

    # ---- output projection + Add&LN ----
    attn_out = proj(ctx_scratch[...], wo_ref[0], bo_ref[0])
    x = layernorm(attn_out + x, ln1_g_ref[0], ln1_b_ref[0])

    # ---- feed-forward + Add&LN ----
    ffn = proj(x, w1_ref[0], b1_ref[0])
    # TODO(synk): HF BERT uses exact (erf) GELU; tanh-approx GELU is used since erf
    # does not have a guaranteed Mosaic lowering.
    ffn = jax.nn.gelu(ffn, approximate=True)
    ffn = proj(ffn, w2_ref[0], b2_ref[0])
    x = layernorm(ffn + x, ln2_g_ref[0], ln2_b_ref[0])

    x_scratch[...] = x                                          # carry to next layer

    # ---- last layer only: pooler_output = tanh(W_p @ hidden[CLS] + b_p) ----
    @pl.when(l == pl.num_programs(0) - 1)
    def _():
        cls = x.reshape(B, S, H)[:, 0, :]                       # (B, H) CLS rows
        out_ref[...] = jnp.tanh(proj(cls, wp_ref[...], bp_ref[...]))


# --------------------------------- model wrapper ---------------------------------

class Config:
    vocab_size = 128
    hidden = 128           # lane-dense (multiple of 128)
    num_layers = 2
    num_heads = 4
    intermediate = 512     # lane-dense (multiple of 128)
    max_pos = 16
    type_vocab = 2


def init_params(key, cfg):
    H, I, L = cfg.hidden, cfg.intermediate, cfg.num_layers

    def normal(k, shape, scale=0.02, dtype=jnp.float32):
        return (scale * jax.random.normal(k, shape, dtype=jnp.float32)).astype(dtype)

    keys = iter(jax.random.split(key, 16))
    return {
        # embeddings (gathered in glue; f32)
        "word_emb": normal(next(keys), (cfg.vocab_size, H)),
        "pos_emb": normal(next(keys), (cfg.max_pos, H)),
        "type_emb": normal(next(keys), (cfg.type_vocab, H)),
        "emb_ln_g": jnp.ones((1, H), jnp.float32),
        "emb_ln_b": jnp.zeros((1, H), jnp.float32),
        # per-layer weights, stacked on a leading layer axis; matmul weights in bf16
        "wqkv": normal(next(keys), (L, H, 3 * H), dtype=jnp.bfloat16),
        "bqkv": jnp.zeros((L, 1, 3 * H), jnp.float32),
        "wo": normal(next(keys), (L, H, H), dtype=jnp.bfloat16),
        "bo": jnp.zeros((L, 1, H), jnp.float32),
        "ln1_g": jnp.ones((L, 1, H), jnp.float32),
        "ln1_b": jnp.zeros((L, 1, H), jnp.float32),
        "w1": normal(next(keys), (L, H, I), dtype=jnp.bfloat16),
        "b1": jnp.zeros((L, 1, I), jnp.float32),
        "w2": normal(next(keys), (L, I, H), dtype=jnp.bfloat16),
        "b2": jnp.zeros((L, 1, H), jnp.float32),
        "ln2_g": jnp.ones((L, 1, H), jnp.float32),
        "ln2_b": jnp.zeros((L, 1, H), jnp.float32),
        # pooler
        "wp": normal(next(keys), (H, H), dtype=jnp.bfloat16),
        "bp": jnp.zeros((1, H), jnp.float32),
    }


def bert_sentiment_forward(params, input_ids, attention_mask, cfg):
    B, S = input_ids.shape
    H, nH, I, L = cfg.hidden, cfg.num_heads, cfg.intermediate, cfg.num_layers
    d = H // nH
    BS = B * S

    # embedding gathers are glue; everything downstream runs inside the fused kernel
    word = params["word_emb"][input_ids]                         # (B, S, H)
    pos = params["pos_emb"][:S][None, :, :]                      # (1, S, H)
    tok = params["type_emb"][0][None, None, :]                   # token_type_ids = 0
    emb = (word + pos + tok).reshape(BS, H).astype(jnp.float32)
    mask = attention_mask.astype(jnp.float32)                    # (B, S)

    kernel = functools.partial(
        _encoder_kernel,
        batch=B, seq=S, hidden=H, num_heads=nH, head_dim=d, eps=1e-12)

    layer_map = lambda l: (l, 0, 0)   # per-layer stacked weights
    const2 = lambda l: (0, 0)         # shared / full-array blocks

    pooled = pl.pallas_call(
        kernel,
        out_shape=jax.ShapeDtypeStruct((B, H), jnp.float32),
        grid=(L,),
        in_specs=[
            pl.BlockSpec((BS, H), const2),        # emb
            pl.BlockSpec((B, S), const2),         # mask
            pl.BlockSpec((1, H), const2),         # emb_ln_g
            pl.BlockSpec((1, H), const2),         # emb_ln_b
            pl.BlockSpec((1, H, 3 * H), layer_map),   # wqkv
            pl.BlockSpec((1, 1, 3 * H), layer_map),   # bqkv
            pl.BlockSpec((1, H, H), layer_map),       # wo
            pl.BlockSpec((1, 1, H), layer_map),       # bo
            pl.BlockSpec((1, 1, H), layer_map),       # ln1_g
            pl.BlockSpec((1, 1, H), layer_map),       # ln1_b
            pl.BlockSpec((1, H, I), layer_map),       # w1
            pl.BlockSpec((1, 1, I), layer_map),       # b1
            pl.BlockSpec((1, I, H), layer_map),       # w2
            pl.BlockSpec((1, 1, H), layer_map),       # b2
            pl.BlockSpec((1, 1, H), layer_map),       # ln2_g
            pl.BlockSpec((1, 1, H), layer_map),       # ln2_b
            pl.BlockSpec((H, H), const2),             # wp (pooler)
            pl.BlockSpec((1, H), const2),             # bp
        ],
        out_specs=pl.BlockSpec((B, H), const2),
        scratch_shapes=[
            pltpu.VMEM((BS, H), jnp.float32),   # resident hidden states
            pltpu.VMEM((BS, H), jnp.float32),   # per-layer attention context
        ],
        compiler_params=pltpu.CompilerParams(
            dimension_semantics=("arbitrary",)),   # layer axis is sequential
    )(emb, mask, params["emb_ln_g"], params["emb_ln_b"],
      params["wqkv"], params["bqkv"], params["wo"], params["bo"],
      params["ln1_g"], params["ln1_b"],
      params["w1"], params["b1"], params["w2"], params["b2"],
      params["ln2_g"], params["ln2_b"],
      params["wp"], params["bp"])
    return pooled


# ----------------------------------- main -----------------------------------

if __name__ == "__main__":
    # TODO(synk): the HF tokenizer (text -> input_ids) and pretrained checkpoint load
    # have no Pallas equivalent; deterministic synthetic ids / mask / weights are used.
    cfg = Config()
    key = jax.random.PRNGKey(0)
    pkey, ikey = jax.random.split(key)
    params = init_params(pkey, cfg)

    B, S = 2, 8
    input_ids = jax.random.randint(ikey, (B, S), 0, cfg.vocab_size, dtype=jnp.int32)
    attention_mask = jnp.array([[1, 1, 1, 1, 1, 1, 1, 1],
                                [1, 1, 1, 1, 1, 1, 0, 0]], dtype=jnp.int32)

    out = bert_sentiment_forward(params, input_ids, attention_mask, cfg)
    out = jax.block_until_ready(out)
    assert out.shape == (B, cfg.hidden) and out.dtype == jnp.float32
    assert bool(jnp.all(jnp.isfinite(out)))
    print("KERNEL_OK")
</pallas_src>

<mosaic_0001>
module attributes {stable_mosaic.version = 11 : i64} {
  func.func @_encoder_kernel(%arg0: i32, %arg1: memref<16x128xf32, #tpu.memory_space<vmem>>, %arg2: memref<2x8xf32, #tpu.memory_space<vmem>>, %arg3: memref<1x128xf32, #tpu.memory_space<vmem>>, %arg4: memref<1x128xf32, #tpu.memory_space<vmem>>, %arg5: memref<1x128x384xbf16, #tpu.memory_space<vmem>>, %arg6: memref<1x1x384xf32, #tpu.memory_space<vmem>>, %arg7: memref<1x128x128xbf16, #tpu.memory_space<vmem>>, %arg8: memref<1x1x128xf32, #tpu.memory_space<vmem>>, %arg9: memref<1x1x128xf32, #tpu.memory_space<vmem>>, %arg10: memref<1x1x128xf32, #tpu.memory_space<vmem>>, %arg11: memref<1x128x512xbf16, #tpu.memory_space<vmem>>, %arg12: memref<1x1x512xf32, #tpu.memory_space<vmem>>, %arg13: memref<1x512x128xbf16, #tpu.memory_space<vmem>>, %arg14: memref<1x1x128xf32, #tpu.memory_space<vmem>>, %arg15: memref<1x1x128xf32, #tpu.memory_space<vmem>>, %arg16: memref<1x1x128xf32, #tpu.memory_space<vmem>>, %arg17: memref<128x128xbf16, #tpu.memory_space<vmem>>, %arg18: memref<1x128xf32, #tpu.memory_space<vmem>>, %arg19: memref<2x128xf32, #tpu.memory_space<vmem>>, %arg20: memref<16x128xf32, #tpu.memory_space<vmem>>, %arg21: memref<16x128xf32, #tpu.memory_space<vmem>>) attributes {dimension_semantics = [#tpu.dimension_semantics<arbitrary>], iteration_bounds = array<i64: 2>, scalar_prefetch = 0 : i64, scratch_operands = 2 : i64, tpu.core_type = #tpu.core_type<tc>, window_params = [{pipeline_mode = #tpu.pipeline_mode<synchronous>, transform_indices = @transform_0, window_bounds = array<i64: 16, 128>}, {pipeline_mode = #tpu.pipeline_mode<synchronous>, transform_indices = @transform_1, window_bounds = array<i64: 2, 8>}, {pipeline_mode = #tpu.pipeline_mode<synchronous>, transform_indices = @transform_2, window_bounds = array<i64: 1, 128>}, {pipeline_mode = #tpu.pipeline_mode<synchronous>, transform_indices = @transform_3, window_bounds = array<i64: 1, 128>}, {transform_indices = @transform_4, window_bounds = array<i64: 1, 128, 384>}, {transform_indices = @transform_5, window_bounds = array<i64: 1, 1, 384>}, {transform_indices = @transform_6, window_bounds = array<i64: 1, 128, 128>}, {transform_indices = @transform_7, window_bounds = array<i64: 1, 1, 128>}, {transform_indices = @transform_8, window_bounds = array<i64: 1, 1, 128>}, {transform_indices = @transform_9, window_bounds = array<i64: 1, 1, 128>}, {transform_indices = @transform_10, window_bounds = array<i64: 1, 128, 512>}, {transform_indices = @transform_11, window_bounds = array<i64: 1, 1, 512>}, {transform_indices = @transform_12, window_bounds = array<i64: 1, 512, 128>}, {transform_indices = @transform_13, window_bounds = array<i64: 1, 1, 128>}, {transform_indices = @transform_14, window_bounds = array<i64: 1, 1, 128>}, {transform_indices = @transform_15, window_bounds = array<i64: 1, 1, 128>}, {pipeline_mode = #tpu.pipeline_mode<synchronous>, transform_indices = @transform_16, window_bounds = array<i64: 128, 128>}, {pipeline_mode = #tpu.pipeline_mode<synchronous>, transform_indices = @transform_17, window_bounds = array<i64: 1, 128>}, {pipeline_mode = #tpu.pipeline_mode<synchronous>, transform_indices = @transform_18, window_bounds = array<i64: 2, 128>}]} {
    %c0_i32 = arith.constant 0 : i32
    %0 = arith.cmpi eq, %arg0, %c0_i32 : i32
    %1 = arith.extui %0 : i1 to i32
    %c0_i32_0 = arith.constant 0 : i32
    %2 = arith.cmpi ne, %1, %c0_i32_0 : i32
    scf.if %2 {
      %c0_89 = arith.constant 0 : index
      %c0_90 = arith.constant 0 : index
      %210 = vector.load %arg1[%c0_89, %c0_90] : memref<16x128xf32, #tpu.memory_space<vmem>>, vector<16x128xf32>
      %c0_91 = arith.constant 0 : index
      %c0_92 = arith.constant 0 : index
      %211 = vector.load %arg3[%c0_91, %c0_92] : memref<1x128xf32, #tpu.memory_space<vmem>>, vector<1x128xf32>
      %c0_93 = arith.constant 0 : index
      %c0_94 = arith.constant 0 : index
      %212 = vector.load %arg4[%c0_93, %c0_94] : memref<1x128xf32, #tpu.memory_space<vmem>>, vector<1x128xf32>
      %cst_95 = arith.constant dense<0.000000e+00> : vector<16xf32>
      %213 = vector.multi_reduction <add>, %210, %cst_95 [1] : vector<16x128xf32> to vector<16xf32>
      %214 = vector.shape_cast %213 : vector<16xf32> to vector<16x1xf32>
      %cst_96 = arith.constant 1.280000e+02 : f32
      %215 = vector.broadcast %cst_96 : f32 to vector<16x1xf32>
      %216 = arith.divf %214, %215 : vector<16x1xf32>
      %217 = vector.broadcast %216 : vector<16x1xf32> to vector<16x128xf32>
      %218 = arith.subf %210, %217 : vector<16x128xf32>
      %219 = arith.mulf %218, %218 : vector<16x128xf32>
      %cst_97 = arith.constant dense<0.000000e+00> : vector<16xf32>
      %220 = vector.multi_reduction <add>, %219, %cst_97 [1] : vector<16x128xf32> to vector<16xf32>
      %221 = vector.shape_cast %220 : vector<16xf32> to vector<16x1xf32>
      %cst_98 = arith.constant 1.280000e+02 : f32
      %222 = vector.broadcast %cst_98 : f32 to vector<16x1xf32>
      %223 = arith.divf %221, %222 : vector<16x1xf32>
      %224 = vector.broadcast %216 : vector<16x1xf32> to vector<16x128xf32>
      %225 = arith.subf %210, %224 : vector<16x128xf32>
      %cst_99 = arith.constant 9.99999996E-13 : f32
      %226 = vector.broadcast %cst_99 : f32 to vector<16x1xf32>
      %227 = arith.addf %223, %226 : vector<16x1xf32>
      %228 = math.rsqrt %227 : vector<16x1xf32>
      %229 = vector.broadcast %228 : vector<16x1xf32> to vector<16x128xf32>
      %230 = arith.mulf %225, %229 : vector<16x128xf32>
      %231 = vector.broadcast %211 : vector<1x128xf32> to vector<16x128xf32>
      %232 = arith.mulf %230, %231 : vector<16x128xf32>
      %233 = vector.broadcast %212 : vector<1x128xf32> to vector<16x128xf32>
      %234 = arith.addf %232, %233 : vector<16x128xf32>
      %c0_100 = arith.constant 0 : index
      %c0_101 = arith.constant 0 : index
      %235 = vector.load %arg20[%c0_100, %c0_101] : memref<16x128xf32, #tpu.memory_space<vmem>>, vector<16x128xf32>
      tpu.vector_store %arg20[%c0_100, %c0_101], %234 {strides = array<i32>} : memref<16x128xf32, #tpu.memory_space<vmem>>, vector<16x128xf32>,
    } else {
    }
    %c0 = arith.constant 0 : index
    %c0_1 = arith.constant 0 : index
    %3 = vector.load %arg20[%c0, %c0_1] : memref<16x128xf32, #tpu.memory_space<vmem>>, vector<16x128xf32>
    %c0_2 = arith.constant 0 : index
    %c0_3 = arith.constant 0 : index
    %c0_4 = arith.constant 0 : index
    %4 = vector.load %arg5[%c0_2, %c0_3, %c0_4] : memref<1x128x384xbf16, #tpu.memory_space<vmem>>, vector<1x128x384xbf16>
    %5 = vector.shape_cast %4 : vector<1x128x384xbf16> to vector<128x384xbf16>
    %c0_5 = arith.constant 0 : index
    %c0_6 = arith.constant 0 : index
    %c0_7 = arith.constant 0 : index
    %6 = vector.load %arg6[%c0_5, %c0_6, %c0_7] : memref<1x1x384xf32, #tpu.memory_space<vmem>>, vector<1x1x384xf32>
    %7 = vector.shape_cast %6 : vector<1x1x384xf32> to vector<1x384xf32>
    %8 = arith.truncf %3 : vector<16x128xf32> to vector<16x128xbf16>
    %cst = arith.constant dense<0.000000e+00> : vector<16x384xf32>
    %9 = tpu.matmul %8, %5, %cst {dimension_numbers = #tpu.dot_dimension_numbers<[1], [0], [0], [1], [0, 0, 1, 1], [], []>} : vector<16x128xbf16>, vector<128x384xbf16>, vector<16x384xf32> -> vector<16x384xf32>
    %10 = vector.broadcast %7 : vector<1x384xf32> to vector<16x384xf32>
    %11 = arith.addf %9, %10 : vector<16x384xf32>
    %c0_8 = arith.constant 0 : index
    %c0_9 = arith.constant 0 : index
    %12 = vector.load %arg2[%c0_8, %c0_9] : memref<2x8xf32, #tpu.memory_space<vmem>>, vector<2x8xf32>
    %cst_10 = arith.constant 1.000000e+00 : f32
    %13 = vector.broadcast %cst_10 : f32 to vector<2x8xf32>
    %14 = arith.subf %13, %12 : vector<2x8xf32>
    %cst_11 = arith.constant -1.000000e+09 : f32
    %15 = vector.broadcast %cst_11 : f32 to vector<2x8xf32>
    %16 = arith.mulf %14, %15 : vector<2x8xf32>
    %17 = vector.shape_cast %16 : vector<2x8xf32> to vector<2x1x8xf32>
    %18 = vector.extract_strided_slice %11 {offsets = [0, 0], sizes = [16, 32], strides = [1, 1]} : vector<16x384xf32> to vector<16x32xf32>
    %19 = vector.shape_cast %18 : vector<16x32xf32> to vector<2x8x32xf32>
    %20 = vector.extract_strided_slice %11 {offsets = [0, 128], sizes = [16, 32], strides = [1, 1]} : vector<16x384xf32> to vector<16x32xf32>
    %21 = vector.shape_cast %20 : vector<16x32xf32> to vector<2x8x32xf32>
    %22 = vector.extract_strided_slice %11 {offsets = [0, 256], sizes = [16, 32], strides = [1, 1]} : vector<16x384xf32> to vector<16x32xf32>
    %23 = vector.shape_cast %22 : vector<16x32xf32> to vector<2x8x32xf32>
    "tpu.trace_start"() <{level = 10 : i32, message = "bqd,bkd->bqk"}> : () -> ()
    %cst_12 = arith.constant dense<0.000000e+00> : vector<2x8x8xf32>
    %24 = tpu.matmul %19, %21, %cst_12 {dimension_numbers = #tpu.dot_dimension_numbers<[2], [2], [1], [1], [0, 0, 0, 1, 1, 1], [0], [0]>} : vector<2x8x32xf32>, vector<2x8x32xf32>, vector<2x8x8xf32> -> vector<2x8x8xf32>
    "tpu.trace_stop"() : () -> ()
    %cst_13 = arith.constant 0.176776692 : f32
    %25 = vector.broadcast %cst_13 : f32 to vector<2x8x8xf32>
    %26 = arith.mulf %24, %25 : vector<2x8x8xf32>
    %27 = vector.broadcast %17 : vector<2x1x8xf32> to vector<2x8x8xf32>
    %28 = arith.addf %26, %27 : vector<2x8x8xf32>
    %cst_14 = arith.constant dense<0xFF800000> : vector<2x8xf32>
    %29 = vector.multi_reduction <maximumf>, %28, %cst_14 [2] : vector<2x8x8xf32> to vector<2x8xf32>
    %30 = vector.shape_cast %29 : vector<2x8xf32> to vector<2x8x1xf32>
    %31 = vector.broadcast %30 : vector<2x8x1xf32> to vector<2x8x8xf32>
    %32 = arith.subf %28, %31 : vector<2x8x8xf32>
    %33 = math.exp %32 : vector<2x8x8xf32>
    %cst_15 = arith.constant dense<0.000000e+00> : vector<2x8xf32>
    %34 = vector.multi_reduction <add>, %33, %cst_15 [2] : vector<2x8x8xf32> to vector<2x8xf32>
    %35 = vector.shape_cast %34 : vector<2x8xf32> to vector<2x8x1xf32>
    %36 = tpu.reciprocal %35 {approx = true} : vector<2x8x1xf32> -> vector<2x8x1xf32>
    %37 = vector.broadcast %36 : vector<2x8x1xf32> to vector<2x8x8xf32>
    %38 = arith.mulf %33, %37 : vector<2x8x8xf32>
    "tpu.trace_start"() <{level = 10 : i32, message = "bqk,bkd->bqd"}> : () -> ()
    %cst_16 = arith.constant dense<0.000000e+00> : vector<2x8x32xf32>
    %39 = tpu.matmul %38, %23, %cst_16 {dimension_numbers = #tpu.dot_dimension_numbers<[2], [1], [1], [2], [0, 0, 0, 1, 1, 2], [0], [0]>} : vector<2x8x8xf32>, vector<2x8x32xf32>, vector<2x8x32xf32> -> vector<2x8x32xf32>
    "tpu.trace_stop"() : () -> ()
    %40 = vector.shape_cast %39 : vector<2x8x32xf32> to vector<16x32xf32>
    %c0_17 = arith.constant 0 : index
    %c0_18 = arith.constant 0 : index
    %41 = vector.load %arg21[%c0_17, %c0_18] : memref<16x128xf32, #tpu.memory_space<vmem>>, vector<16x32xf32>
    tpu.vector_store %arg21[%c0_17, %c0_18], %40 {strides = array<i32>} : memref<16x128xf32, #tpu.memory_space<vmem>>, vector<16x32xf32>,
    %42 = vector.extract_strided_slice %11 {offsets = [0, 32], sizes = [16, 32], strides = [1, 1]} : vector<16x384xf32> to vector<16x32xf32>
    %43 = vector.shape_cast %42 : vector<16x32xf32> to vector<2x8x32xf32>
    %44 = vector.extract_strided_slice %11 {offsets = [0, 160], sizes = [16, 32], strides = [1, 1]} : vector<16x384xf32> to vector<16x32xf32>
    %45 = vector.shape_cast %44 : vector<16x32xf32> to vector<2x8x32xf32>
    %46 = vector.extract_strided_slice %11 {offsets = [0, 288], sizes = [16, 32], strides = [1, 1]} : vector<16x384xf32> to vector<16x32xf32>
    %47 = vector.shape_cast %46 : vector<16x32xf32> to vector<2x8x32xf32>
    "tpu.trace_start"() <{level = 10 : i32, message = "bqd,bkd->bqk"}> : () -> ()
    %cst_19 = arith.constant dense<0.000000e+00> : vector<2x8x8xf32>
    %48 = tpu.matmul %43, %45, %cst_19 {dimension_numbers = #tpu.dot_dimension_numbers<[2], [2], [1], [1], [0, 0, 0, 1, 1, 1], [0], [0]>} : vector<2x8x32xf32>, vector<2x8x32xf32>, vector<2x8x8xf32> -> vector<2x8x8xf32>
    "tpu.trace_stop"() : () -> ()
    %cst_20 = arith.constant 0.176776692 : f32
    %49 = vector.broadcast %cst_20 : f32 to vector<2x8x8xf32>
    %50 = arith.mulf %48, %49 : vector<2x8x8xf32>
    %51 = vector.broadcast %17 : vector<2x1x8xf32> to vector<2x8x8xf32>
    %52 = arith.addf %50, %51 : vector<2x8x8xf32>
    %cst_21 = arith.constant dense<0xFF800000> : vector<2x8xf32>
    %53 = vector.multi_reduction <maximumf>, %52, %cst_21 [2] : vector<2x8x8xf32> to vector<2x8xf32>
    %54 = vector.shape_cast %53 : vector<2x8xf32> to vector<2x8x1xf32>
    %55 = vector.broadcast %54 : vector<2x8x1xf32> to vector<2x8x8xf32>
    %56 = arith.subf %52, %55 : vector<2x8x8xf32>
    %57 = math.exp %56 : vector<2x8x8xf32>
    %cst_22 = arith.constant dense<0.000000e+00> : vector<2x8xf32>
    %58 = vector.multi_reduction <add>, %57, %cst_22 [2] : vector<2x8x8xf32> to vector<2x8xf32>
    %59 = vector.shape_cast %58 : vector<2x8xf32> to vector<2x8x1xf32>
    %60 = tpu.reciprocal %59 {approx = true} : vector<2x8x1xf32> -> vector<2x8x1xf32>
    %61 = vector.broadcast %60 : vector<2x8x1xf32> to vector<2x8x8xf32>
    %62 = arith.mulf %57, %61 : vector<2x8x8xf32>
    "tpu.trace_start"() <{level = 10 : i32, message = "bqk,bkd->bqd"}> : () -> ()
    %cst_23 = arith.constant dense<0.000000e+00> : vector<2x8x32xf32>
    %63 = tpu.matmul %62, %47, %cst_23 {dimension_numbers = #tpu.dot_dimension_numbers<[2], [1], [1], [2], [0, 0, 0, 1, 1, 2], [0], [0]>} : vector<2x8x8xf32>, vector<2x8x32xf32>, vector<2x8x32xf32> -> vector<2x8x32xf32>
    "tpu.trace_stop"() : () -> ()
    %64 = vector.shape_cast %63 : vector<2x8x32xf32> to vector<16x32xf32>
    %c0_24 = arith.constant 0 : index
    %c32 = arith.constant 32 : index
    %65 = vector.load %arg21[%c0_24, %c32] : memref<16x128xf32, #tpu.memory_space<vmem>>, vector<16x32xf32>
    tpu.vector_store %arg21[%c0_24, %c32], %64 {strides = array<i32>} : memref<16x128xf32, #tpu.memory_space<vmem>>, vector<16x32xf32>,
    %66 = vector.extract_strided_slice %11 {offsets = [0, 64], sizes = [16, 32], strides = [1, 1]} : vector<16x384xf32> to vector<16x32xf32>
    %67 = vector.shape_cast %66 : vector<16x32xf32> to vector<2x8x32xf32>
    %68 = vector.extract_strided_slice %11 {offsets = [0, 192], sizes = [16, 32], strides = [1, 1]} : vector<16x384xf32> to vector<16x32xf32>
    %69 = vector.shape_cast %68 : vector<16x32xf32> to vector<2x8x32xf32>
    %70 = vector.extract_strided_slice %11 {offsets = [0, 320], sizes = [16, 32], strides = [1, 1]} : vector<16x384xf32> to vector<16x32xf32>
    %71 = vector.shape_cast %70 : vector<16x32xf32> to vector<2x8x32xf32>
    "tpu.trace_start"() <{level = 10 : i32, message = "bqd,bkd->bqk"}> : () -> ()
    %cst_25 = arith.constant dense<0.000000e+00> : vector<2x8x8xf32>
    %72 = tpu.matmul %67, %69, %cst_25 {dimension_numbers = #tpu.dot_dimension_numbers<[2], [2], [1], [1], [0, 0, 0, 1, 1, 1], [0], [0]>} : vector<2x8x32xf32>, vector<2x8x32xf32>, vector<2x8x8xf32> -> vector<2x8x8xf32>
    "tpu.trace_stop"() : () -> ()
    %cst_26 = arith.constant 0.176776692 : f32
    %73 = vector.broadcast %cst_26 : f32 to vector<2x8x8xf32>
    %74 = arith.mulf %72, %73 : vector<2x8x8xf32>
    %75 = vector.broadcast %17 : vector<2x1x8xf32> to vector<2x8x8xf32>
    %76 = arith.addf %74, %75 : vector<2x8x8xf32>
    %cst_27 = arith.constant dense<0xFF800000> : vector<2x8xf32>
    %77 = vector.multi_reduction <maximumf>, %76, %cst_27 [2] : vector<2x8x8xf32> to vector<2x8xf32>
    %78 = vector.shape_cast %77 : vector<2x8xf32> to vector<2x8x1xf32>
    %79 = vector.broadcast %78 : vector<2x8x1xf32> to vector<2x8x8xf32>
    %80 = arith.subf %76, %79 : vector<2x8x8xf32>
    %81 = math.exp %80 : vector<2x8x8xf32>
    %cst_28 = arith.constant dense<0.000000e+00> : vector<2x8xf32>
    %82 = vector.multi_reduction <add>, %81, %cst_28 [2] : vector<2x8x8xf32> to vector<2x8xf32>
    %83 = vector.shape_cast %82 : vector<2x8xf32> to vector<2x8x1xf32>
    %84 = tpu.reciprocal %83 {approx = true} : vector<2x8x1xf32> -> vector<2x8x1xf32>
    %85 = vector.broadcast %84 : vector<2x8x1xf32> to vector<2x8x8xf32>
    %86 = arith.mulf %81, %85 : vector<2x8x8xf32>
    "tpu.trace_start"() <{level = 10 : i32, message = "bqk,bkd->bqd"}> : () -> ()
    %cst_29 = arith.constant dense<0.000000e+00> : vector<2x8x32xf32>
    %87 = tpu.matmul %86, %71, %cst_29 {dimension_numbers = #tpu.dot_dimension_numbers<[2], [1], [1], [2], [0, 0, 0, 1, 1, 2], [0], [0]>} : vector<2x8x8xf32>, vector<2x8x32xf32>, vector<2x8x32xf32> -> vector<2x8x32xf32>
    "tpu.trace_stop"() : () -> ()
    %88 = vector.shape_cast %87 : vector<2x8x32xf32> to vector<16x32xf32>
    %c0_30 = arith.constant 0 : index
    %c64 = arith.constant 64 : index
    %89 = vector.load %arg21[%c0_30, %c64] : memref<16x128xf32, #tpu.memory_space<vmem>>, vector<16x32xf32>
    tpu.vector_store %arg21[%c0_30, %c64], %88 {strides = array<i32>} : memref<16x128xf32, #tpu.memory_space<vmem>>, vector<16x32xf32>,
    %90 = vector.extract_strided_slice %11 {offsets = [0, 96], sizes = [16, 32], strides = [1, 1]} : vector<16x384xf32> to vector<16x32xf32>
    %91 = vector.shape_cast %90 : vector<16x32xf32> to vector<2x8x32xf32>
    %92 = vector.extract_strided_slice %11 {offsets = [0, 224], sizes = [16, 32], strides = [1, 1]} : vector<16x384xf32> to vector<16x32xf32>
    %93 = vector.shape_cast %92 : vector<16x32xf32> to vector<2x8x32xf32>
    %94 = vector.extract_strided_slice %11 {offsets = [0, 352], sizes = [16, 32], strides = [1, 1]} : vector<16x384xf32> to vector<16x32xf32>
    %95 = vector.shape_cast %94 : vector<16x32xf32> to vector<2x8x32xf32>
    "tpu.trace_start"() <{level = 10 : i32, message = "bqd,bkd->bqk"}> : () -> ()
    %cst_31 = arith.constant dense<0.000000e+00> : vector<2x8x8xf32>
    %96 = tpu.matmul %91, %93, %cst_31 {dimension_numbers = #tpu.dot_dimension_numbers<[2], [2], [1], [1], [0, 0, 0, 1, 1, 1], [0], [0]>} : vector<2x8x32xf32>, vector<2x8x32xf32>, vector<2x8x8xf32> -> vector<2x8x8xf32>
    "tpu.trace_stop"() : () -> ()
    %cst_32 = arith.constant 0.176776692 : f32
    %97 = vector.broadcast %cst_32 : f32 to vector<2x8x8xf32>
    %98 = arith.mulf %96, %97 : vector<2x8x8xf32>
    %99 = vector.broadcast %17 : vector<2x1x8xf32> to vector<2x8x8xf32>
    %100 = arith.addf %98, %99 : vector<2x8x8xf32>
    %cst_33 = arith.constant dense<0xFF800000> : vector<2x8xf32>
    %101 = vector.multi_reduction <maximumf>, %100, %cst_33 [2] : vector<2x8x8xf32> to vector<2x8xf32>
    %102 = vector.shape_cast %101 : vector<2x8xf32> to vector<2x8x1xf32>
    %103 = vector.broadcast %102 : vector<2x8x1xf32> to vector<2x8x8xf32>
    %104 = arith.subf %100, %103 : vector<2x8x8xf32>
    %105 = math.exp %104 : vector<2x8x8xf32>
    %cst_34 = arith.constant dense<0.000000e+00> : vector<2x8xf32>
    %106 = vector.multi_reduction <add>, %105, %cst_34 [2] : vector<2x8x8xf32> to vector<2x8xf32>
    %107 = vector.shape_cast %106 : vector<2x8xf32> to vector<2x8x1xf32>
    %108 = tpu.reciprocal %107 {approx = true} : vector<2x8x1xf32> -> vector<2x8x1xf32>
    %109 = vector.broadcast %108 : vector<2x8x1xf32> to vector<2x8x8xf32>
    %110 = arith.mulf %105, %109 : vector<2x8x8xf32>
    "tpu.trace_start"() <{level = 10 : i32, message = "bqk,bkd->bqd"}> : () -> ()
    %cst_35 = arith.constant dense<0.000000e+00> : vector<2x8x32xf32>
    %111 = tpu.matmul %110, %95, %cst_35 {dimension_numbers = #tpu.dot_dimension_numbers<[2], [1], [1], [2], [0, 0, 0, 1, 1, 2], [0], [0]>} : vector<2x8x8xf32>, vector<2x8x32xf32>, vector<2x8x32xf32> -> vector<2x8x32xf32>
    "tpu.trace_stop"() : () -> ()
    %112 = vector.shape_cast %111 : vector<2x8x32xf32> to vector<16x32xf32>
    %c0_36 = arith.constant 0 : index
    %c96 = arith.constant 96 : index
    %113 = vector.load %arg21[%c0_36, %c96] : memref<16x128xf32, #tpu.memory_space<vmem>>, vector<16x32xf32>
    tpu.vector_store %arg21[%c0_36, %c96], %112 {strides = array<i32>} : memref<16x128xf32, #tpu.memory_space<vmem>>, vector<16x32xf32>,
    %c0_37 = arith.constant 0 : index
    %c0_38 = arith.constant 0 : index
    %114 = vector.load %arg21[%c0_37, %c0_38] : memref<16x128xf32, #tpu.memory_space<vmem>>, vector<16x128xf32>
    %c0_39 = arith.constant 0 : index
    %c0_40 = arith.constant 0 : index
    %c0_41 = arith.constant 0 : index
    %115 = vector.load %arg7[%c0_39, %c0_40, %c0_41] : memref<1x128x128xbf16, #tpu.memory_space<vmem>>, vector<1x128x128xbf16>
    %116 = vector.shape_cast %115 : vector<1x128x128xbf16> to vector<128x128xbf16>
    %c0_42 = arith.constant 0 : index
    %c0_43 = arith.constant 0 : index
    %c0_44 = arith.constant 0 : index
    %117 = vector.load %arg8[%c0_42, %c0_43, %c0_44] : memref<1x1x128xf32, #tpu.memory_space<vmem>>, vector<1x1x128xf32>
    %118 = vector.shape_cast %117 : vector<1x1x128xf32> to vector<1x128xf32>
    %119 = arith.truncf %114 : vector<16x128xf32> to vector<16x128xbf16>
    %cst_45 = arith.constant dense<0.000000e+00> : vector<16x128xf32>
    %120 = tpu.matmul %119, %116, %cst_45 {dimension_numbers = #tpu.dot_dimension_numbers<[1], [0], [0], [1], [0, 0, 1, 1], [], []>} : vector<16x128xbf16>, vector<128x128xbf16>, vector<16x128xf32> -> vector<16x128xf32>
    %121 = vector.broadcast %118 : vector<1x128xf32> to vector<16x128xf32>
    %122 = arith.addf %120, %121 : vector<16x128xf32>
    %123 = arith.addf %122, %3 : vector<16x128xf32>
    %c0_46 = arith.constant 0 : index
    %c0_47 = arith.constant 0 : index
    %c0_48 = arith.constant 0 : index
    %124 = vector.load %arg9[%c0_46, %c0_47, %c0_48] : memref<1x1x128xf32, #tpu.memory_space<vmem>>, vector<1x1x128xf32>
    %125 = vector.shape_cast %124 : vector<1x1x128xf32> to vector<1x128xf32>
    %c0_49 = arith.constant 0 : index
    %c0_50 = arith.constant 0 : index
    %c0_51 = arith.constant 0 : index
    %126 = vector.load %arg10[%c0_49, %c0_50, %c0_51] : memref<1x1x128xf32, #tpu.memory_space<vmem>>, vector<1x1x128xf32>
    %127 = vector.shape_cast %126 : vector<1x1x128xf32> to vector<1x128xf32>
    %cst_52 = arith.constant dense<0.000000e+00> : vector<16xf32>
    %128 = vector.multi_reduction <add>, %123, %cst_52 [1] : vector<16x128xf32> to vector<16xf32>
    %129 = vector.shape_cast %128 : vector<16xf32> to vector<16x1xf32>
    %cst_53 = arith.constant 1.280000e+02 : f32
    %130 = vector.broadcast %cst_53 : f32 to vector<16x1xf32>
    %131 = arith.divf %129, %130 : vector<16x1xf32>
    %132 = vector.broadcast %131 : vector<16x1xf32> to vector<16x128xf32>
    %133 = arith.subf %123, %132 : vector<16x128xf32>
    %134 = arith.mulf %133, %133 : vector<16x128xf32>
    %cst_54 = arith.constant dense<0.000000e+00> : vector<16xf32>
    %135 = vector.multi_reduction <add>, %134, %cst_54 [1] : vector<16x128xf32> to vector<16xf32>
    %136 = vector.shape_cast %135 : vector<16xf32> to vector<16x1xf32>
    %cst_55 = arith.constant 1.280000e+02 : f32
    %137 = vector.broadcast %cst_55 : f32 to vector<16x1xf32>
    %138 = arith.divf %136, %137 : vector<16x1xf32>
    %139 = vector.broadcast %131 : vector<16x1xf32> to vector<16x128xf32>
    %140 = arith.subf %123, %139 : vector<16x128xf32>
    %cst_56 = arith.constant 9.99999996E-13 : f32
    %141 = vector.broadcast %cst_56 : f32 to vector<16x1xf32>
    %142 = arith.addf %138, %141 : vector<16x1xf32>
    %143 = math.rsqrt %142 : vector<16x1xf32>
    %144 = vector.broadcast %143 : vector<16x1xf32> to vector<16x128xf32>
    %145 = arith.mulf %140, %144 : vector<16x128xf32>
    %146 = vector.broadcast %125 : vector<1x128xf32> to vector<16x128xf32>
    %147 = arith.mulf %145, %146 : vector<16x128xf32>
    %148 = vector.broadcast %127 : vector<1x128xf32> to vector<16x128xf32>
    %149 = arith.addf %147, %148 : vector<16x128xf32>
    %c0_57 = arith.constant 0 : index
    %c0_58 = arith.constant 0 : index
    %c0_59 = arith.constant 0 : index
    %150 = vector.load %arg11[%c0_57, %c0_58, %c0_59] : memref<1x128x512xbf16, #tpu.memory_space<vmem>>, vector<1x128x512xbf16>
    %151 = vector.shape_cast %150 : vector<1x128x512xbf16> to vector<128x512xbf16>
    %c0_60 = arith.constant 0 : index
    %c0_61 = arith.constant 0 : index
    %c0_62 = arith.constant 0 : index
    %152 = vector.load %arg12[%c0_60, %c0_61, %c0_62] : memref<1x1x512xf32, #tpu.memory_space<vmem>>, vector<1x1x512xf32>
    %153 = vector.shape_cast %152 : vector<1x1x512xf32> to vector<1x512xf32>
    %154 = arith.truncf %149 : vector<16x128xf32> to vector<16x128xbf16>
    %cst_63 = arith.constant dense<0.000000e+00> : vector<16x512xf32>
    %155 = tpu.matmul %154, %151, %cst_63 {dimension_numbers = #tpu.dot_dimension_numbers<[1], [0], [0], [1], [0, 0, 1, 1], [], []>} : vector<16x128xbf16>, vector<128x512xbf16>, vector<16x512xf32> -> vector<16x512xf32>
    %156 = vector.broadcast %153 : vector<1x512xf32> to vector<16x512xf32>
    %157 = arith.addf %155, %156 : vector<16x512xf32>
    %158 = arith.mulf %157, %157 : vector<16x512xf32>
    %159 = arith.mulf %157, %158 : vector<16x512xf32>
    %cst_64 = arith.constant 4.471500e-02 : f32
    %160 = vector.broadcast %cst_64 : f32 to vector<16x512xf32>
    %161 = arith.mulf %160, %159 : vector<16x512xf32>
    %162 = arith.addf %157, %161 : vector<16x512xf32>
    %cst_65 = arith.constant 0.797884583 : f32
    %163 = vector.broadcast %cst_65 : f32 to vector<16x512xf32>
    %164 = arith.mulf %163, %162 : vector<16x512xf32>
    %165 = math.tanh %164 : vector<16x512xf32>
    %cst_66 = arith.constant 1.000000e+00 : f32
    %166 = vector.broadcast %cst_66 : f32 to vector<16x512xf32>
    %167 = arith.addf %166, %165 : vector<16x512xf32>
    %cst_67 = arith.constant 5.000000e-01 : f32
    %168 = vector.broadcast %cst_67 : f32 to vector<16x512xf32>
    %169 = arith.mulf %168, %167 : vector<16x512xf32>
    %170 = arith.mulf %157, %169 : vector<16x512xf32>
    %c0_68 = arith.constant 0 : index
    %c0_69 = arith.constant 0 : index
    %c0_70 = arith.constant 0 : index
    %171 = vector.load %arg13[%c0_68, %c0_69, %c0_70] : memref<1x512x128xbf16, #tpu.memory_space<vmem>>, vector<1x512x128xbf16>
    %172 = vector.shape_cast %171 : vector<1x512x128xbf16> to vector<512x128xbf16>
    %c0_71 = arith.constant 0 : index
    %c0_72 = arith.constant 0 : index
    %c0_73 = arith.constant 0 : index
    %173 = vector.load %arg14[%c0_71, %c0_72, %c0_73] : memref<1x1x128xf32, #tpu.memory_space<vmem>>, vector<1x1x128xf32>
    %174 = vector.shape_cast %173 : vector<1x1x128xf32> to vector<1x128xf32>
    %175 = arith.truncf %170 : vector<16x512xf32> to vector<16x512xbf16>
    %cst_74 = arith.constant dense<0.000000e+00> : vector<16x128xf32>
    %176 = tpu.matmul %175, %172, %cst_74 {dimension_numbers = #tpu.dot_dimension_numbers<[1], [0], [0], [1], [0, 0, 1, 1], [], []>} : vector<16x512xbf16>, vector<512x128xbf16>, vector<16x128xf32> -> vector<16x128xf32>
    %177 = vector.broadcast %174 : vector<1x128xf32> to vector<16x128xf32>
    %178 = arith.addf %176, %177 : vector<16x128xf32>
    %179 = arith.addf %178, %149 : vector<16x128xf32>
    %c0_75 = arith.constant 0 : index
    %c0_76 = arith.constant 0 : index
    %c0_77 = arith.constant 0 : index
    %180 = vector.load %arg15[%c0_75, %c0_76, %c0_77] : memref<1x1x128xf32, #tpu.memory_space<vmem>>, vector<1x1x128xf32>
    %181 = vector.shape_cast %180 : vector<1x1x128xf32> to vector<1x128xf32>
    %c0_78 = arith.constant 0 : index
    %c0_79 = arith.constant 0 : index
    %c0_80 = arith.constant 0 : index
    %182 = vector.load %arg16[%c0_78, %c0_79, %c0_80] : memref<1x1x128xf32, #tpu.memory_space<vmem>>, vector<1x1x128xf32>
    %183 = vector.shape_cast %182 : vector<1x1x128xf32> to vector<1x128xf32>
    %cst_81 = arith.constant dense<0.000000e+00> : vector<16xf32>
    %184 = vector.multi_reduction <add>, %179, %cst_81 [1] : vector<16x128xf32> to vector<16xf32>
    %185 = vector.shape_cast %184 : vector<16xf32> to vector<16x1xf32>
    %cst_82 = arith.constant 1.280000e+02 : f32
    %186 = vector.broadcast %cst_82 : f32 to vector<16x1xf32>
    %187 = arith.divf %185, %186 : vector<16x1xf32>
    %188 = vector.broadcast %187 : vector<16x1xf32> to vector<16x128xf32>
    %189 = arith.subf %179, %188 : vector<16x128xf32>
    %190 = arith.mulf %189, %189 : vector<16x128xf32>
    %cst_83 = arith.constant dense<0.000000e+00> : vector<16xf32>
    %191 = vector.multi_reduction <add>, %190, %cst_83 [1] : vector<16x128xf32> to vector<16xf32>
    %192 = vector.shape_cast %191 : vector<16xf32> to vector<16x1xf32>
    %cst_84 = arith.constant 1.280000e+02 : f32
    %193 = vector.broadcast %cst_84 : f32 to vector<16x1xf32>
    %194 = arith.divf %192, %193 : vector<16x1xf32>
    %195 = vector.broadcast %187 : vector<16x1xf32> to vector<16x128xf32>
    %196 = arith.subf %179, %195 : vector<16x128xf32>
    %cst_85 = arith.constant 9.99999996E-13 : f32
    %197 = vector.broadcast %cst_85 : f32 to vector<16x1xf32>
    %198 = arith.addf %194, %197 : vector<16x1xf32>
    %199 = math.rsqrt %198 : vector<16x1xf32>
    %200 = vector.broadcast %199 : vector<16x1xf32> to vector<16x128xf32>
    %201 = arith.mulf %196, %200 : vector<16x128xf32>
    %202 = vector.broadcast %181 : vector<1x128xf32> to vector<16x128xf32>
    %203 = arith.mulf %201, %202 : vector<16x128xf32>
    %204 = vector.broadcast %183 : vector<1x128xf32> to vector<16x128xf32>
    %205 = arith.addf %203, %204 : vector<16x128xf32>
    %c0_86 = arith.constant 0 : index
    %c0_87 = arith.constant 0 : index
    %206 = vector.load %arg20[%c0_86, %c0_87] : memref<16x128xf32, #tpu.memory_space<vmem>>, vector<16x128xf32>
    tpu.vector_store %arg20[%c0_86, %c0_87], %205 {strides = array<i32>} : memref<16x128xf32, #tpu.memory_space<vmem>>, vector<16x128xf32>,
    %c1_i32 = arith.constant 1 : i32
    %207 = arith.cmpi eq, %arg0, %c1_i32 : i32
    %208 = arith.extui %207 : i1 to i32
    %c0_i32_88 = arith.constant 0 : i32
    %209 = arith.cmpi ne, %208, %c0_i32_88 : i32
    scf.if %209 {
      %210 = vector.shape_cast %205 : vector<16x128xf32> to vector<2x8x128xf32>
      %211 = vector.extract_strided_slice %210 {offsets = [0, 0, 0], sizes = [2, 1, 128], strides = [1, 1, 1]} : vector<2x8x128xf32> to vector<2x1x128xf32>
      %212 = vector.shape_cast %211 : vector<2x1x128xf32> to vector<2x128xf32>
      %c0_89 = arith.constant 0 : index
      %c0_90 = arith.constant 0 : index
      %213 = vector.load %arg17[%c0_89, %c0_90] : memref<128x128xbf16, #tpu.memory_space<vmem>>, vector<128x128xbf16>
      %c0_91 = arith.constant 0 : index
      %c0_92 = arith.constant 0 : index
      %214 = vector.load %arg18[%c0_91, %c0_92] : memref<1x128xf32, #tpu.memory_space<vmem>>, vector<1x128xf32>
      %215 = arith.truncf %212 : vector<2x128xf32> to vector<2x128xbf16>
      %cst_93 = arith.constant dense<0.000000e+00> : vector<2x128xf32>
      %216 = tpu.matmul %215, %213, %cst_93 {dimension_numbers = #tpu.dot_dimension_numbers<[1], [0], [0], [1], [0, 0, 1, 1], [], []>} : vector<2x128xbf16>, vector<128x128xbf16>, vector<2x128xf32> -> vector<2x128xf32>
      %217 = vector.broadcast %214 : vector<1x128xf32> to vector<2x128xf32>
      %218 = arith.addf %216, %217 : vector<2x128xf32>
      %219 = math.tanh %218 : vector<2x128xf32>
      %c0_94 = arith.constant 0 : index
      %c0_95 = arith.constant 0 : index
      %220 = vector.load %arg19[%c0_94, %c0_95] : memref<2x128xf32, #tpu.memory_space<vmem>>, vector<2x128xf32>
      tpu.vector_store %arg19[%c0_94, %c0_95], %219 {strides = array<i32>} : memref<2x128xf32, #tpu.memory_space<vmem>>, vector<2x128xf32>,
    } else {
    }
    return
  }
  func.func @transform_0(%arg0: i32) -> (i32, i32) {
    %c0_i32 = arith.constant 0 : i32
    %c0_i32_0 = arith.constant 0 : i32
    %c0_i32_1 = arith.constant 0 : i32
    return %c0_i32, %c0_i32_0 : i32, i32
  }
  func.func @transform_1(%arg0: i32) -> (i32, i32) {
    %c0_i32 = arith.constant 0 : i32
    %c0_i32_0 = arith.constant 0 : i32
    %c0_i32_1 = arith.constant 0 : i32
    return %c0_i32, %c0_i32_0 : i32, i32
  }
  func.func @transform_2(%arg0: i32) -> (i32, i32) {
    %c0_i32 = arith.constant 0 : i32
    %c0_i32_0 = arith.constant 0 : i32
    %c0_i32_1 = arith.constant 0 : i32
    return %c0_i32, %c0_i32_0 : i32, i32
  }
  func.func @transform_3(%arg0: i32) -> (i32, i32) {
    %c0_i32 = arith.constant 0 : i32
    %c0_i32_0 = arith.constant 0 : i32
    %c0_i32_1 = arith.constant 0 : i32
    return %c0_i32, %c0_i32_0 : i32, i32
  }
  func.func @transform_4(%arg0: i32) -> (i32, i32, i32) {
    %c0_i32 = arith.constant 0 : i32
    %c0_i32_0 = arith.constant 0 : i32
    %c0_i32_1 = arith.constant 0 : i32
    return %arg0, %c0_i32, %c0_i32_0 : i32, i32, i32
  }
  func.func @transform_5(%arg0: i32) -> (i32, i32, i32) {
    %c0_i32 = arith.constant 0 : i32
    %c0_i32_0 = arith.constant 0 : i32
    %c0_i32_1 = arith.constant 0 : i32
    return %arg0, %c0_i32, %c0_i32_0 : i32, i32, i32
  }
  func.func @transform_6(%arg0: i32) -> (i32, i32, i32) {
    %c0_i32 = arith.constant 0 : i32
    %c0_i32_0 = arith.constant 0 : i32
    %c0_i32_1 = arith.constant 0 : i32
    return %arg0, %c0_i32, %c0_i32_0 : i32, i32, i32
  }
  func.func @transform_7(%arg0: i32) -> (i32, i32, i32) {
    %c0_i32 = arith.constant 0 : i32
    %c0_i32_0 = arith.constant 0 : i32
    %c0_i32_1 = arith.constant 0 : i32
    return %arg0, %c0_i32, %c0_i32_0 : i32, i32, i32
  }
  func.func @transform_8(%arg0: i32) -> (i32, i32, i32) {
    %c0_i32 = arith.constant 0 : i32
    %c0_i32_0 = arith.constant 0 : i32
    %c0_i32_1 = arith.constant 0 : i32
    return %arg0, %c0_i32, %c0_i32_0 : i32, i32, i32
  }
  func.func @transform_9(%arg0: i32) -> (i32, i32, i32) {
    %c0_i32 = arith.constant 0 : i32
    %c0_i32_0 = arith.constant 0 : i32
    %c0_i32_1 = arith.constant 0 : i32
    return %arg0, %c0_i32, %c0_i32_0 : i32, i32, i32
  }
  func.func @transform_10(%arg0: i32) -> (i32, i32, i32) {
    %c0_i32 = arith.constant 0 : i32
    %c0_i32_0 = arith.constant 0 : i32
    %c0_i32_1 = arith.constant 0 : i32
    return %arg0, %c0_i32, %c0_i32_0 : i32, i32, i32
  }
  func.func @transform_11(%arg0: i32) -> (i32, i32, i32) {
    %c0_i32 = arith.constant 0 : i32
    %c0_i32_0 = arith.constant 0 : i32
    %c0_i32_1 = arith.constant 0 : i32
    return %arg0, %c0_i32, %c0_i32_0 : i32, i32, i32
  }
  func.func @transform_12(%arg0: i32) -> (i32, i32, i32) {
    %c0_i32 = arith.constant 0 : i32
    %c0_i32_0 = arith.constant 0 : i32
    %c0_i32_1 = arith.constant 0 : i32
    return %arg0, %c0_i32, %c0_i32_0 : i32, i32, i32
  }
  func.func @transform_13(%arg0: i32) -> (i32, i32, i32) {
    %c0_i32 = arith.constant 0 : i32
    %c0_i32_0 = arith.constant 0 : i32
    %c0_i32_1 = arith.constant 0 : i32
    return %arg0, %c0_i32, %c0_i32_0 : i32, i32, i32
  }
  func.func @transform_14(%arg0: i32) -> (i32, i32, i32) {
    %c0_i32 = arith.constant 0 : i32
    %c0_i32_0 = arith.constant 0 : i32
    %c0_i32_1 = arith.constant 0 : i32
    return %arg0, %c0_i32, %c0_i32_0 : i32, i32, i32
  }
  func.func @transform_15(%arg0: i32) -> (i32, i32, i32) {
    %c0_i32 = arith.constant 0 : i32
    %c0_i32_0 = arith.constant 0 : i32
    %c0_i32_1 = arith.constant 0 : i32
    return %arg0, %c0_i32, %c0_i32_0 : i32, i32, i32
  }
  func.func @transform_16(%arg0: i32) -> (i32, i32) {
    %c0_i32 = arith.constant 0 : i32
    %c0_i32_0 = arith.constant 0 : i32
    %c0_i32_1 = arith.constant 0 : i32
    return %c0_i32, %c0_i32_0 : i32, i32
  }
  func.func @transform_17(%arg0: i32) -> (i32, i32) {
    %c0_i32 = arith.constant 0 : i32
    %c0_i32_0 = arith.constant 0 : i32
    %c0_i32_1 = arith.constant 0 : i32
    return %c0_i32, %c0_i32_0 : i32, i32
  }
  func.func @transform_18(%arg0: i32) -> (i32, i32) {
    %c0_i32 = arith.constant 0 : i32
    %c0_i32_0 = arith.constant 0 : i32
    %c0_i32_1 = arith.constant 0 : i32
    return %c0_i32, %c0_i32_0 : i32, i32
  }
}

</mosaic_0001>

<llo_original>
// kernel: tpu_custom_call.1
$region0: #{tpu_custom_call.1}
  #allocation0 [shape = 'u32[]', space=smem, size = 0x4, offset = 0x4, fixed_abs, tag = 'smem constant byte address 0x4 - core index']
  #allocation1 [shape = 'u32[144,128]{1,0:T(1,128)}', space=vmem, size = 0x12000, scoped, tag = 'internal scratch']
  #allocation2 [shape = 'f32[16,128]{1,0:T(8,128)}', space=vmem, size = 0x2000, scoped, tag = 'scratch operand']
  #allocation3 [shape = 'f32[16,128]{1,0:T(8,128)}', space=vmem, size = 0x2000, scoped, tag = 'scratch operand']
  %s0 = inlined_call_operand.hbm [shape: f32[16,128], index: 0, kind: input, shape index: {}]
  %s1 = inlined_call_operand.hbm [shape: f32[2,8], index: 1, kind: input, shape index: {}]
  %s2 = inlined_call_operand.hbm [shape: f32[1,128], index: 2, kind: input, shape index: {}]
  %s3 = inlined_call_operand.hbm [shape: f32[1,128], index: 3, kind: input, shape index: {}]
  %s4 = inlined_call_operand.hbm [shape: bf16[2,128,384], index: 4, kind: input, shape index: {}]
  %s5 = inlined_call_operand.vmem [shape: f32[2,1,384], index: 5, kind: input, shape index: {}]
  %s6 = inlined_call_operand.hbm [shape: bf16[2,128,128], index: 6, kind: input, shape index: {}]
  %s7 = inlined_call_operand.vmem [shape: f32[2,1,128], index: 7, kind: input, shape index: {}]
  %s8 = inlined_call_operand.vmem [shape: f32[2,1,128], index: 8, kind: input, shape index: {}]
  %s9 = inlined_call_operand.vmem [shape: f32[2,1,128], index: 9, kind: input, shape index: {}]
  %s10 = inlined_call_operand.hbm [shape: bf16[2,128,512], index: 10, kind: input, shape index: {}]
  %s11 = inlined_call_operand.vmem [shape: f32[2,1,512], index: 11, kind: input, shape index: {}]
  %s12 = inlined_call_operand.hbm [shape: bf16[2,512,128], index: 12, kind: input, shape index: {}]
  %s13 = inlined_call_operand.vmem [shape: f32[2,1,128], index: 13, kind: input, shape index: {}]
  %s14 = inlined_call_operand.vmem [shape: f32[2,1,128], index: 14, kind: input, shape index: {}]
  %s15 = inlined_call_operand.vmem [shape: f32[2,1,128], index: 15, kind: input, shape index: {}]
  %s16 = inlined_call_operand.hbm [shape: bf16[128,128], index: 16, kind: input, shape index: {}]
  %s17 = inlined_call_operand.vmem [shape: f32[1,128], index: 17, kind: input, shape index: {}]
  %s18 = inlined_call_operand.hbm [shape: f32[2,128], index: 18, kind: output, shape index: {}]
  %s19 = sld [smem:[#allocation0]]
  $region149: #{tpu_custom_call.1} parent=0
    _
  %s21 = ssub.s32 1, %s19
  %s22 = scalar_select 0, %s21, %s19
  $region1: #{tpu_custom_call.1} parent=0
    #allocation4 [shape = 'u8[8192]{0}', space=vmem, size = 0x2000, scoped, tag = 'input window, operand 0, single buffered']
    #allocation5 [shape = 's32[2]{0}', space=sflag, size = 0x8, scoped, tag = 'scoped memory for tpu_custom_call.1']
    #allocation6 [shape = 's32[2]{0}', space=sflag, size = 0x8, scoped, tag = 'scoped memory for tpu_custom_call.1']
    #allocation7 [shape = 'u8[1024]{0}', space=vmem, size = 0x400, scoped, tag = 'input window, operand 1, single buffered']
    #allocation8 [shape = 's32[1]{0}', space=sflag, size = 0x4, scoped, tag = 'scoped memory for tpu_custom_call.1']
    #allocation9 [shape = 'u8[512]{0}', space=vmem, size = 0x400, scoped, tag = 'input window, operand 2, single buffered']
    #allocation10 [shape = 'u8[512]{0}', space=vmem, size = 0x400, scoped, tag = 'input window, operand 3, single buffered']
    #allocation11 [shape = 's32[1]{0}', space=sflag, size = 0x4, scoped, tag = 'scoped memory for tpu_custom_call.1']
    #allocation12 [shape = 'u8[196608]{0}', space=vmem, size = 0x30000, scoped, tag = 'input window, operand 4']
    #allocation13 [shape = 'u8[65536]{0}', space=vmem, size = 0x10000, scoped, tag = 'input window, operand 6']
    #allocation14 [shape = 'u8[262144]{0}', space=vmem, size = 0x40000, scoped, tag = 'input window, operand 10']
    #allocation15 [shape = 'u8[262144]{0}', space=vmem, size = 0x40000, scoped, tag = 'input window, operand 12']
    #allocation16 [shape = 'u8[32768]{0}', space=vmem, size = 0x8000, scoped, tag = 'input window, operand 16, single buffered']
    #allocation17 [shape = 'u8[1024]{0}', space=vmem, size = 0x400, scoped, tag = 'output window, operand 0, single buffered']
    %23 = vsyncpa [#allocation5], 0
    %24 = vsyncpa [#allocation8], 0
    %25 = vsyncpa [#allocation11], 0
    %26 = vsyncpa [#allocation6], 0
    loop: start=0, step=1, limit=4
    $region2: #{tpu_custom_call.1} parent=1 // loop_pre_header
      _
    $region3: #{tpu_custom_call.1} parent=1 // loop_header
      %s28 = sphi 0, %s32
      %p29 = scmp.ge.s32.totalorder %s28, 4
      %s36 = sphi 0, %s36
      %s38 = sphi 0, %s36
      %s39 = sphi 0, %s38
      %s53 = sphi 0, %s39
      %s57 = sphi 0, %s57
      %s59 = sphi 0, %s57
      %s60 = sphi 0, %s59
      %s74 = sphi 0, %s60
      %s78 = sphi 0, %s78
      %s80 = sphi 0, %s78
      %s81 = sphi 0, %s80
      %s95 = sphi 0, %s81
      %s99 = sphi 0, %s99
      %s101 = sphi 0, %s99
      %s102 = sphi 0, %s101
      %s116 = sphi 0, %s102
      %s122 = sphi 0, %s124
      %s125 = sphi 0, %s122
      %s126 = sphi 0, %s125
      %s142 = sphi 0, %s126
      %s148 = sphi 0, %s150
      %s151 = sphi 0, %s148
      %s152 = sphi 0, %s151
      %s168 = sphi 0, %s152
      %s174 = sphi 0, %s176
      %s177 = sphi 0, %s174
      %s178 = sphi 0, %s177
      %s194 = sphi 0, %s178
      %s200 = sphi 0, %s202
      %s203 = sphi 0, %s200
      %s204 = sphi 0, %s203
      %s220 = sphi 0, %s204
      %s226 = sphi 0, %s228
      %s229 = sphi 0, %s226
      %s230 = sphi 0, %s229
      %s246 = sphi 0, %s230
      %s252 = sphi 0, %s254
      %s255 = sphi 0, %s252
      %s256 = sphi 0, %s255
      %s272 = sphi 0, %s256
      %s278 = sphi 0, %s280
      %s281 = sphi 0, %s278
      %s282 = sphi 0, %s281
      %s298 = sphi 0, %s282
      %s304 = sphi 0, %s306
      %s307 = sphi 0, %s304
      %s308 = sphi 0, %s307
      %s324 = sphi 0, %s308
      %s330 = sphi 0, %s332
      %s333 = sphi 0, %s330
      %s334 = sphi 0, %s333
      %s350 = sphi 0, %s334
      %s356 = sphi 0, %s358
      %s359 = sphi 0, %s356
      %s360 = sphi 0, %s359
      %s376 = sphi 0, %s360
      %s382 = sphi 0, %s384
      %s385 = sphi 0, %s382
      %s386 = sphi 0, %s385
      %s402 = sphi 0, %s386
      %s408 = sphi 0, %s410
      %s411 = sphi 0, %s408
      %s412 = sphi 0, %s411
      %s428 = sphi 0, %s412
      %s432 = sphi 0, %s432
      %s434 = sphi 0, %s432
      %s435 = sphi 0, %s434
      %s449 = sphi 0, %s435
      %s453 = sphi 0, %s453
      %s455 = sphi 0, %s453
      %s456 = sphi 0, %s455
      %s470 = sphi 0, %s456
      %s474 = sphi 0, %s474
      %s476 = sphi 0, %s474
      %s477 = sphi 0, %s476
      %s491 = sphi 0, %s477
    $region4: #{tpu_custom_call.1} parent=1 // loop_header_branch
      %31 = sbr.rel (%p29) target = $region8
    $region5: #{tpu_custom_call.1} parent=1 // loop_body
      %s33 = ssub.s32 %s28, 1
      %s34 = ssub.s32 %s28, 2
      %s35 = sadd.s32 %s28, 1
      %s37 = sadd.s32 %s36, 1
      %p40 = scmp.eq.s32.totalorder %s28, 1
      %p41 = scmp.ne.s32.totalorder %s36, %s38
      %p42 = scmp.eq.s32.totalorder %s28, 0
      %p43 = por %p41, %p42
      %p44 = scmp.ne.s32.totalorder %s36, %s38
      %p45 = scmp.eq.s32.totalorder %s33, 1
      %p46 = por %p44, %p45
      %p47 = scmp.ne.s32.totalorder %s38, %s39
      %p48 = scmp.eq.s32.totalorder %s33, 0
      %p49 = por %p47, %p48
      %p50 = scmp.ne.s32.totalorder %s38, %s39
      %p51 = scmp.eq.s32.totalorder %s34, 1
      %p52 = por %p50, %p51
      %p54 = scmp.ne.s32.totalorder %s39, %s53
      %p55 = scmp.eq.s32.totalorder %s34, 0
      %p56 = por %p54, %p55
      %s58 = sadd.s32 %s57, 1
      %p61 = scmp.eq.s32.totalorder %s28, 1
      %p62 = scmp.ne.s32.totalorder %s57, %s59
      %p63 = scmp.eq.s32.totalorder %s28, 0
      %p64 = por %p62, %p63
      %p65 = scmp.ne.s32.totalorder %s57, %s59
      %p66 = scmp.eq.s32.totalorder %s33, 1
      %p67 = por %p65, %p66
      %p68 = scmp.ne.s32.totalorder %s59, %s60
      %p69 = scmp.eq.s32.totalorder %s33, 0
      %p70 = por %p68, %p69
      %p71 = scmp.ne.s32.totalorder %s59, %s60
      %p72 = scmp.eq.s32.totalorder %s34, 1
      %p73 = por %p71, %p72
      %p75 = scmp.ne.s32.totalorder %s60, %s74
      %p76 = scmp.eq.s32.totalorder %s34, 0
      %p77 = por %p75, %p76
      %s79 = sadd.s32 %s78, 1
      %p82 = scmp.eq.s32.totalorder %s28, 1
      %p83 = scmp.ne.s32.totalorder %s78, %s80
      %p84 = scmp.eq.s32.totalorder %s28, 0
      %p85 = por %p83, %p84
      %p86 = scmp.ne.s32.totalorder %s78, %s80
      %p87 = scmp.eq.s32.totalorder %s33, 1
      %p88 = por %p86, %p87
      %p89 = scmp.ne.s32.totalorder %s80, %s81
      %p90 = scmp.eq.s32.totalorder %s33, 0
      %p91 = por %p89, %p90
      %p92 = scmp.ne.s32.totalorder %s80, %s81
      %p93 = scmp.eq.s32.totalorder %s34, 1
      %p94 = por %p92, %p93
      %p96 = scmp.ne.s32.totalorder %s81, %s95
      %p97 = scmp.eq.s32.totalorder %s34, 0
      %p98 = por %p96, %p97
      %s100 = sadd.s32 %s99, 1
      %p103 = scmp.eq.s32.totalorder %s28, 1
      %p104 = scmp.ne.s32.totalorder %s99, %s101
      %p105 = scmp.eq.s32.totalorder %s28, 0
      %p106 = por %p104, %p105
      %p107 = scmp.ne.s32.totalorder %s99, %s101
      %p108 = scmp.eq.s32.totalorder %s33, 1
      %p109 = por %p107, %p108
      %p110 = scmp.ne.s32.totalorder %s101, %s102
      %p111 = scmp.eq.s32.totalorder %s33, 0
      %p112 = por %p110, %p111
      %p113 = scmp.ne.s32.totalorder %s101, %s102
      %p114 = scmp.eq.s32.totalorder %s34, 1
      %p115 = por %p113, %p114
      %p117 = scmp.ne.s32.totalorder %s102, %s116
      %p118 = scmp.eq.s32.totalorder %s34, 0
      %p119 = por %p117, %p118
      %s120 = ssub.s32 %s28, %s35
      %p121 = scmp.eq.s32.totalorder %s120, 0
      %s123 = sadd.s32 %s122, 1
      %s124 = scalar_select %p121, %s122, %s123
      %p127 = pneg %p121
      %p128 = scmp.eq.s32.totalorder %s28, 1
      %p129 = por %p127, %p128
      %p130 = scmp.ne.s32.totalorder %s122, %s125
      %p131 = scmp.eq.s32.totalorder %s28, 0
      %p132 = por %p130, %p131
      %p133 = scmp.ne.s32.totalorder %s122, %s125
      %p134 = scmp.eq.s32.totalorder %s33, 1
      %p135 = por %p133, %p134
      %p136 = scmp.ne.s32.totalorder %s125, %s126
      %p137 = scmp.eq.s32.totalorder %s33, 0
      %p138 = por %p136, %p137
      %p139 = scmp.ne.s32.totalorder %s125, %s126
      %p140 = scmp.eq.s32.totalorder %s34, 1
      %p141 = por %p139, %p140
      %p143 = scmp.ne.s32.totalorder %s126, %s142
      %p144 = scmp.eq.s32.totalorder %s34, 0
      %p145 = por %p143, %p144
      %s146 = ssub.s32 %s28, %s35
      %p147 = scmp.eq.s32.totalorder %s146, 0
      %s149 = sadd.s32 %s148, 1
      %s150 = scalar_select %p147, %s148, %s149
      %p153 = pneg %p147
      %p154 = scmp.eq.s32.totalorder %s28, 1
      %p155 = por %p153, %p154
      %p156 = scmp.ne.s32.totalorder %s148, %s151
      %p157 = scmp.eq.s32.totalorder %s28, 0
      %p158 = por %p156, %p157
      %p159 = scmp.ne.s32.totalorder %s148, %s151
      %p160 = scmp.eq.s32.totalorder %s33, 1
      %p161 = por %p159, %p160
      %p162 = scmp.ne.s32.totalorder %s151, %s152
      %p163 = scmp.eq.s32.totalorder %s33, 0
      %p164 = por %p162, %p163
      %p165 = scmp.ne.s32.totalorder %s151, %s152
      %p166 = scmp.eq.s32.totalorder %s34, 1
      %p167 = por %p165, %p166
      %p169 = scmp.ne.s32.totalorder %s152, %s168
      %p170 = scmp.eq.s32.totalorder %s34, 0
      %p171 = por %p169, %p170
      %s172 = ssub.s32 %s28, %s35
      %p173 = scmp.eq.s32.totalorder %s172, 0
      %s175 = sadd.s32 %s174, 1
      %s176 = scalar_select %p173, %s174, %s175
      %p179 = pneg %p173
      %p180 = scmp.eq.s32.totalorder %s28, 1
      %p181 = por %p179, %p180
      %p182 = scmp.ne.s32.totalorder %s174, %s177
      %p183 = scmp.eq.s32.totalorder %s28, 0
      %p184 = por %p182, %p183
      %p185 = scmp.ne.s32.totalorder %s174, %s177
      %p186 = scmp.eq.s32.totalorder %s33, 1
      %p187 = por %p185, %p186
      %p188 = scmp.ne.s32.totalorder %s177, %s178
      %p189 = scmp.eq.s32.totalorder %s33, 0
      %p190 = por %p188, %p189
      %p191 = scmp.ne.s32.totalorder %s177, %s178
      %p192 = scmp.eq.s32.totalorder %s34, 1
      %p193 = por %p191, %p192
      %p195 = scmp.ne.s32.totalorder %s178, %s194
      %p196 = scmp.eq.s32.totalorder %s34, 0
      %p197 = por %p195, %p196
      %s198 = ssub.s32 %s28, %s35
      %p199 = scmp.eq.s32.totalorder %s198, 0
      %s201 = sadd.s32 %s200, 1
      %s202 = scalar_select %p199, %s200, %s201
      %p205 = pneg %p199
      %p206 = scmp.eq.s32.totalorder %s28, 1
      %p207 = por %p205, %p206
      %p208 = scmp.ne.s32.totalorder %s200, %s203
      %p209 = scmp.eq.s32.totalorder %s28, 0
      %p210 = por %p208, %p209
      %p211 = scmp.ne.s32.totalorder %s200, %s203
      %p212 = scmp.eq.s32.totalorder %s33, 1
      %p213 = por %p211, %p212
      %p214 = scmp.ne.s32.totalorder %s203, %s204
      %p215 = scmp.eq.s32.totalorder %s33, 0
      %p216 = por %p214, %p215
      %p217 = scmp.ne.s32.totalorder %s203, %s204
      %p218 = scmp.eq.s32.totalorder %s34, 1
      %p219 = por %p217, %p218
      %p221 = scmp.ne.s32.totalorder %s204, %s220
      %p222 = scmp.eq.s32.totalorder %s34, 0
      %p223 = por %p221, %p222
      %s224 = ssub.s32 %s28, %s35
      %p225 = scmp.eq.s32.totalorder %s224, 0
      %s227 = sadd.s32 %s226, 1
      %s228 = scalar_select %p225, %s226, %s227
      %p231 = pneg %p225
      %p232 = scmp.eq.s32.totalorder %s28, 1
      %p233 = por %p231, %p232
      %p234 = scmp.ne.s32.totalorder %s226, %s229
      %p235 = scmp.eq.s32.totalorder %s28, 0
      %p236 = por %p234, %p235
      %p237 = scmp.ne.s32.totalorder %s226, %s229
      %p238 = scmp.eq.s32.totalorder %s33, 1
      %p239 = por %p237, %p238
      %p240 = scmp.ne.s32.totalorder %s229, %s230
      %p241 = scmp.eq.s32.totalorder %s33, 0
      %p242 = por %p240, %p241
      %p243 = scmp.ne.s32.totalorder %s229, %s230
      %p244 = scmp.eq.s32.totalorder %s34, 1
      %p245 = por %p243, %p244
      %p247 = scmp.ne.s32.totalorder %s230, %s246
      %p248 = scmp.eq.s32.totalorder %s34, 0
      %p249 = por %p247, %p248
      %s250 = ssub.s32 %s28, %s35
      %p251 = scmp.eq.s32.totalorder %s250, 0
      %s253 = sadd.s32 %s252, 1
      %s254 = scalar_select %p251, %s252, %s253
      %p257 = pneg %p251
      %p258 = scmp.eq.s32.totalorder %s28, 1
      %p259 = por %p257, %p258
      %p260 = scmp.ne.s32.totalorder %s252, %s255
      %p261 = scmp.eq.s32.totalorder %s28, 0
      %p262 = por %p260, %p261
      %p263 = scmp.ne.s32.totalorder %s252, %s255
      %p264 = scmp.eq.s32.totalorder %s33, 1
      %p265 = por %p263, %p264
      %p266 = scmp.ne.s32.totalorder %s255, %s256
      %p267 = scmp.eq.s32.totalorder %s33, 0
      %p268 = por %p266, %p267
      %p269 = scmp.ne.s32.totalorder %s255, %s256
      %p270 = scmp.eq.s32.totalorder %s34, 1
      %p271 = por %p269, %p270
      %p273 = scmp.ne.s32.totalorder %s256, %s272
      %p274 = scmp.eq.s32.totalorder %s34, 0
      %p275 = por %p273, %p274
      %s276 = ssub.s32 %s28, %s35
      %p277 = scmp.eq.s32.totalorder %s276, 0
      %s279 = sadd.s32 %s278, 1
      %s280 = scalar_select %p277, %s278, %s279
      %p283 = pneg %p277
      %p284 = scmp.eq.s32.totalorder %s28, 1
      %p285 = por %p283, %p284
      %p286 = scmp.ne.s32.totalorder %s278, %s281
      %p287 = scmp.eq.s32.totalorder %s28, 0
      %p288 = por %p286, %p287
      %p289 = scmp.ne.s32.totalorder %s278, %s281
      %p290 = scmp.eq.s32.totalorder %s33, 1
      %p291 = por %p289, %p290
      %p292 = scmp.ne.s32.totalorder %s281, %s282
      %p293 = scmp.eq.s32.totalorder %s33, 0
      %p294 = por %p292, %p293
      %p295 = scmp.ne.s32.totalorder %s281, %s282
      %p296 = scmp.eq.s32.totalorder %s34, 1
      %p297 = por %p295, %p296
      %p299 = scmp.ne.s32.totalorder %s282, %s298
      %p300 = scmp.eq.s32.totalorder %s34, 0
      %p301 = por %p299, %p300
      %s302 = ssub.s32 %s28, %s35
      %p303 = scmp.eq.s32.totalorder %s302, 0
      %s305 = sadd.s32 %s304, 1
      %s306 = scalar_select %p303, %s304, %s305
      %p309 = pneg %p303
      %p310 = scmp.eq.s32.totalorder %s28, 1
      %p311 = por %p309, %p310
      %p312 = scmp.ne.s32.totalorder %s304, %s307
      %p313 = scmp.eq.s32.totalorder %s28, 0
      %p314 = por %p312, %p313
      %p315 = scmp.ne.s32.totalorder %s304, %s307
      %p316 = scmp.eq.s32.totalorder %s33, 1
      %p317 = por %p315, %p316
      %p318 = scmp.ne.s32.totalorder %s307, %s308
      %p319 = scmp.eq.s32.totalorder %s33, 0
      %p320 = por %p318, %p319
      %p321 = scmp.ne.s32.totalorder %s307, %s308
      %p322 = scmp.eq.s32.totalorder %s34, 1
      %p323 = por %p321, %p322
      %p325 = scmp.ne.s32.totalorder %s308, %s324
      %p326 = scmp.eq.s32.totalorder %s34, 0
      %p327 = por %p325, %p326
      %s328 = ssub.s32 %s28, %s35
      %p329 = scmp.eq.s32.totalorder %s328, 0
      %s331 = sadd.s32 %s330, 1
      %s332 = scalar_select %p329, %s330, %s331
      %p335 = pneg %p329
      %p336 = scmp.eq.s32.totalorder %s28, 1
      %p337 = por %p335, %p336
      %p338 = scmp.ne.s32.totalorder %s330, %s333
      %p339 = scmp.eq.s32.totalorder %s28, 0
      %p340 = por %p338, %p339
      %p341 = scmp.ne.s32.totalorder %s330, %s333
      %p342 = scmp.eq.s32.totalorder %s33, 1
      %p343 = por %p341, %p342
      %p344 = scmp.ne.s32.totalorder %s333, %s334
      %p345 = scmp.eq.s32.totalorder %s33, 0
      %p346 = por %p344, %p345
      %p347 = scmp.ne.s32.totalorder %s333, %s334
      %p348 = scmp.eq.s32.totalorder %s34, 1
      %p349 = por %p347, %p348
      %p351 = scmp.ne.s32.totalorder %s334, %s350
      %p352 = scmp.eq.s32.totalorder %s34, 0
      %p353 = por %p351, %p352
      %s354 = ssub.s32 %s28, %s35
      %p355 = scmp.eq.s32.totalorder %s354, 0
      %s357 = sadd.s32 %s356, 1
      %s358 = scalar_select %p355, %s356, %s357
      %p361 = pneg %p355
      %p362 = scmp.eq.s32.totalorder %s28, 1
      %p363 = por %p361, %p362
      %p364 = scmp.ne.s32.totalorder %s356, %s359
      %p365 = scmp.eq.s32.totalorder %s28, 0
      %p366 = por %p364, %p365
      %p367 = scmp.ne.s32.totalorder %s356, %s359
      %p368 = scmp.eq.s32.totalorder %s33, 1
      %p369 = por %p367, %p368
      %p370 = scmp.ne.s32.totalorder %s359, %s360
      %p371 = scmp.eq.s32.totalorder %s33, 0
      %p372 = por %p370, %p371
      %p373 = scmp.ne.s32.totalorder %s359, %s360
      %p374 = scmp.eq.s32.totalorder %s34, 1
      %p375 = por %p373, %p374
      %p377 = scmp.ne.s32.totalorder %s360, %s376
      %p378 = scmp.eq.s32.totalorder %s34, 0
      %p379 = por %p377, %p378
      %s380 = ssub.s32 %s28, %s35
      %p381 = scmp.eq.s32.totalorder %s380, 0
      %s383 = sadd.s32 %s382, 1
      %s384 = scalar_select %p381, %s382, %s383
      %p387 = pneg %p381
      %p388 = scmp.eq.s32.totalorder %s28, 1
      %p389 = por %p387, %p388
      %p390 = scmp.ne.s32.totalorder %s382, %s385
      %p391 = scmp.eq.s32.totalorder %s28, 0
      %p392 = por %p390, %p391
      %p393 = scmp.ne.s32.totalorder %s382, %s385
      %p394 = scmp.eq.s32.totalorder %s33, 1
      %p395 = por %p393, %p394
      %p396 = scmp.ne.s32.totalorder %s385, %s386
      %p397 = scmp.eq.s32.totalorder %s33, 0
      %p398 = por %p396, %p397
      %p399 = scmp.ne.s32.totalorder %s385, %s386
      %p400 = scmp.eq.s32.totalorder %s34, 1
      %p401 = por %p399, %p400
      %p403 = scmp.ne.s32.totalorder %s386, %s402
      %p404 = scmp.eq.s32.totalorder %s34, 0
      %p405 = por %p403, %p404
      %s406 = ssub.s32 %s28, %s35
      %p407 = scmp.eq.s32.totalorder %s406, 0
      %s409 = sadd.s32 %s408, 1
      %s410 = scalar_select %p407, %s408, %s409
      %p413 = pneg %p407
      %p414 = scmp.eq.s32.totalorder %s28, 1
      %p415 = por %p413, %p414
      %p416 = scmp.ne.s32.totalorder %s408, %s411
      %p417 = scmp.eq.s32.totalorder %s28, 0
      %p418 = por %p416, %p417
      %p419 = scmp.ne.s32.totalorder %s408, %s411
      %p420 = scmp.eq.s32.totalorder %s33, 1
      %p421 = por %p419, %p420
      %p422 = scmp.ne.s32.totalorder %s411, %s412
      %p423 = scmp.eq.s32.totalorder %s33, 0
      %p424 = por %p422, %p423
      %p425 = scmp.ne.s32.totalorder %s411, %s412
      %p426 = scmp.eq.s32.totalorder %s34, 1
      %p427 = por %p425, %p426
      %p429 = scmp.ne.s32.totalorder %s412, %s428
      %p430 = scmp.eq.s32.totalorder %s34, 0
      %p431 = por %p429, %p430
      %s433 = sadd.s32 %s432, 1
      %p436 = scmp.eq.s32.totalorder %s28, 1
      %p437 = scmp.ne.s32.totalorder %s432, %s434
      %p438 = scmp.eq.s32.totalorder %s28, 0
      %p439 = por %p437, %p438
      %p440 = scmp.ne.s32.totalorder %s432, %s434
      %p441 = scmp.eq.s32.totalorder %s33, 1
      %p442 = por %p440, %p441
      %p443 = scmp.ne.s32.totalorder %s434, %s435
      %p444 = scmp.eq.s32.totalorder %s33, 0
      %p445 = por %p443, %p444
      %p446 = scmp.ne.s32.totalorder %s434, %s435
      %p447 = scmp.eq.s32.totalorder %s34, 1
      %p448 = por %p446, %p447
      %p450 = scmp.ne.s32.totalorder %s435, %s449
      %p451 = scmp.eq.s32.totalorder %s34, 0
      %p452 = por %p450, %p451
      %s454 = sadd.s32 %s453, 1
      %p457 = scmp.eq.s32.totalorder %s28, 1
      %p458 = scmp.ne.s32.totalorder %s453, %s455
      %p459 = scmp.eq.s32.totalorder %s28, 0
      %p460 = por %p458, %p459
      %p461 = scmp.ne.s32.totalorder %s453, %s455
      %p462 = scmp.eq.s32.totalorder %s33, 1
      %p463 = por %p461, %p462
      %p464 = scmp.ne.s32.totalorder %s455, %s456
      %p465 = scmp.eq.s32.totalorder %s33, 0
      %p466 = por %p464, %p465
      %p467 = scmp.ne.s32.totalorder %s455, %s456
      %p468 = scmp.eq.s32.totalorder %s34, 1
      %p469 = por %p467, %p468
      %p471 = scmp.ne.s32.totalorder %s456, %s470
      %p472 = scmp.eq.s32.totalorder %s34, 0
      %p473 = por %p471, %p472
      %s475 = sadd.s32 %s474, 1
      %p478 = scmp.eq.s32.totalorder %s28, 1
      %p479 = scmp.ne.s32.totalorder %s474, %s476
      %p480 = scmp.eq.s32.totalorder %s28, 0
      %p481 = por %p479, %p480
      %p482 = scmp.ne.s32.totalorder %s474, %s476
      %p483 = scmp.eq.s32.totalorder %s33, 1
      %p484 = por %p482, %p483
      %p485 = scmp.ne.s32.totalorder %s476, %s477
      %p486 = scmp.eq.s32.totalorder %s33, 0
      %p487 = por %p485, %p486
      %p488 = scmp.ne.s32.totalorder %s476, %s477
      %p489 = scmp.eq.s32.totalorder %s34, 1
      %p490 = por %p488, %p489
      %p492 = scmp.ne.s32.totalorder %s477, %s491
      %p493 = scmp.eq.s32.totalorder %s34, 0
      %p494 = por %p492, %p493
      %p495 = scmp.le.s32.totalorder 1, %s28
      %p496 = scmp.lt.s32.totalorder %s28, 3
      %p497 = pnand %p495, %p496
      %p498 = pneg %p497
      // Predicated region
      $region9: #{tpu_custom_call.1} parent=5 // pred_check
        _
      $region10: #{tpu_custom_call.1} parent=5 // pred_check_branch
        %500 = sbr.rel (%p497) target = $region12
      $region11: #{tpu_custom_call.1} parent=5 // pred_region
        %s501 = ssub.s32 %s28, 1
        // Predicated region
        $region13: #{tpu_custom_call.1} parent=11 // pred_check
          %p502 = pneg %p49
        $region14: #{tpu_custom_call.1} parent=11 // pred_check_branch
          %504 = sbr.rel (%p502) target = $region16
        $region15: #{tpu_custom_call.1} parent=11 // pred_region
          %s506 = ssub.s32 256, 256
          %507 = vsyncadd [#allocation5], %s506
          %s508 = sshll.u32 [#allocation4], 4
          %s509 = int_to_ptr.vmem [resolvable:$true] %s508
          %514 = dma.hbm_to_vmem [thread:$0]  %s0, 256, %s509, [#allocation5], 128, 128, 8
        $region16: #{tpu_custom_call.1} parent=11 // pred_fallthru
          _
        // Predicated region
        $region17: #{tpu_custom_call.1} parent=11 // pred_check
          %p515 = pneg %p70
        $region18: #{tpu_custom_call.1} parent=11 // pred_check_branch
          %517 = sbr.rel (%p515) target = $region20
        $region19: #{tpu_custom_call.1} parent=11 // pred_region
          %s519 = ssub.s32 32, 32
          %520 = vsyncadd [#allocation8], %s519
          %s522 = sshll.u32 [#allocation7], 4
          %s523 = int_to_ptr.vmem [resolvable:$true] %s522
          %525 = dma.hbm_to_vmem [thread:$0]  %s1, 32, %s523, [#allocation8]
        $region20: #{tpu_custom_call.1} parent=11 // pred_fallthru
          _
        // Predicated region
        $region21: #{tpu_custom_call.1} parent=11 // pred_check
          %p526 = pneg %p91
        $region22: #{tpu_custom_call.1} parent=11 // pred_check_branch
          %528 = sbr.rel (%p526) target = $region24
        $region23: #{tpu_custom_call.1} parent=11 // pred_region
          %s530 = ssub.s32 16, 16
          %531 = vsyncadd [#allocation8], %s530
          %s533 = sshll.u32 [#allocation9], 4
          %s534 = int_to_ptr.vmem [resolvable:$true] %s533
          %536 = dma.hbm_to_vmem [thread:$0]  %s2, 16, %s534, [#allocation8]
        $region24: #{tpu_custom_call.1} parent=11 // pred_fallthru
          _
        // Predicated region
        $region25: #{tpu_custom_call.1} parent=11 // pred_check
          %p537 = pneg %p112
        $region26: #{tpu_custom_call.1} parent=11 // pred_check_branch
          %539 = sbr.rel (%p537) target = $region28
        $region27: #{tpu_custom_call.1} parent=11 // pred_region
          %s541 = ssub.s32 16, 16
          %542 = vsyncadd [#allocation11], %s541
          %s544 = sshll.u32 [#allocation10], 4
          %s545 = int_to_ptr.vmem [resolvable:$true] %s544
          %547 = dma.hbm_to_vmem [thread:$0]  %s3, 16, %s545, [#allocation11]
        $region28: #{tpu_custom_call.1} parent=11 // pred_fallthru
          _
        // Predicated region
        $region29: #{tpu_custom_call.1} parent=11 // pred_check
          %p548 = pneg %p445
        $region30: #{tpu_custom_call.1} parent=11 // pred_check_branch
          %550 = sbr.rel (%p548) target = $region32
        $region31: #{tpu_custom_call.1} parent=11 // pred_region
          %s552 = ssub.s32 1024, 1024
          %553 = vsyncadd [#allocation8], %s552
          %s554 = sshll.u32 [#allocation16], 4
          %s555 = int_to_ptr.vmem [resolvable:$true] %s554
          %560 = dma.hbm_to_vmem [thread:$0]  %s16, 1024, %s555, [#allocation8], 64, 64, 4
        $region32: #{tpu_custom_call.1} parent=11 // pred_fallthru
          _
        // Predicated region
        $region33: #{tpu_custom_call.1} parent=11 // pred_check
          %p561 = pneg %p466
        $region34: #{tpu_custom_call.1} parent=11 // pred_check_branch
          %563 = sbr.rel (%p561) target = $region36
        $region35: #{tpu_custom_call.1} parent=11 // pred_region
          _
        $region36: #{tpu_custom_call.1} parent=11 // pred_fallthru
          _
      $region12: #{tpu_custom_call.1} parent=5 // pred_fallthru
        _
      %p564 = scmp.lt.s32.totalorder %s28, 2
      // Predicated region
      $region37: #{tpu_custom_call.1} parent=5 // pred_check
        %p565 = pneg %p564
      $region38: #{tpu_custom_call.1} parent=5 // pred_check_branch
        %567 = sbr.rel (%p565) target = $region40
      $region39: #{tpu_custom_call.1} parent=5 // pred_region
        // Predicated region
        $region41: #{tpu_custom_call.1} parent=39 // pred_check
          %p568 = pneg %p132
        $region42: #{tpu_custom_call.1} parent=39 // pred_check_branch
          %570 = sbr.rel (%p568) target = $region44
        $region43: #{tpu_custom_call.1} parent=39 // pred_region
          %s571 = sand.u32 %s28, 1
          %s572 = scalar_lea.sflag [#allocation5], %s571
          %s573 = sand.u32 %s122, 1
          %s574 = smul.addr %s573, 192
          %s575 = scalar_lea.vmem [#allocation12], %s574
          %s577 = ssub.s32 3072, 3072
          %578 = vsyncadd %s572, %s577
          %s579 = smul.addr %s28, 48
          %s580 = smul.addr %s579, 64
          %s581 = scalar_lea.hbm %s4, %s580
          %s582 = sshll.u32 %s575, 4
          %s583 = int_to_ptr.vmem [resolvable:$true] %s582
          %588 = dma.hbm_to_vmem [thread:$0]  %s581, 3072, %s583, %s572, 192, 192, 12
        $region44: #{tpu_custom_call.1} parent=39 // pred_fallthru
          _
        // Predicated region
        $region45: #{tpu_custom_call.1} parent=39 // pred_check
          %p589 = pneg %p158
        $region46: #{tpu_custom_call.1} parent=39 // pred_check_branch
          %591 = sbr.rel (%p589) target = $region48
        $region47: #{tpu_custom_call.1} parent=39 // pred_region
          %p592 = scmp.lt.s32.totalorder %s28, 1
          %s593 = scalar_select %p592, %s28, 1
          %s594 = smul.addr %s593, 3
          %s595 = scalar_lea.vmem %s5, %s594
        $region48: #{tpu_custom_call.1} parent=39 // pred_fallthru
          _
        // Predicated region
        $region49: #{tpu_custom_call.1} parent=39 // pred_check
          %p596 = pneg %p184
        $region50: #{tpu_custom_call.1} parent=39 // pred_check_branch
          %598 = sbr.rel (%p596) target = $region52
        $region51: #{tpu_custom_call.1} parent=39 // pred_region
          %s599 = sand.u32 %s28, 1
          %s600 = scalar_lea.sflag [#allocation5], %s599
          %s601 = sand.u32 %s174, 1
          %s602 = smul.addr %s601, 64
          %s603 = scalar_lea.vmem [#allocation13], %s602
          %s605 = ssub.s32 1024, 1024
          %606 = vsyncadd %s600, %s605
          %s607 = smul.addr %s28, 16
          %s608 = smul.addr %s607, 64
          %s609 = scalar_lea.hbm %s6, %s608
          %s610 = sshll.u32 %s603, 4
          %s611 = int_to_ptr.vmem [resolvable:$true] %s610
          %616 = dma.hbm_to_vmem [thread:$0]  %s609, 1024, %s611, %s600, 64, 64, 4
        $region52: #{tpu_custom_call.1} parent=39 // pred_fallthru
          _
        // Predicated region
        $region53: #{tpu_custom_call.1} parent=39 // pred_check
          %p617 = pneg %p210
        $region54: #{tpu_custom_call.1} parent=39 // pred_check_branch
          %619 = sbr.rel (%p617) target = $region56
        $region55: #{tpu_custom_call.1} parent=39 // pred_region
          %p620 = scmp.lt.s32.totalorder %s28, 1
          %s621 = scalar_select %p620, %s28, 1
          %s622 = scalar_lea.vmem %s7, %s621
        $region56: #{tpu_custom_call.1} parent=39 // pred_fallthru
          _
        // Predicated region
        $region57: #{tpu_custom_call.1} parent=39 // pred_check
          %p623 = pneg %p236
        $region58: #{tpu_custom_call.1} parent=39 // pred_check_branch
          %625 = sbr.rel (%p623) target = $region60
        $region59: #{tpu_custom_call.1} parent=39 // pred_region
          %p626 = scmp.lt.s32.totalorder %s28, 1
          %s627 = scalar_select %p626, %s28, 1
          %s628 = scalar_lea.vmem %s8, %s627
        $region60: #{tpu_custom_call.1} parent=39 // pred_fallthru
          _
        // Predicated region
        $region61: #{tpu_custom_call.1} parent=39 // pred_check
          %p629 = pneg %p262
        $region62: #{tpu_custom_call.1} parent=39 // pred_check_branch
          %631 = sbr.rel (%p629) target = $region64
        $region63: #{tpu_custom_call.1} parent=39 // pred_region
          %p632 = scmp.lt.s32.totalorder %s28, 1
          %s633 = scalar_select %p632, %s28, 1
          %s634 = scalar_lea.vmem %s9, %s633
        $region64: #{tpu_custom_call.1} parent=39 // pred_fallthru
          _
        // Predicated region
        $region65: #{tpu_custom_call.1} parent=39 // pred_check
          %p635 = pneg %p288
        $region66: #{tpu_custom_call.1} parent=39 // pred_check_branch
          %637 = sbr.rel (%p635) target = $region68
        $region67: #{tpu_custom_call.1} parent=39 // pred_region
          %s638 = sand.u32 %s28, 1
          %s639 = scalar_lea.sflag [#allocation5], %s638
          %s640 = sand.u32 %s278, 1
          %s641 = smul.addr %s640, 256
          %s642 = scalar_lea.vmem [#allocation14], %s641
          %s644 = ssub.s32 4096, 4096
          %645 = vsyncadd %s639, %s644
          %s646 = smul.addr %s28, 64
          %s647 = smul.addr %s646, 64
          %s648 = scalar_lea.hbm %s10, %s647
          %s649 = sshll.u32 %s642, 4
          %s650 = int_to_ptr.vmem [resolvable:$true] %s649
          %655 = dma.hbm_to_vmem [thread:$0]  %s648, 4096, %s650, %s639, 256, 256, 16
        $region68: #{tpu_custom_call.1} parent=39 // pred_fallthru
          _
        // Predicated region
        $region69: #{tpu_custom_call.1} parent=39 // pred_check
          %p656 = pneg %p314
        $region70: #{tpu_custom_call.1} parent=39 // pred_check_branch
          %658 = sbr.rel (%p656) target = $region72
        $region71: #{tpu_custom_call.1} parent=39 // pred_region
          %p659 = scmp.lt.s32.totalorder %s28, 1
          %s660 = scalar_select %p659, %s28, 1
          %s661 = smul.addr %s660, 4
          %s662 = scalar_lea.vmem %s11, %s661
        $region72: #{tpu_custom_call.1} parent=39 // pred_fallthru
          _
        // Predicated region
        $region73: #{tpu_custom_call.1} parent=39 // pred_check
          %p663 = pneg %p340
        $region74: #{tpu_custom_call.1} parent=39 // pred_check_branch
          %665 = sbr.rel (%p663) target = $region76
        $region75: #{tpu_custom_call.1} parent=39 // pred_region
          %s666 = sand.u32 %s28, 1
          %s667 = scalar_lea.sflag [#allocation5], %s666
          %s668 = sand.u32 %s330, 1
          %s669 = smul.addr %s668, 256
          %s670 = scalar_lea.vmem [#allocation15], %s669
          %s672 = ssub.s32 4096, 4096
          %673 = vsyncadd %s667, %s672
          %s674 = smul.addr %s28, 64
          %s675 = smul.addr %s674, 64
          %s676 = scalar_lea.hbm %s12, %s675
          %s677 = sshll.u32 %s670, 4
          %s678 = int_to_ptr.vmem [resolvable:$true] %s677
          %683 = dma.hbm_to_vmem [thread:$0]  %s676, 4096, %s678, %s667, 64, 64, 4
        $region76: #{tpu_custom_call.1} parent=39 // pred_fallthru
          _
        // Predicated region
        $region77: #{tpu_custom_call.1} parent=39 // pred_check
          %p684 = pneg %p366
        $region78: #{tpu_custom_call.1} parent=39 // pred_check_branch
          %686 = sbr.rel (%p684) target = $region80
        $region79: #{tpu_custom_call.1} parent=39 // pred_region
          %p687 = scmp.lt.s32.totalorder %s28, 1
          %s688 = scalar_select %p687, %s28, 1
          %s689 = scalar_lea.vmem %s13, %s688
        $region80: #{tpu_custom_call.1} parent=39 // pred_fallthru
          _
        // Predicated region
        $region81: #{tpu_custom_call.1} parent=39 // pred_check
          %p690 = pneg %p392
        $region82: #{tpu_custom_call.1} parent=39 // pred_check_branch
          %692 = sbr.rel (%p690) target = $region84
        $region83: #{tpu_custom_call.1} parent=39 // pred_region
          %p693 = scmp.lt.s32.totalorder %s28, 1
          %s694 = scalar_select %p693, %s28, 1
          %s695 = scalar_lea.vmem %s14, %s694
        $region84: #{tpu_custom_call.1} parent=39 // pred_fallthru
          _
        // Predicated region
        $region85: #{tpu_custom_call.1} parent=39 // pred_check
          %p696 = pneg %p418
        $region86: #{tpu_custom_call.1} parent=39 // pred_check_branch
          %698 = sbr.rel (%p696) target = $region88
        $region87: #{tpu_custom_call.1} parent=39 // pred_region
          %p699 = scmp.lt.s32.totalorder %s28, 1
          %s700 = scalar_select %p699, %s28, 1
          %s701 = scalar_lea.vmem %s15, %s700
        $region88: #{tpu_custom_call.1} parent=39 // pred_fallthru
          _
      $region40: #{tpu_custom_call.1} parent=5 // pred_fallthru
        _
      %p702 = scmp.le.s32.totalorder 1, %s28
      %p703 = scmp.lt.s32.totalorder %s28, 3
      %p704 = pnand %p702, %p703
      %p705 = pneg %p704
      // Predicated region
      $region89: #{tpu_custom_call.1} parent=5 // pred_check
        _
      $region90: #{tpu_custom_call.1} parent=5 // pred_check_branch
        %707 = sbr.rel (%p704) target = $region92
      $region91: #{tpu_custom_call.1} parent=5 // pred_region
        %s708 = ssub.s32 %s28, 1
        // Predicated region
        $region93: #{tpu_custom_call.1} parent=91 // pred_check
          %p709 = pneg %p49
        $region94: #{tpu_custom_call.1} parent=91 // pred_check_branch
          %711 = sbr.rel (%p709) target = $region96
        $region95: #{tpu_custom_call.1} parent=91 // pred_region
          %712 = dma.done [#allocation5], 256
        $region96: #{tpu_custom_call.1} parent=91 // pred_fallthru
          _
        // Predicated region
        $region97: #{tpu_custom_call.1} parent=91 // pred_check
          %p713 = pneg %p70
        $region98: #{tpu_custom_call.1} parent=91 // pred_check_branch
          %715 = sbr.rel (%p713) target = $region100
        $region99: #{tpu_custom_call.1} parent=91 // pred_region
          %716 = dma.done [#allocation8], 32
        $region100: #{tpu_custom_call.1} parent=91 // pred_fallthru
          _
        // Predicated region
        $region101: #{tpu_custom_call.1} parent=91 // pred_check
          %p717 = pneg %p91
        $region102: #{tpu_custom_call.1} parent=91 // pred_check_branch
          %719 = sbr.rel (%p717) target = $region104
        $region103: #{tpu_custom_call.1} parent=91 // pred_region
          %720 = dma.done [#allocation8], 16
        $region104: #{tpu_custom_call.1} parent=91 // pred_fallthru
          _
        // Predicated region
        $region105: #{tpu_custom_call.1} parent=91 // pred_check
          %p721 = pneg %p112
        $region106: #{tpu_custom_call.1} parent=91 // pred_check_branch
          %723 = sbr.rel (%p721) target = $region108
        $region107: #{tpu_custom_call.1} parent=91 // pred_region
          %724 = dma.done [#allocation11], 16
        $region108: #{tpu_custom_call.1} parent=91 // pred_fallthru
          _
        %s725 = sand.u32 %s33, 1
        %s726 = scalar_lea.sflag [#allocation5], %s725
        %s727 = sand.u32 %s125, 1
        %s728 = smul.addr %s727, 192
        %s729 = scalar_lea.vmem [#allocation12], %s728
        // Predicated region
        $region109: #{tpu_custom_call.1} parent=91 // pred_check
          %p730 = pneg %p138
        $region110: #{tpu_custom_call.1} parent=91 // pred_check_branch
          %732 = sbr.rel (%p730) target = $region112
        $region111: #{tpu_custom_call.1} parent=91 // pred_region
          %733 = dma.done %s726, 3072
        $region112: #{tpu_custom_call.1} parent=91 // pred_fallthru
          _
        %s734 = sand.u32 %s33, 1
        %s735 = scalar_lea.sflag [#allocation5], %s734
        %s736 = sand.u32 %s177, 1
        %s737 = smul.addr %s736, 64
        %s738 = scalar_lea.vmem [#allocation13], %s737
        // Predicated region
        $region113: #{tpu_custom_call.1} parent=91 // pred_check
          %p739 = pneg %p190
        $region114: #{tpu_custom_call.1} parent=91 // pred_check_branch
          %741 = sbr.rel (%p739) target = $region116
        $region115: #{tpu_custom_call.1} parent=91 // pred_region
          %742 = dma.done %s735, 1024
        $region116: #{tpu_custom_call.1} parent=91 // pred_fallthru
          _
        %s743 = sand.u32 %s33, 1
        %s744 = scalar_lea.sflag [#allocation5], %s743
        %s745 = sand.u32 %s281, 1
        %s746 = smul.addr %s745, 256
        %s747 = scalar_lea.vmem [#allocation14], %s746
        // Predicated region
        $region117: #{tpu_custom_call.1} parent=91 // pred_check
          %p748 = pneg %p294
        $region118: #{tpu_custom_call.1} parent=91 // pred_check_branch
          %750 = sbr.rel (%p748) target = $region120
        $region119: #{tpu_custom_call.1} parent=91 // pred_region
          %751 = dma.done %s744, 4096
        $region120: #{tpu_custom_call.1} parent=91 // pred_fallthru
          _
        %s752 = sand.u32 %s33, 1
        %s753 = scalar_lea.sflag [#allocation5], %s752
        %s754 = sand.u32 %s333, 1
        %s755 = smul.addr %s754, 256
        %s756 = scalar_lea.vmem [#allocation15], %s755
        // Predicated region
        $region121: #{tpu_custom_call.1} parent=91 // pred_check
          %p757 = pneg %p346
        $region122: #{tpu_custom_call.1} parent=91 // pred_check_branch
          %759 = sbr.rel (%p757) target = $region124
        $region123: #{tpu_custom_call.1} parent=91 // pred_region
          %760 = dma.done %s753, 4096
        $region124: #{tpu_custom_call.1} parent=91 // pred_fallthru
          _
        // Predicated region
        $region125: #{tpu_custom_call.1} parent=91 // pred_check
          %p761 = pneg %p445
        $region126: #{tpu_custom_call.1} parent=91 // pred_check_branch
          %763 = sbr.rel (%p761) target = $region128
        $region127: #{tpu_custom_call.1} parent=91 // pred_region
          %764 = dma.done [#allocation8], 1024
        $region128: #{tpu_custom_call.1} parent=91 // pred_fallthru
          _
        %p765 = pneg %p49
        %p766 = pneg %p46
        %p767 = pneg %p70
        %p768 = pneg %p67
        %p769 = pneg %p91
        %p770 = pneg %p88
        %p771 = pneg %p112
        %p772 = pneg %p109
        %s773 = sand.u32 %s33, 1
        %s774 = scalar_lea.sflag [#allocation5], %s773
        %s775 = sand.u32 %s125, 1
        %s776 = smul.addr %s775, 192
        %s777 = scalar_lea.vmem [#allocation12], %s776
        %p778 = pneg %p138
        %p779 = pneg %p135
        %p780 = scmp.lt.s32.totalorder %s33, 1
        %s781 = scalar_select %p780, %s33, 1
        %s782 = smul.addr %s781, 3
        %s783 = scalar_lea.vmem %s5, %s782
        %p784 = pneg %p164
        %p785 = pneg %p161
        %s786 = sand.u32 %s33, 1
        %s787 = scalar_lea.sflag [#allocation5], %s786
        %s788 = sand.u32 %s177, 1
        %s789 = smul.addr %s788, 64
        %s790 = scalar_lea.vmem [#allocation13], %s789
        %p791 = pneg %p190
        %p792 = pneg %p187
        %p793 = scmp.lt.s32.totalorder %s33, 1
        %s794 = scalar_select %p793, %s33, 1
        %s795 = scalar_lea.vmem %s7, %s794
        %p796 = pneg %p216
        %p797 = pneg %p213
        %p798 = scmp.lt.s32.totalorder %s33, 1
        %s799 = scalar_select %p798, %s33, 1
        %s800 = scalar_lea.vmem %s8, %s799
        %p801 = pneg %p242
        %p802 = pneg %p239
        %p803 = scmp.lt.s32.totalorder %s33, 1
        %s804 = scalar_select %p803, %s33, 1
        %s805 = scalar_lea.vmem %s9, %s804
        %p806 = pneg %p268
        %p807 = pneg %p265
        %s808 = sand.u32 %s33, 1
        %s809 = scalar_lea.sflag [#allocation5], %s808
        %s810 = sand.u32 %s281, 1
        %s811 = smul.addr %s810, 256
        %s812 = scalar_lea.vmem [#allocation14], %s811
        %p813 = pneg %p294
        %p814 = pneg %p291
        %p815 = scmp.lt.s32.totalorder %s33, 1
        %s816 = scalar_select %p815, %s33, 1
        %s817 = smul.addr %s816, 4
        %s818 = scalar_lea.vmem %s11, %s817
        %p819 = pneg %p320
        %p820 = pneg %p317
        %s821 = sand.u32 %s33, 1
        %s822 = scalar_lea.sflag [#allocation5], %s821
        %s823 = sand.u32 %s333, 1
        %s824 = smul.addr %s823, 256
        %s825 = scalar_lea.vmem [#allocation15], %s824
        %p826 = pneg %p346
        %p827 = pneg %p343
        %p828 = scmp.lt.s32.totalorder %s33, 1
        %s829 = scalar_select %p828, %s33, 1
        %s830 = scalar_lea.vmem %s13, %s829
        %p831 = pneg %p372
        %p832 = pneg %p369
        %p833 = scmp.lt.s32.totalorder %s33, 1
        %s834 = scalar_select %p833, %s33, 1
        %s835 = scalar_lea.vmem %s14, %s834
        %p836 = pneg %p398
        %p837 = pneg %p395
        %p838 = scmp.lt.s32.totalorder %s33, 1
        %s839 = scalar_select %p838, %s33, 1
        %s840 = scalar_lea.vmem %s15, %s839
        %p841 = pneg %p424
        %p842 = pneg %p421
        %p843 = pneg %p445
        %p844 = pneg %p442
        %p845 = pneg %p466
        %p846 = pneg %p463
        %p847 = pneg %p487
        %p848 = pneg %p484
        %p849 = scmp.lt.s32.totalorder %s33, 1
        %s850 = scalar_select %p849, %s33, 1
        %s851 = smul.addr %s850, 3
        %s852 = scalar_lea.vmem %s5, %s851
        %p853 = scmp.lt.s32.totalorder %s33, 1
        %s854 = scalar_select %p853, %s33, 1
        %s855 = scalar_lea.vmem %s7, %s854
        %p856 = scmp.lt.s32.totalorder %s33, 1
        %s857 = scalar_select %p856, %s33, 1
        %s858 = scalar_lea.vmem %s8, %s857
        %p859 = scmp.lt.s32.totalorder %s33, 1
        %s860 = scalar_select %p859, %s33, 1
        %s861 = scalar_lea.vmem %s9, %s860
        %p862 = scmp.lt.s32.totalorder %s33, 1
        %s863 = scalar_select %p862, %s33, 1
        %s864 = smul.addr %s863, 4
        %s865 = scalar_lea.vmem %s11, %s864
        %p866 = scmp.lt.s32.totalorder %s33, 1
        %s867 = scalar_select %p866, %s33, 1
        %s868 = scalar_lea.vmem %s13, %s867
        %p869 = scmp.lt.s32.totalorder %s33, 1
        %s870 = scalar_select %p869, %s33, 1
        %s871 = scalar_lea.vmem %s14, %s870
        %p872 = scmp.lt.s32.totalorder %s33, 1
        %s873 = scalar_select %p872, %s33, 1
        %s874 = scalar_lea.vmem %s15, %s873
        %p876 = scmp.eq.s32.totalorder %s33, 0
        // Predicated region
        $region129: #{tpu_custom_call.1} parent=91 // pred_check
          %p877 = pneg %p876
        $region130: #{tpu_custom_call.1} parent=91 // pred_check_branch
          %879 = sbr.rel (%p877) target = $region132
        $region131: #{tpu_custom_call.1} parent=91 // pred_region
          %v880 = vld [vmem:[#allocation4] sm:$0xff]
          %v881 = vld [vmem:[#allocation4 + $0x8] sm:$0xff]
          %v882 = vld [vmem:[#allocation9] sm:$0x1]
          %v883 = vld [vmem:[#allocation10] sm:$0x1]
          %884 = vadd.xlane.f32.xlu0 %v880
          %v885 = vpop.xlane.xlu0 %884
          %886 = vadd.xlane.f32.xlu0 %v881
          %v887 = vpop.xlane.xlu0 %886
          %v888 = vrcp.pop 128.0
          %v889 = vmul.f32 %v885, %v888
          %v890 = vmul.f32 %v887, %v888
          %v891 = vsub.f32 %v880, %v889
          %v892 = vsub.f32 %v881, %v890
          %v893 = vmul.f32 %v891, %v891
          %v894 = vmul.f32 %v892, %v892
          %895 = vadd.xlane.f32.xlu0 %v893
          %v896 = vpop.xlane.xlu0 %895
          %897 = vadd.xlane.f32.xlu0 %v894
          %v898 = vpop.xlane.xlu0 %897
          %v899 = vmul.f32 %v896, %v888
          %v900 = vmul.f32 %v898, %v888
          %v901 = vadd.f32 %v899, 1e-12
          %v902 = vadd.f32 %v900, 1e-12
          %v903 = vrsqrt.pop %v901
          %v904 = vrsqrt.pop %v902
          %v905 = vmul.f32 %v891, %v903
          %v906 = vmul.f32 %v892, %v904
          %v908 = vlaneseq
          %v909 = vshrl.u32 %v908, 7
          %v910 = vsub.s32 0, %v909
          %v911 = vrot.slane %v882, %v910
          %v913 = vmul.f32 %v905, %v911
          %v914 = vmul.f32 %v906, %v911
          %v916 = vlaneseq
          %v917 = vshrl.u32 %v916, 7
          %v918 = vsub.s32 0, %v917
          %v919 = vrot.slane %v883, %v918
          %v921 = vadd.f32 %v913, %v919
          %v922 = vadd.f32 %v914, %v919
          %923 = vst [vmem:[#allocation2] sm:$0xff] %v921
          %924 = vst [vmem:[#allocation2 + $0x8] sm:$0xff] %v922
        $region132: #{tpu_custom_call.1} parent=91 // pred_fallthru
          _
        %v925 = vld [vmem:[#allocation2] sm:$0xff]
        %v926 = vld [vmem:[#allocation2 + $0x8] sm:$0xff]
        %v927 = vld [vmem:[%s729] sm:$0xff]
        %v928 = vld [vmem:[%s729 + $0x8] sm:$0xf]
        %v929 = vld [vmem:[%s729 + $0xc] sm:$0xff]
        %v930 = vld [vmem:[%s729 + $0x14] sm:$0xf]
        %v931 = vld [vmem:[%s729 + $0x18] sm:$0xff]
        %v932 = vld [vmem:[%s729 + $0x20] sm:$0xf]
        %v933 = vld [vmem:[%s729 + $0x24] sm:$0xff]
        %v934 = vld [vmem:[%s729 + $0x2c] sm:$0xf]
        %v935 = vld [vmem:[%s729 + $0x30] sm:$0xff]
        %v936 = vld [vmem:[%s729 + $0x38] sm:$0xf]
        %v937 = vld [vmem:[%s729 + $0x3c] sm:$0xff]
        %v938 = vld [vmem:[%s729 + $0x44] sm:$0xf]
        %v939 = vld [vmem:[%s729 + $0x48] sm:$0xff]
        %v940 = vld [vmem:[%s729 + $0x50] sm:$0xf]
        %v941 = vld [vmem:[%s729 + $0x54] sm:$0xff]
        %v942 = vld [vmem:[%s729 + $0x5c] sm:$0xf]
        %v943 = vld [vmem:[%s729 + $0x60] sm:$0xff]
        %v944 = vld [vmem:[%s729 + $0x68] sm:$0xf]
        %v945 = vld [vmem:[%s729 + $0x6c] sm:$0xff]
        %v946 = vld [vmem:[%s729 + $0x74] sm:$0xf]
        %v947 = vld [vmem:[%s729 + $0x78] sm:$0xff]
        %v948 = vld [vmem:[%s729 + $0x80] sm:$0xf]
        %v949 = vld [vmem:[%s729 + $0x84] sm:$0xff]
        %v950 = vld [vmem:[%s729 + $0x8c] sm:$0xf]
        %v951 = vld [vmem:[%s729 + $0x90] sm:$0xff]
        %v952 = vld [vmem:[%s729 + $0x98] sm:$0xf]
        %v953 = vld [vmem:[%s729 + $0x9c] sm:$0xff]
        %v954 = vld [vmem:[%s729 + $0xa4] sm:$0xf]
        %v955 = vld [vmem:[%s729 + $0xa8] sm:$0xff]
        %v956 = vld [vmem:[%s729 + $0xb0] sm:$0xf]
        %v957 = vld [vmem:[%s729 + $0xb4] sm:$0xff]
        %v958 = vld [vmem:[%s729 + $0xbc] sm:$0xf]
        %v959 = vld [vmem:[%s852] sm:$0x7]
        %v960 = vpack.c.bf16 %v926, %v925
        %v962 = vlaneseq
        %v963 = vshrl.u32 %v962, 7
        %v964 = vsub.s32 0, %v963
        %v965 = vrot.slane %v959, %v964
        %v966 = vlaneseq
        %v967 = vshrl.u32 %v966, 7
        %v968 = vsub.s32 1, %v967
        %v969 = vrot.slane %v959, %v968
        %v970 = vlaneseq
        %v971 = vshrl.u32 %v970, 7
        %v972 = vsub.s32 2, %v971
        %v973 = vrot.slane %v959, %v972
        %v1009 = vunpack.c.l.b16 %v927
        %v1010 = vunpack.c.h.b16 %v927
        %v1011 = vunpack.c.l.b16 %v928
        %v1012 = vunpack.c.l.b16 %v929
        %v1013 = vunpack.c.h.b16 %v929
        %v1014 = vunpack.c.l.b16 %v930
        %v1015 = vunpack.c.l.b16 %v931
        %v1016 = vunpack.c.h.b16 %v931
        %v1017 = vunpack.c.l.b16 %v932
        %v1018 = vunpack.c.l.b16 %v933
        %v1019 = vunpack.c.h.b16 %v933
        %v1020 = vunpack.c.l.b16 %v934
        %v1021 = vunpack.c.l.b16 %v935
        %v1022 = vunpack.c.h.b16 %v935
        %v1023 = vunpack.c.l.b16 %v936
        %v1024 = vunpack.c.l.b16 %v937
        %v1025 = vunpack.c.h.b16 %v937
        %v1026 = vunpack.c.l.b16 %v938
        %v1027 = vunpack.c.l.b16 %v939
        %v1028 = vunpack.c.h.b16 %v939
        %v1029 = vunpack.c.l.b16 %v940
        %v1030 = vunpack.c.l.b16 %v941
        %v1031 = vunpack.c.h.b16 %v941
        %v1032 = vunpack.c.l.b16 %v942
        %v1033 = vunpack.c.l.b16 %v943
        %v1034 = vunpack.c.h.b16 %v943
        %v1035 = vunpack.c.l.b16 %v944
        %v1036 = vunpack.c.l.b16 %v945
        %v1037 = vunpack.c.h.b16 %v945
        %v1038 = vunpack.c.l.b16 %v946
        %v1039 = vunpack.c.l.b16 %v947
        %v1040 = vunpack.c.h.b16 %v947
        %v1041 = vunpack.c.l.b16 %v948
        %v1042 = vunpack.c.l.b16 %v949
        %v1043 = vunpack.c.h.b16 %v949
        %v1044 = vunpack.c.l.b16 %v950
        %v1045 = vunpack.c.l.b16 %v951
        %v1046 = vunpack.c.h.b16 %v951
        %v1047 = vunpack.c.l.b16 %v952
        %v1048 = vunpack.c.l.b16 %v953
        %v1049 = vunpack.c.h.b16 %v953
        %v1050 = vunpack.c.l.b16 %v954
        %v1051 = vunpack.c.l.b16 %v955
        %v1052 = vunpack.c.h.b16 %v955
        %v1053 = vunpack.c.l.b16 %v956
        %v1054 = vunpack.c.l.b16 %v957
        %v1055 = vunpack.c.h.b16 %v957
        %v1056 = vunpack.c.l.b16 %v958
        %v1057 = vpack.c.b16 %v1012, %v1009
        %v1058 = vpack.c.b16 %v1013, %v1010
        %v1059 = vpack.c.b16 %v1014, %v1011
        %v1060 = vpack.c.b16 %v1018, %v1015
        %v1061 = vpack.c.b16 %v1019, %v1016
        %v1062 = vpack.c.b16 %v1020, %v1017
        %v1063 = vpack.c.b16 %v1024, %v1021
        %v1064 = vpack.c.b16 %v1025, %v1022
        %v1065 = vpack.c.b16 %v1026, %v1023
        %v1066 = vpack.c.b16 %v1030, %v1027
        %v1067 = vpack.c.b16 %v1031, %v1028
        %v1068 = vpack.c.b16 %v1032, %v1029
        %v1069 = vpack.c.b16 %v1036, %v1033
        %v1070 = vpack.c.b16 %v1037, %v1034
        %v1071 = vpack.c.b16 %v1038, %v1035
        %v1072 = vpack.c.b16 %v1042, %v1039
        %v1073 = vpack.c.b16 %v1043, %v1040
        %v1074 = vpack.c.b16 %v1044, %v1041
        %v1075 = vpack.c.b16 %v1048, %v1045
        %v1076 = vpack.c.b16 %v1049, %v1046
        %v1077 = vpack.c.b16 %v1050, %v1047
        %v1078 = vpack.c.b16 %v1054, %v1051
        %v1079 = vpack.c.b16 %v1055, %v1052
        %v1080 = vpack.c.b16 %v1056, %v1053
        %1105 = vmatprep.subr.bf16.mxu0 %v1058
        %1106 = vmatpush1.bf16.msra.mxu0 %v1057
        %1107 = vmatprep.subr.bf16.mxu0 %v1061
        %1108 = vmatpush1.bf16.msra.mxu0 %v1060
        %1109 = vmatprep.subr.bf16.mxu0 %v1064
        %1110 = vmatpush1.bf16.msra.mxu0 %v1063
        %1111 = vmatprep.subr.bf16.mxu0 %v1067
        %1112 = vmatpush1.bf16.msra.mxu0 %v1066
        %1113 = vmatprep.subr.bf16.mxu0 %v1070
        %1114 = vmatpush1.bf16.msra.mxu0 %v1069
        %1115 = vmatprep.subr.bf16.mxu0 %v1073
        %1116 = vmatpush1.bf16.msra.mxu0 %v1072
        %1117 = vmatprep.subr.bf16.mxu0 %v1076
        %1118 = vmatpush1.bf16.msra.mxu0 %v1075
        %1119 = vmatprep.subr.bf16.mxu0 %v1079
        %1120 = vmatpush1.bf16.msra.mxu0 %v1078
        %1121 = vmatprep.subr.bf16.mxu0 0
        %1122 = vmatpush1.bf16.msra.mxu0 0
        %1123 = vmatprep.subr.bf16.mxu0 0
        %1124 = vmatpush1.bf16.msra.mxu0 0
        %1125 = vmatprep.subr.bf16.mxu0 0
        %1126 = vmatpush1.bf16.msra.mxu0 0
        %1127 = vmatprep.subr.bf16.mxu0 0
        %1128 = vmatpush1.bf16.msra.mxu0 0
        %1129 = vmatprep.subr.bf16.mxu0 0
        %1130 = vmatpush1.bf16.msra.mxu0 0
        %1131 = vmatprep.subr.bf16.mxu0 0
        %1132 = vmatpush1.bf16.msra.mxu0 0
        %1133 = vmatprep.subr.bf16.mxu0 0
        %1134 = vmatpush1.bf16.msra.mxu0 0
        %1135 = vmatprep.subr.bf16.mxu0 0
        %1136 = vmatpush1.bf16.msra.mxu0 0
        %1137 = vmatprep.mubr.bf16.mxu0 0
        %1138 = vmatmul.mubr.bf16.gmra.mrb[0].mxu0 %v960
        %v1139 = vpop.f32.mrb[0].mxu0
        %v1140 = vadd.f32 %v965, %v1139
        %v1141 = vpop.f32.mrb[0].mxu0
        %v1142 = vadd.f32 %v969, %v1141
        %v1143 = vpop.f32.mrb[0].mxu0
        %v1144 = vadd.f32 %v965, %v1143
        %v1145 = vpop.f32.mrb[0].mxu0
        %v1146 = vadd.f32 %v969, %v1145
        %1147 = vdwg.mxu0
        %1148 = vmatprep.subr.bf16.mxu0 0
        %1149 = vmatpush1.bf16.msra.mxu0 %v1059
        %1150 = vmatprep.subr.bf16.mxu0 0
        %1151 = vmatpush1.bf16.msra.mxu0 %v1062
        %1152 = vmatprep.subr.bf16.mxu0 0
        %1153 = vmatpush1.bf16.msra.mxu0 %v1065
        %1154 = vmatprep.subr.bf16.mxu0 0
        %1155 = vmatpush1.bf16.msra.mxu0 %v1068
        %1156 = vmatprep.subr.bf16.mxu0 0
        %1157 = vmatpush1.bf16.msra.mxu0 %v1071
        %1158 = vmatprep.subr.bf16.mxu0 0
        %1159 = vmatpush1.bf16.msra.mxu0 %v1074
        %1160 = vmatprep.subr.bf16.mxu0 0
        %1161 = vmatpush1.bf16.msra.mxu0 %v1077
        %1162 = vmatprep.subr.bf16.mxu0 0
        %1163 = vmatpush1.bf16.msra.mxu0 %v1080
        %1164 = vmatprep.subr.bf16.mxu0 0
        %1165 = vmatpush1.bf16.msra.mxu0 0
        %1166 = vmatprep.subr.bf16.mxu0 0
        %1167 = vmatpush1.bf16.msra.mxu0 0
        %1168 = vmatprep.subr.bf16.mxu0 0
        %1169 = vmatpush1.bf16.msra.mxu0 0
        %1170 = vmatprep.subr.bf16.mxu0 0
        %1171 = vmatpush1.bf16.msra.mxu0 0
        %1172 = vmatprep.subr.bf16.mxu0 0
        %1173 = vmatpush1.bf16.msra.mxu0 0
        %1174 = vmatprep.subr.bf16.mxu0 0
        %1175 = vmatpush1.bf16.msra.mxu0 0
        %1176 = vmatprep.subr.bf16.mxu0 0
        %1177 = vmatpush1.bf16.msra.mxu0 0
        %1178 = vmatprep.subr.bf16.mxu0 0
        %1179 = vmatpush1.bf16.msra.mxu0 0
        %1180 = vmatprep.mubr.bf16.mxu0 0
        %1181 = vmatmul.mubr.bf16.gmra.mrb[0].mxu0 %v960
        %v1182 = vpop.f32.mrb[0].mxu0
        %v1183 = vadd.f32 %v973, %v1182
        %v1184 = vpop.f32.mrb[0].mxu0
        %v1185 = vpop.f32.mrb[0].mxu0
        %v1186 = vadd.f32 %v973, %v1185
        %v1187 = vpop.f32.mrb[0].mxu0
        %1188 = vdwg.mxu0
        %v1189 = vld [vmem:[#allocation7] sm:$0x3]
        %v1190 = vsub.f32 1.0, %v1189
        %v1191 = vmul.f32 %v1190, -1e+09
        %v1194 = vunpack.c.l.s4 1966171168
        %v1195 = vunpack.c.0.s8 %v1194
        %v1196 = vlaneseq
        %v1197 = vshrl.u32 %v1196, 7
        %v1198 = vsub.s32 %v1195, %v1197
        %v1199 = vrot.slane %v1191, %v1198
        %v1200 = vcombine.high %v1199, %v1199
        %v1202 = vunpack.c.l.s4 1966171168
        %v1203 = vunpack.c.0.s8 %v1202
        %v1204 = vlaneseq
        %v1205 = vshrl.u32 %v1204, 7
        %v1206 = vsub.s32 %v1203, %v1205
        %v1207 = vrot.slane %v1199, %v1206
        %v1209 = vunpack.c.l.s4 1966171168
        %v1210 = vunpack.c.0.s8 %v1209
        %v1211 = vlaneseq
        %v1212 = vshrl.u32 %v1211, 7
        %v1213 = vsub.s32 %v1210, %v1212
        %v1214 = vrot.slane %v1200, %v1213
        %vm1215 = vcmask 261120
        %v1217 = vsel %vm1215, %v1140, 0
        %v1220 = vsel %vm1215, %v1142, 0
        %1222 = vmatprep.subr.mxu0 0.0
        %1223 = vmatpush1.xpose.msra.mxu0 %v1220
        %1224 = vmatprep.subr.mxu0 0.0
        %1225 = vmatpush1.xpose.msra.mxu0 0.0
        %1226 = vmatprep.subr.mxu0 0.0
        %1227 = vmatpush1.xpose.msra.mxu0 0.0
        %1228 = vmatprep.subr.mxu0 0.0
        %1229 = vmatpush1.xpose.msra.mxu0 0.0
        %1230 = vmatprep.subr.mxu0 0.0
        %1231 = vmatpush1.xpose.msra.mxu0 0.0
        %1232 = vmatprep.subr.mxu0 0.0
        %1233 = vmatpush1.xpose.msra.mxu0 0.0
        %1234 = vmatprep.subr.mxu0 0.0
        %1235 = vmatpush1.xpose.msra.mxu0 0.0
        %1236 = vmatprep.subr.mxu0 0.0
        %1237 = vmatpush1.xpose.msra.mxu0 0.0
        %1238 = vmatprep.subr.mxu0 0.0
        %1239 = vmatpush1.xpose.msra.mxu0 0.0
        %1240 = vmatprep.subr.mxu0 0.0
        %1241 = vmatpush1.xpose.msra.mxu0 0.0
        %1242 = vmatprep.subr.mxu0 0.0
        %1243 = vmatpush1.xpose.msra.mxu0 0.0
        %1244 = vmatprep.subr.mxu0 0.0
        %1245 = vmatpush1.xpose.msra.mxu0 0.0
        %1246 = vmatprep.subr.mxu0 0.0
        %1247 = vmatpush1.xpose.msra.mxu0 0.0
        %1248 = vmatprep.subr.mxu0 0.0
        %1249 = vmatpush1.xpose.msra.mxu0 0.0
        %1250 = vmatprep.subr.mxu0 0.0
        %1251 = vmatpush1.xpose.msra.mxu0 0.0
        %1252 = vmatprep.subr.mxu0 0.0
        %1253 = vmatpush1.xpose.msra.mxu0 0.0
        %1254 = vmatprep.subr.mxu0 0.0
        %1255 = vmatpush1.xpose.msra.mxu0 0.0
        %1256 = vmatprep.subr.mxu0 0.0
        %1257 = vmatpush1.xpose.msra.mxu0 0.0
        %1258 = vmatprep.subr.mxu0 0.0
        %1259 = vmatpush1.xpose.msra.mxu0 0.0
        %1260 = vmatprep.subr.mxu0 0.0
        %1261 = vmatpush1.xpose.msra.mxu0 0.0
        %1262 = vmatprep.subr.mxu0 0.0
        %1263 = vmatpush1.xpose.msra.mxu0 0.0
        %1264 = vmatprep.subr.mxu0 0.0
        %1265 = vmatpush1.xpose.msra.mxu0 0.0
        %1266 = vmatprep.subr.mxu0 0.0
        %1267 = vmatpush1.xpose.msra.mxu0 0.0
        %1268 = vmatprep.subr.mxu0 0.0
        %1269 = vmatpush1.xpose.msra.mxu0 0.0
        %1270 = vmatprep.subr.mxu0 0.0
        %1271 = vmatpush1.xpose.msra.mxu0 0.0
        %1272 = vmatprep.subr.mxu0 0.0
        %1273 = vmatpush1.xpose.msra.mxu0 0.0
        %1274 = vmatprep.subr.mxu0 0.0
        %1275 = vmatpush1.xpose.msra.mxu0 0.0
        %1276 = vmatprep.subr.mxu0 0.0
        %1277 = vmatpush1.xpose.msra.mxu0 0.0
        %1278 = vmatprep.subr.mxu0 0.0
        %1279 = vmatpush1.xpose.msra.mxu0 0.0
        %1280 = vmatprep.subr.mxu0 0.0
        %1281 = vmatpush1.xpose.msra.mxu0 0.0
        %1282 = vmatprep.subr.mxu0 0.0
        %1283 = vmatpush1.xpose.msra.mxu0 0.0
        %1284 = vmatprep.subr.mxu0 0.0
        %1285 = vmatpush1.xpose.msra.mxu0 0.0
        %1286 = vmatprep.mubr.f32.mxu0 0.0
        %1287 = vmatmul.mubr.f32.gmra.mrb[0].mxu0 %v1217
        %v1288 = vpop.f32.mrb[0].mxu0
        %v1289 = vadd.f32 0.0, %v1288
        %v1290 = vpop.f32.mrb[0].mxu0
        %1291 = vdwg.mxu0
        %v1293 = vsel %vm1215, %v1144, 0
        %v1296 = vsel %vm1215, %v1146, 0
        %1298 = vmatprep.subr.mxu0 0.0
        %1299 = vmatpush1.xpose.msra.mxu0 %v1296
        %1300 = vmatprep.subr.mxu0 0.0
        %1301 = vmatpush1.xpose.msra.mxu0 0.0
        %1302 = vmatprep.subr.mxu0 0.0
        %1303 = vmatpush1.xpose.msra.mxu0 0.0
        %1304 = vmatprep.subr.mxu0 0.0
        %1305 = vmatpush1.xpose.msra.mxu0 0.0
        %1306 = vmatprep.subr.mxu0 0.0
        %1307 = vmatpush1.xpose.msra.mxu0 0.0
        %1308 = vmatprep.subr.mxu0 0.0
        %1309 = vmatpush1.xpose.msra.mxu0 0.0
        %1310 = vmatprep.subr.mxu0 0.0
        %1311 = vmatpush1.xpose.msra.mxu0 0.0
        %1312 = vmatprep.subr.mxu0 0.0
        %1313 = vmatpush1.xpose.msra.mxu0 0.0
        %1314 = vmatprep.subr.mxu0 0.0
        %1315 = vmatpush1.xpose.msra.mxu0 0.0
        %1316 = vmatprep.subr.mxu0 0.0
        %1317 = vmatpush1.xpose.msra.mxu0 0.0
        %1318 = vmatprep.subr.mxu0 0.0
        %1319 = vmatpush1.xpose.msra.mxu0 0.0
        %1320 = vmatprep.subr.mxu0 0.0
        %1321 = vmatpush1.xpose.msra.mxu0 0.0
        %1322 = vmatprep.subr.mxu0 0.0
        %1323 = vmatpush1.xpose.msra.mxu0 0.0
        %1324 = vmatprep.subr.mxu0 0.0
        %1325 = vmatpush1.xpose.msra.mxu0 0.0
        %1326 = vmatprep.subr.mxu0 0.0
        %1327 = vmatpush1.xpose.msra.mxu0 0.0
        %1328 = vmatprep.subr.mxu0 0.0
        %1329 = vmatpush1.xpose.msra.mxu0 0.0
        %1330 = vmatprep.subr.mxu0 0.0
        %1331 = vmatpush1.xpose.msra.mxu0 0.0
        %1332 = vmatprep.subr.mxu0 0.0
        %1333 = vmatpush1.xpose.msra.mxu0 0.0
        %1334 = vmatprep.subr.mxu0 0.0
        %1335 = vmatpush1.xpose.msra.mxu0 0.0
        %1336 = vmatprep.subr.mxu0 0.0
        %1337 = vmatpush1.xpose.msra.mxu0 0.0
        %1338 = vmatprep.subr.mxu0 0.0
        %1339 = vmatpush1.xpose.msra.mxu0 0.0
        %1340 = vmatprep.subr.mxu0 0.0
        %1341 = vmatpush1.xpose.msra.mxu0 0.0
        %1342 = vmatprep.subr.mxu0 0.0
        %1343 = vmatpush1.xpose.msra.mxu0 0.0
        %1344 = vmatprep.subr.mxu0 0.0
        %1345 = vmatpush1.xpose.msra.mxu0 0.0
        %1346 = vmatprep.subr.mxu0 0.0
        %1347 = vmatpush1.xpose.msra.mxu0 0.0
        %1348 = vmatprep.subr.mxu0 0.0
        %1349 = vmatpush1.xpose.msra.mxu0 0.0
        %1350 = vmatprep.subr.mxu0 0.0
        %1351 = vmatpush1.xpose.msra.mxu0 0.0
        %1352 = vmatprep.subr.mxu0 0.0
        %1353 = vmatpush1.xpose.msra.mxu0 0.0
        %1354 = vmatprep.subr.mxu0 0.0
        %1355 = vmatpush1.xpose.msra.mxu0 0.0
        %1356 = vmatprep.subr.mxu0 0.0
        %1357 = vmatpush1.xpose.msra.mxu0 0.0
        %1358 = vmatprep.subr.mxu0 0.0
        %1359 = vmatpush1.xpose.msra.mxu0 0.0
        %1360 = vmatprep.subr.mxu0 0.0
        %1361 = vmatpush1.xpose.msra.mxu0 0.0
        %1362 = vmatprep.mubr.f32.mxu0 0.0
        %1363 = vmatmul.mubr.f32.gmra.mrb[0].mxu0 %v1293
        %v1364 = vpop.f32.mrb[0].mxu0
        %v1365 = vadd.f32 0.0, %v1364
        %v1366 = vpop.f32.mrb[0].mxu0
        %1367 = vdwg.mxu0
        %v1368 = vmul.f32 %v1289, 0.17677669
        %v1369 = vmul.f32 %v1365, 0.17677669
        %v1370 = vlaneseq
        %v1371 = vshrl.u32 %v1370, 7
        %v1372 = vsub.s32 0, %v1371
        %v1373 = vrot.slane %v1207, %v1372
        %v1374 = vlaneseq
        %v1375 = vshrl.u32 %v1374, 7
        %v1376 = vsub.s32 0, %v1375
        %v1377 = vrot.slane %v1214, %v1376
        %v1380 = vadd.f32 %v1368, %v1373
        %v1381 = vadd.f32 %v1369, %v1377
        %vm1382 = vcmask 64512
        %v1383 = vsel %vm1382, %v1380, -inf
        %1384 = vmax.xlane.f32.xlu0 %v1383
        %v1385 = vpop.xlane.xlu0 %1384
        %v1386 = vsel %vm1382, %v1381, -inf
        %1387 = vmax.xlane.f32.xlu0 %v1386
        %v1388 = vpop.xlane.xlu0 %1387
        %v1389 = vsub.f32 %v1380, %v1385
        %v1390 = vsub.f32 %v1381, %v1388
        %v1391 = vmul.f32 %v1389, 1.442695
        %v1392 = vpow.pop %v1391
        %v1393 = vmul.f32 %v1390, 1.442695
        %v1394 = vpow.pop %v1393
        %v1395 = vsel %vm1382, %v1392, 0.0
        %1396 = vadd.xlane.f32.xlu0 %v1395
        %v1397 = vpop.xlane.xlu0 %1396
        %v1398 = vsel %vm1382, %v1394, 0.0
        %1399 = vadd.xlane.f32.xlu0 %v1398
        %v1400 = vpop.xlane.xlu0 %1399
        %v1401 = vrcp.pop %v1397
        %v1402 = vrcp.pop %v1400
        %v1403 = vmul.f32 %v1392, %v1401
        %v1404 = vmul.f32 %v1394, %v1402
        %v1406 = vsel %vm1382, %v1403, 0
        %1408 = vmatprep.subr.mxu0 0.0
        %1409 = vmatpush1.msra.mxu0 %v1183
        %1410 = vmatprep.subr.mxu0 0.0
        %1411 = vmatpush1.msra.mxu0 0.0
        %1412 = vmatprep.subr.mxu0 0.0
        %1413 = vmatpush1.msra.mxu0 0.0
        %1414 = vmatprep.subr.mxu0 0.0
        %1415 = vmatpush1.msra.mxu0 0.0
        %1416 = vmatprep.subr.mxu0 0.0
        %1417 = vmatpush1.msra.mxu0 0.0
        %1418 = vmatprep.subr.mxu0 0.0
        %1419 = vmatpush1.msra.mxu0 0.0
        %1420 = vmatprep.subr.mxu0 0.0
        %1421 = vmatpush1.msra.mxu0 0.0
        %1422 = vmatprep.subr.mxu0 0.0
        %1423 = vmatpush1.msra.mxu0 0.0
        %1424 = vmatprep.subr.mxu0 0.0
        %1425 = vmatpush1.msra.mxu0 0.0
        %1426 = vmatprep.subr.mxu0 0.0
        %1427 = vmatpush1.msra.mxu0 0.0
        %1428 = vmatprep.subr.mxu0 0.0
        %1429 = vmatpush1.msra.mxu0 0.0
        %1430 = vmatprep.subr.mxu0 0.0
        %1431 = vmatpush1.msra.mxu0 0.0
        %1432 = vmatprep.subr.mxu0 0.0
        %1433 = vmatpush1.msra.mxu0 0.0
        %1434 = vmatprep.subr.mxu0 0.0
        %1435 = vmatpush1.msra.mxu0 0.0
        %1436 = vmatprep.subr.mxu0 0.0
        %1437 = vmatpush1.msra.mxu0 0.0
        %1438 = vmatprep.subr.mxu0 0.0
        %1439 = vmatpush1.msra.mxu0 0.0
        %1440 = vmatprep.subr.mxu0 0.0
        %1441 = vmatpush1.msra.mxu0 0.0
        %1442 = vmatprep.subr.mxu0 0.0
        %1443 = vmatpush1.msra.mxu0 0.0
        %1444 = vmatprep.subr.mxu0 0.0
        %1445 = vmatpush1.msra.mxu0 0.0
        %1446 = vmatprep.subr.mxu0 0.0
        %1447 = vmatpush1.msra.mxu0 0.0
        %1448 = vmatprep.subr.mxu0 0.0
        %1449 = vmatpush1.msra.mxu0 0.0
        %1450 = vmatprep.subr.mxu0 0.0
        %1451 = vmatpush1.msra.mxu0 0.0
        %1452 = vmatprep.subr.mxu0 0.0
        %1453 = vmatpush1.msra.mxu0 0.0
        %1454 = vmatprep.subr.mxu0 0.0
        %1455 = vmatpush1.msra.mxu0 0.0
        %1456 = vmatprep.subr.mxu0 0.0
        %1457 = vmatpush1.msra.mxu0 0.0
        %1458 = vmatprep.subr.mxu0 0.0
        %1459 = vmatpush1.msra.mxu0 0.0
        %1460 = vmatprep.subr.mxu0 0.0
        %1461 = vmatpush1.msra.mxu0 0.0
        %1462 = vmatprep.subr.mxu0 0.0
        %1463 = vmatpush1.msra.mxu0 0.0
        %1464 = vmatprep.subr.mxu0 0.0
        %1465 = vmatpush1.msra.mxu0 0.0
        %1466 = vmatprep.subr.mxu0 0.0
        %1467 = vmatpush1.msra.mxu0 0.0
        %1468 = vmatprep.subr.mxu0 0.0
        %1469 = vmatpush1.msra.mxu0 0.0
        %1470 = vmatprep.subr.mxu0 0.0
        %1471 = vmatpush1.msra.mxu0 0.0
        %1472 = vmatprep.mubr.f32.mxu0 0.0
        %1473 = vmatmul.mubr.f32.gmra.mrb[0].mxu0 %v1406
        %v1474 = vpop.f32.mrb[0].mxu0
        %v1475 = vadd.f32 0.0, %v1474
        %v1476 = vpop.f32.mrb[0].mxu0
        %1477 = vdwg.mxu0
        %v1479 = vsel %vm1382, %v1404, 0
        %1481 = vmatprep.subr.mxu0 0.0
        %1482 = vmatpush1.msra.mxu0 %v1186
        %1483 = vmatprep.subr.mxu0 0.0
        %1484 = vmatpush1.msra.mxu0 0.0
        %1485 = vmatprep.subr.mxu0 0.0
        %1486 = vmatpush1.msra.mxu0 0.0
        %1487 = vmatprep.subr.mxu0 0.0
        %1488 = vmatpush1.msra.mxu0 0.0
        %1489 = vmatprep.subr.mxu0 0.0
        %1490 = vmatpush1.msra.mxu0 0.0
        %1491 = vmatprep.subr.mxu0 0.0
        %1492 = vmatpush1.msra.mxu0 0.0
        %1493 = vmatprep.subr.mxu0 0.0
        %1494 = vmatpush1.msra.mxu0 0.0
        %1495 = vmatprep.subr.mxu0 0.0
        %1496 = vmatpush1.msra.mxu0 0.0
        %1497 = vmatprep.subr.mxu0 0.0
        %1498 = vmatpush1.msra.mxu0 0.0
        %1499 = vmatprep.subr.mxu0 0.0
        %1500 = vmatpush1.msra.mxu0 0.0
        %1501 = vmatprep.subr.mxu0 0.0
        %1502 = vmatpush1.msra.mxu0 0.0
        %1503 = vmatprep.subr.mxu0 0.0
        %1504 = vmatpush1.msra.mxu0 0.0
        %1505 = vmatprep.subr.mxu0 0.0
        %1506 = vmatpush1.msra.mxu0 0.0
        %1507 = vmatprep.subr.mxu0 0.0
        %1508 = vmatpush1.msra.mxu0 0.0
        %1509 = vmatprep.subr.mxu0 0.0
        %1510 = vmatpush1.msra.mxu0 0.0
        %1511 = vmatprep.subr.mxu0 0.0
        %1512 = vmatpush1.msra.mxu0 0.0
        %1513 = vmatprep.subr.mxu0 0.0
        %1514 = vmatpush1.msra.mxu0 0.0
        %1515 = vmatprep.subr.mxu0 0.0
        %1516 = vmatpush1.msra.mxu0 0.0
        %1517 = vmatprep.subr.mxu0 0.0
        %1518 = vmatpush1.msra.mxu0 0.0
        %1519 = vmatprep.subr.mxu0 0.0
        %1520 = vmatpush1.msra.mxu0 0.0
        %1521 = vmatprep.subr.mxu0 0.0
        %1522 = vmatpush1.msra.mxu0 0.0
        %1523 = vmatprep.subr.mxu0 0.0
        %1524 = vmatpush1.msra.mxu0 0.0
        %1525 = vmatprep.subr.mxu0 0.0
        %1526 = vmatpush1.msra.mxu0 0.0
        %1527 = vmatprep.subr.mxu0 0.0
        %1528 = vmatpush1.msra.mxu0 0.0
        %1529 = vmatprep.subr.mxu0 0.0
        %1530 = vmatpush1.msra.mxu0 0.0
        %1531 = vmatprep.subr.mxu0 0.0
        %1532 = vmatpush1.msra.mxu0 0.0
        %1533 = vmatprep.subr.mxu0 0.0
        %1534 = vmatpush1.msra.mxu0 0.0
        %1535 = vmatprep.subr.mxu0 0.0
        %1536 = vmatpush1.msra.mxu0 0.0
        %1537 = vmatprep.subr.mxu0 0.0
        %1538 = vmatpush1.msra.mxu0 0.0
        %1539 = vmatprep.subr.mxu0 0.0
        %1540 = vmatpush1.msra.mxu0 0.0
        %1541 = vmatprep.subr.mxu0 0.0
        %1542 = vmatpush1.msra.mxu0 0.0
        %1543 = vmatprep.subr.mxu0 0.0
        %1544 = vmatpush1.msra.mxu0 0.0
        %1545 = vmatprep.mubr.f32.mxu0 0.0
        %1546 = vmatmul.mubr.f32.gmra.mrb[0].mxu0 %v1479
        %v1547 = vpop.f32.mrb[0].mxu0
        %v1548 = vadd.f32 0.0, %v1547
        %v1549 = vpop.f32.mrb[0].mxu0
        %1550 = vdwg.mxu0
        %1551 = vst.msk [vmem:[#allocation3] sm:$0xff] %vm1215, %v1475
        %1552 = vst.msk [vmem:[#allocation3 + $0x8] sm:$0xff] %vm1215, %v1548
        %1553 = vrot.lane.b32.xlu0 %v1140, 96
        %v1554 = vpop.permute.xlu0 %1553
        %1555 = vrot.lane.b32.xlu0 %v1142, 96
        %v1556 = vpop.permute.xlu0 %1555
        %v1557 = vsel %vm1215, %v1554, 0
        %v1559 = vsel %vm1215, %v1556, 0
        %1561 = vmatprep.subr.mxu0 0.0
        %1562 = vmatpush1.xpose.msra.mxu0 %v1559
        %1563 = vmatprep.subr.mxu0 0.0
        %1564 = vmatpush1.xpose.msra.mxu0 0.0
        %1565 = vmatprep.subr.mxu0 0.0
        %1566 = vmatpush1.xpose.msra.mxu0 0.0
        %1567 = vmatprep.subr.mxu0 0.0
        %1568 = vmatpush1.xpose.msra.mxu0 0.0
        %1569 = vmatprep.subr.mxu0 0.0
        %1570 = vmatpush1.xpose.msra.mxu0 0.0
        %1571 = vmatprep.subr.mxu0 0.0
        %1572 = vmatpush1.xpose.msra.mxu0 0.0
        %1573 = vmatprep.subr.mxu0 0.0
        %1574 = vmatpush1.xpose.msra.mxu0 0.0
        %1575 = vmatprep.subr.mxu0 0.0
        %1576 = vmatpush1.xpose.msra.mxu0 0.0
        %1577 = vmatprep.subr.mxu0 0.0
        %1578 = vmatpush1.xpose.msra.mxu0 0.0
        %1579 = vmatprep.subr.mxu0 0.0
        %1580 = vmatpush1.xpose.msra.mxu0 0.0
        %1581 = vmatprep.subr.mxu0 0.0
        %1582 = vmatpush1.xpose.msra.mxu0 0.0
        %1583 = vmatprep.subr.mxu0 0.0
        %1584 = vmatpush1.xpose.msra.mxu0 0.0
        %1585 = vmatprep.subr.mxu0 0.0
        %1586 = vmatpush1.xpose.msra.mxu0 0.0
        %1587 = vmatprep.subr.mxu0 0.0
        %1588 = vmatpush1.xpose.msra.mxu0 0.0
        %1589 = vmatprep.subr.mxu0 0.0
        %1590 = vmatpush1.xpose.msra.mxu0 0.0
        %1591 = vmatprep.subr.mxu0 0.0
        %1592 = vmatpush1.xpose.msra.mxu0 0.0
        %1593 = vmatprep.subr.mxu0 0.0
        %1594 = vmatpush1.xpose.msra.mxu0 0.0
        %1595 = vmatprep.subr.mxu0 0.0
        %1596 = vmatpush1.xpose.msra.mxu0 0.0
        %1597 = vmatprep.subr.mxu0 0.0
        %1598 = vmatpush1.xpose.msra.mxu0 0.0
        %1599 = vmatprep.subr.mxu0 0.0
        %1600 = vmatpush1.xpose.msra.mxu0 0.0
        %1601 = vmatprep.subr.mxu0 0.0
        %1602 = vmatpush1.xpose.msra.mxu0 0.0
        %1603 = vmatprep.subr.mxu0 0.0
        %1604 = vmatpush1.xpose.msra.mxu0 0.0
        %1605 = vmatprep.subr.mxu0 0.0
        %1606 = vmatpush1.xpose.msra.mxu0 0.0
        %1607 = vmatprep.subr.mxu0 0.0
        %1608 = vmatpush1.xpose.msra.mxu0 0.0
        %1609 = vmatprep.subr.mxu0 0.0
        %1610 = vmatpush1.xpose.msra.mxu0 0.0
        %1611 = vmatprep.subr.mxu0 0.0
        %1612 = vmatpush1.xpose.msra.mxu0 0.0
        %1613 = vmatprep.subr.mxu0 0.0
        %1614 = vmatpush1.xpose.msra.mxu0 0.0
        %1615 = vmatprep.subr.mxu0 0.0
        %1616 = vmatpush1.xpose.msra.mxu0 0.0
        %1617 = vmatprep.subr.mxu0 0.0
        %1618 = vmatpush1.xpose.msra.mxu0 0.0
        %1619 = vmatprep.subr.mxu0 0.0
        %1620 = vmatpush1.xpose.msra.mxu0 0.0
        %1621 = vmatprep.subr.mxu0 0.0
        %1622 = vmatpush1.xpose.msra.mxu0 0.0
        %1623 = vmatprep.subr.mxu0 0.0
        %1624 = vmatpush1.xpose.msra.mxu0 0.0
        %1625 = vmatprep.mubr.f32.mxu0 0.0
        %1626 = vmatmul.mubr.f32.gmra.mrb[0].mxu0 %v1557
        %v1627 = vpop.f32.mrb[0].mxu0
        %v1628 = vadd.f32 0.0, %v1627
        %v1629 = vpop.f32.mrb[0].mxu0
        %1630 = vdwg.mxu0
        %1631 = vrot.lane.b32.xlu0 %v1144, 96
        %v1632 = vpop.permute.xlu0 %1631
        %1633 = vrot.lane.b32.xlu0 %v1146, 96
        %v1634 = vpop.permute.xlu0 %1633
        %v1635 = vsel %vm1215, %v1632, 0
        %v1637 = vsel %vm1215, %v1634, 0
        %1639 = vmatprep.subr.mxu0 0.0
        %1640 = vmatpush1.xpose.msra.mxu0 %v1637
        %1641 = vmatprep.subr.mxu0 0.0
        %1642 = vmatpush1.xpose.msra.mxu0 0.0
        %1643 = vmatprep.subr.mxu0 0.0
        %1644 = vmatpush1.xpose.msra.mxu0 0.0
        %1645 = vmatprep.subr.mxu0 0.0
        %1646 = vmatpush1.xpose.msra.mxu0 0.0
        %1647 = vmatprep.subr.mxu0 0.0
        %1648 = vmatpush1.xpose.msra.mxu0 0.0
        %1649 = vmatprep.subr.mxu0 0.0
        %1650 = vmatpush1.xpose.msra.mxu0 0.0
        %1651 = vmatprep.subr.mxu0 0.0
        %1652 = vmatpush1.xpose.msra.mxu0 0.0
        %1653 = vmatprep.subr.mxu0 0.0
        %1654 = vmatpush1.xpose.msra.mxu0 0.0
        %1655 = vmatprep.subr.mxu0 0.0
        %1656 = vmatpush1.xpose.msra.mxu0 0.0
        %1657 = vmatprep.subr.mxu0 0.0
        %1658 = vmatpush1.xpose.msra.mxu0 0.0
        %1659 = vmatprep.subr.mxu0 0.0
        %1660 = vmatpush1.xpose.msra.mxu0 0.0
        %1661 = vmatprep.subr.mxu0 0.0
        %1662 = vmatpush1.xpose.msra.mxu0 0.0
        %1663 = vmatprep.subr.mxu0 0.0
        %1664 = vmatpush1.xpose.msra.mxu0 0.0
        %1665 = vmatprep.subr.mxu0 0.0
        %1666 = vmatpush1.xpose.msra.mxu0 0.0
        %1667 = vmatprep.subr.mxu0 0.0
        %1668 = vmatpush1.xpose.msra.mxu0 0.0
        %1669 = vmatprep.subr.mxu0 0.0
        %1670 = vmatpush1.xpose.msra.mxu0 0.0
        %1671 = vmatprep.subr.mxu0 0.0
        %1672 = vmatpush1.xpose.msra.mxu0 0.0
        %1673 = vmatprep.subr.mxu0 0.0
        %1674 = vmatpush1.xpose.msra.mxu0 0.0
        %1675 = vmatprep.subr.mxu0 0.0
        %1676 = vmatpush1.xpose.msra.mxu0 0.0
        %1677 = vmatprep.subr.mxu0 0.0
        %1678 = vmatpush1.xpose.msra.mxu0 0.0
        %1679 = vmatprep.subr.mxu0 0.0
        %1680 = vmatpush1.xpose.msra.mxu0 0.0
        %1681 = vmatprep.subr.mxu0 0.0
        %1682 = vmatpush1.xpose.msra.mxu0 0.0
        %1683 = vmatprep.subr.mxu0 0.0
        %1684 = vmatpush1.xpose.msra.mxu0 0.0
        %1685 = vmatprep.subr.mxu0 0.0
        %1686 = vmatpush1.xpose.msra.mxu0 0.0
        %1687 = vmatprep.subr.mxu0 0.0
        %1688 = vmatpush1.xpose.msra.mxu0 0.0
        %1689 = vmatprep.subr.mxu0 0.0
        %1690 = vmatpush1.xpose.msra.mxu0 0.0
        %1691 = vmatprep.subr.mxu0 0.0
        %1692 = vmatpush1.xpose.msra.mxu0 0.0
        %1693 = vmatprep.subr.mxu0 0.0
        %1694 = vmatpush1.xpose.msra.mxu0 0.0
        %1695 = vmatprep.subr.mxu0 0.0
        %1696 = vmatpush1.xpose.msra.mxu0 0.0
        %1697 = vmatprep.subr.mxu0 0.0
        %1698 = vmatpush1.xpose.msra.mxu0 0.0
        %1699 = vmatprep.subr.mxu0 0.0
        %1700 = vmatpush1.xpose.msra.mxu0 0.0
        %1701 = vmatprep.subr.mxu0 0.0
        %1702 = vmatpush1.xpose.msra.mxu0 0.0
        %1703 = vmatprep.mubr.f32.mxu0 0.0
        %1704 = vmatmul.mubr.f32.gmra.mrb[0].mxu0 %v1635
        %v1705 = vpop.f32.mrb[0].mxu0
        %v1706 = vadd.f32 0.0, %v1705
        %v1707 = vpop.f32.mrb[0].mxu0
        %1708 = vdwg.mxu0
        %v1709 = vmul.f32 %v1628, 0.17677669
        %v1710 = vmul.f32 %v1706, 0.17677669
        %v1711 = vadd.f32 %v1709, %v1373
        %v1712 = vadd.f32 %v1710, %v1377
        %v1713 = vsel %vm1382, %v1711, -inf
        %1714 = vmax.xlane.f32.xlu0 %v1713
        %v1715 = vpop.xlane.xlu0 %1714
        %v1716 = vsel %vm1382, %v1712, -inf
        %1717 = vmax.xlane.f32.xlu0 %v1716
        %v1718 = vpop.xlane.xlu0 %1717
        %v1719 = vsub.f32 %v1711, %v1715
        %v1720 = vsub.f32 %v1712, %v1718
        %v1721 = vmul.f32 %v1719, 1.442695
        %v1722 = vpow.pop %v1721
        %v1723 = vmul.f32 %v1720, 1.442695
        %v1724 = vpow.pop %v1723
        %v1725 = vsel %vm1382, %v1722, 0.0
        %1726 = vadd.xlane.f32.xlu0 %v1725
        %v1727 = vpop.xlane.xlu0 %1726
        %v1728 = vsel %vm1382, %v1724, 0.0
        %1729 = vadd.xlane.f32.xlu0 %v1728
        %v1730 = vpop.xlane.xlu0 %1729
        %v1731 = vrcp.pop %v1727
        %v1732 = vrcp.pop %v1730
        %v1733 = vmul.f32 %v1722, %v1731
        %v1734 = vmul.f32 %v1724, %v1732
        %1736 = vrot.lane.b32.xlu0 %v1183, 96
        %v1737 = vpop.permute.xlu0 %1736
        %v1740 = vsel %vm1382, %v1733, 0
        %1742 = vmatprep.subr.mxu0 0.0
        %1743 = vmatpush1.msra.mxu0 %v1737
        %1744 = vmatprep.subr.mxu0 0.0
        %1745 = vmatpush1.msra.mxu0 0.0
        %1746 = vmatprep.subr.mxu0 0.0
        %1747 = vmatpush1.msra.mxu0 0.0
        %1748 = vmatprep.subr.mxu0 0.0
        %1749 = vmatpush1.msra.mxu0 0.0
        %1750 = vmatprep.subr.mxu0 0.0
        %1751 = vmatpush1.msra.mxu0 0.0
        %1752 = vmatprep.subr.mxu0 0.0
        %1753 = vmatpush1.msra.mxu0 0.0
        %1754 = vmatprep.subr.mxu0 0.0
        %1755 = vmatpush1.msra.mxu0 0.0
        %1756 = vmatprep.subr.mxu0 0.0
        %1757 = vmatpush1.msra.mxu0 0.0
        %1758 = vmatprep.subr.mxu0 0.0
        %1759 = vmatpush1.msra.mxu0 0.0
        %1760 = vmatprep.subr.mxu0 0.0
        %1761 = vmatpush1.msra.mxu0 0.0
        %1762 = vmatprep.subr.mxu0 0.0
        %1763 = vmatpush1.msra.mxu0 0.0
        %1764 = vmatprep.subr.mxu0 0.0
        %1765 = vmatpush1.msra.mxu0 0.0
        %1766 = vmatprep.subr.mxu0 0.0
        %1767 = vmatpush1.msra.mxu0 0.0
        %1768 = vmatprep.subr.mxu0 0.0
        %1769 = vmatpush1.msra.mxu0 0.0
        %1770 = vmatprep.subr.mxu0 0.0
        %1771 = vmatpush1.msra.mxu0 0.0
        %1772 = vmatprep.subr.mxu0 0.0
        %1773 = vmatpush1.msra.mxu0 0.0
        %1774 = vmatprep.subr.mxu0 0.0
        %1775 = vmatpush1.msra.mxu0 0.0
        %1776 = vmatprep.subr.mxu0 0.0
        %1777 = vmatpush1.msra.mxu0 0.0
        %1778 = vmatprep.subr.mxu0 0.0
        %1779 = vmatpush1.msra.mxu0 0.0
        %1780 = vmatprep.subr.mxu0 0.0
        %1781 = vmatpush1.msra.mxu0 0.0
        %1782 = vmatprep.subr.mxu0 0.0
        %1783 = vmatpush1.msra.mxu0 0.0
        %1784 = vmatprep.subr.mxu0 0.0
        %1785 = vmatpush1.msra.mxu0 0.0
        %1786 = vmatprep.subr.mxu0 0.0
        %1787 = vmatpush1.msra.mxu0 0.0
        %1788 = vmatprep.subr.mxu0 0.0
        %1789 = vmatpush1.msra.mxu0 0.0
        %1790 = vmatprep.subr.mxu0 0.0
        %1791 = vmatpush1.msra.mxu0 0.0
        %1792 = vmatprep.subr.mxu0 0.0
        %1793 = vmatpush1.msra.mxu0 0.0
        %1794 = vmatprep.subr.mxu0 0.0
        %1795 = vmatpush1.msra.mxu0 0.0
        %1796 = vmatprep.subr.mxu0 0.0
        %1797 = vmatpush1.msra.mxu0 0.0
        %1798 = vmatprep.subr.mxu0 0.0
        %1799 = vmatpush1.msra.mxu0 0.0
        %1800 = vmatprep.subr.mxu0 0.0
        %1801 = vmatpush1.msra.mxu0 0.0
        %1802 = vmatprep.subr.mxu0 0.0
        %1803 = vmatpush1.msra.mxu0 0.0
        %1804 = vmatprep.subr.mxu0 0.0
        %1805 = vmatpush1.msra.mxu0 0.0
        %1806 = vmatprep.mubr.f32.mxu0 0.0
        %1807 = vmatmul.mubr.f32.gmra.mrb[0].mxu0 %v1740
        %v1808 = vpop.f32.mrb[0].mxu0
        %v1809 = vadd.f32 0.0, %v1808
        %v1810 = vpop.f32.mrb[0].mxu0
        %1811 = vdwg.mxu0
        %1813 = vrot.lane.b32.xlu0 %v1186, 96
        %v1814 = vpop.permute.xlu0 %1813
        %v1817 = vsel %vm1382, %v1734, 0
        %1819 = vmatprep.subr.mxu0 0.0
        %1820 = vmatpush1.msra.mxu0 %v1814
        %1821 = vmatprep.subr.mxu0 0.0
        %1822 = vmatpush1.msra.mxu0 0.0
        %1823 = vmatprep.subr.mxu0 0.0
        %1824 = vmatpush1.msra.mxu0 0.0
        %1825 = vmatprep.subr.mxu0 0.0
        %1826 = vmatpush1.msra.mxu0 0.0
        %1827 = vmatprep.subr.mxu0 0.0
        %1828 = vmatpush1.msra.mxu0 0.0
        %1829 = vmatprep.subr.mxu0 0.0
        %1830 = vmatpush1.msra.mxu0 0.0
        %1831 = vmatprep.subr.mxu0 0.0
        %1832 = vmatpush1.msra.mxu0 0.0
        %1833 = vmatprep.subr.mxu0 0.0
        %1834 = vmatpush1.msra.mxu0 0.0
        %1835 = vmatprep.subr.mxu0 0.0
        %1836 = vmatpush1.msra.mxu0 0.0
        %1837 = vmatprep.subr.mxu0 0.0
        %1838 = vmatpush1.msra.mxu0 0.0
        %1839 = vmatprep.subr.mxu0 0.0
        %1840 = vmatpush1.msra.mxu0 0.0
        %1841 = vmatprep.subr.mxu0 0.0
        %1842 = vmatpush1.msra.mxu0 0.0
        %1843 = vmatprep.subr.mxu0 0.0
        %1844 = vmatpush1.msra.mxu0 0.0
        %1845 = vmatprep.subr.mxu0 0.0
        %1846 = vmatpush1.msra.mxu0 0.0
        %1847 = vmatprep.subr.mxu0 0.0
        %1848 = vmatpush1.msra.mxu0 0.0
        %1849 = vmatprep.subr.mxu0 0.0
        %1850 = vmatpush1.msra.mxu0 0.0
        %1851 = vmatprep.subr.mxu0 0.0
        %1852 = vmatpush1.msra.mxu0 0.0
        %1853 = vmatprep.subr.mxu0 0.0
        %1854 = vmatpush1.msra.mxu0 0.0
        %1855 = vmatprep.subr.mxu0 0.0
        %1856 = vmatpush1.msra.mxu0 0.0
        %1857 = vmatprep.subr.mxu0 0.0
        %1858 = vmatpush1.msra.mxu0 0.0
        %1859 = vmatprep.subr.mxu0 0.0
        %1860 = vmatpush1.msra.mxu0 0.0
        %1861 = vmatprep.subr.mxu0 0.0
        %1862 = vmatpush1.msra.mxu0 0.0
        %1863 = vmatprep.subr.mxu0 0.0
        %1864 = vmatpush1.msra.mxu0 0.0
        %1865 = vmatprep.subr.mxu0 0.0
        %1866 = vmatpush1.msra.mxu0 0.0
        %1867 = vmatprep.subr.mxu0 0.0
        %1868 = vmatpush1.msra.mxu0 0.0
        %1869 = vmatprep.subr.mxu0 0.0
        %1870 = vmatpush1.msra.mxu0 0.0
        %1871 = vmatprep.subr.mxu0 0.0
        %1872 = vmatpush1.msra.mxu0 0.0
        %1873 = vmatprep.subr.mxu0 0.0
        %1874 = vmatpush1.msra.mxu0 0.0
        %1875 = vmatprep.subr.mxu0 0.0
        %1876 = vmatpush1.msra.mxu0 0.0
        %1877 = vmatprep.subr.mxu0 0.0
        %1878 = vmatpush1.msra.mxu0 0.0
        %1879 = vmatprep.subr.mxu0 0.0
        %1880 = vmatpush1.msra.mxu0 0.0
        %1881 = vmatprep.subr.mxu0 0.0
        %1882 = vmatpush1.msra.mxu0 0.0
        %1883 = vmatprep.mubr.f32.mxu0 0.0
        %1884 = vmatmul.mubr.f32.gmra.mrb[0].mxu0 %v1817
        %v1885 = vpop.f32.mrb[0].mxu0
        %v1886 = vadd.f32 0.0, %v1885
        %v1887 = vpop.f32.mrb[0].mxu0
        %1888 = vdwg.mxu0
        %1891 = vrot.lane.b32.xlu0 %v1809, 32
        %v1892 = vpop.permute.xlu0 %1891
        %1893 = vrot.lane.b32.xlu0 %v1886, 32
        %v1894 = vpop.permute.xlu0 %1893
        %vm1897 = vcmask 523520
        %1898 = vst.msk [vmem:[#allocation3] sm:$0xff] %vm1897, %v1892
        %1899 = vst.msk [vmem:[#allocation3 + $0x8] sm:$0xff] %vm1897, %v1894
        %1900 = vrot.lane.b32.xlu0 %v1140, 64
        %v1901 = vpop.permute.xlu0 %1900
        %1902 = vrot.lane.b32.xlu0 %v1142, 64
        %v1903 = vpop.permute.xlu0 %1902
        %v1904 = vsel %vm1215, %v1901, 0
        %v1906 = vsel %vm1215, %v1903, 0
        %1908 = vmatprep.subr.mxu0 0.0
        %1909 = vmatpush1.xpose.msra.mxu0 %v1906
        %1910 = vmatprep.subr.mxu0 0.0
        %1911 = vmatpush1.xpose.msra.mxu0 0.0
        %1912 = vmatprep.subr.mxu0 0.0
        %1913 = vmatpush1.xpose.msra.mxu0 0.0
        %1914 = vmatprep.subr.mxu0 0.0
        %1915 = vmatpush1.xpose.msra.mxu0 0.0
        %1916 = vmatprep.subr.mxu0 0.0
        %1917 = vmatpush1.xpose.msra.mxu0 0.0
        %1918 = vmatprep.subr.mxu0 0.0
        %1919 = vmatpush1.xpose.msra.mxu0 0.0
        %1920 = vmatprep.subr.mxu0 0.0
        %1921 = vmatpush1.xpose.msra.mxu0 0.0
        %1922 = vmatprep.subr.mxu0 0.0
        %1923 = vmatpush1.xpose.msra.mxu0 0.0
        %1924 = vmatprep.subr.mxu0 0.0
        %1925 = vmatpush1.xpose.msra.mxu0 0.0
        %1926 = vmatprep.subr.mxu0 0.0
        %1927 = vmatpush1.xpose.msra.mxu0 0.0
        %1928 = vmatprep.subr.mxu0 0.0
        %1929 = vmatpush1.xpose.msra.mxu0 0.0
        %1930 = vmatprep.subr.mxu0 0.0
        %1931 = vmatpush1.xpose.msra.mxu0 0.0
        %1932 = vmatprep.subr.mxu0 0.0
        %1933 = vmatpush1.xpose.msra.mxu0 0.0
        %1934 = vmatprep.subr.mxu0 0.0
        %1935 = vmatpush1.xpose.msra.mxu0 0.0
        %1936 = vmatprep.subr.mxu0 0.0
        %1937 = vmatpush1.xpose.msra.mxu0 0.0
        %1938 = vmatprep.subr.mxu0 0.0
        %1939 = vmatpush1.xpose.msra.mxu0 0.0
        %1940 = vmatprep.subr.mxu0 0.0
        %1941 = vmatpush1.xpose.msra.mxu0 0.0
        %1942 = vmatprep.subr.mxu0 0.0
        %1943 = vmatpush1.xpose.msra.mxu0 0.0
        %1944 = vmatprep.subr.mxu0 0.0
        %1945 = vmatpush1.xpose.msra.mxu0 0.0
        %1946 = vmatprep.subr.mxu0 0.0
        %1947 = vmatpush1.xpose.msra.mxu0 0.0
        %1948 = vmatprep.subr.mxu0 0.0
        %1949 = vmatpush1.xpose.msra.mxu0 0.0
        %1950 = vmatprep.subr.mxu0 0.0
        %1951 = vmatpush1.xpose.msra.mxu0 0.0
        %1952 = vmatprep.subr.mxu0 0.0
        %1953 = vmatpush1.xpose.msra.mxu0 0.0
        %1954 = vmatprep.subr.mxu0 0.0
        %1955 = vmatpush1.xpose.msra.mxu0 0.0
        %1956 = vmatprep.subr.mxu0 0.0
        %1957 = vmatpush1.xpose.msra.mxu0 0.0
        %1958 = vmatprep.subr.mxu0 0.0
        %1959 = vmatpush1.xpose.msra.mxu0 0.0
        %1960 = vmatprep.subr.mxu0 0.0
        %1961 = vmatpush1.xpose.msra.mxu0 0.0
        %1962 = vmatprep.subr.mxu0 0.0
        %1963 = vmatpush1.xpose.msra.mxu0 0.0
        %1964 = vmatprep.subr.mxu0 0.0
        %1965 = vmatpush1.xpose.msra.mxu0 0.0
        %1966 = vmatprep.subr.mxu0 0.0
        %1967 = vmatpush1.xpose.msra.mxu0 0.0
        %1968 = vmatprep.subr.mxu0 0.0
        %1969 = vmatpush1.xpose.msra.mxu0 0.0
        %1970 = vmatprep.subr.mxu0 0.0
        %1971 = vmatpush1.xpose.msra.mxu0 0.0
        %1972 = vmatprep.mubr.f32.mxu0 0.0
        %1973 = vmatmul.mubr.f32.gmra.mrb[0].mxu0 %v1904
        %v1974 = vpop.f32.mrb[0].mxu0
        %v1975 = vadd.f32 0.0, %v1974
        %v1976 = vpop.f32.mrb[0].mxu0
        %1977 = vdwg.mxu0
        %1978 = vrot.lane.b32.xlu0 %v1144, 64
        %v1979 = vpop.permute.xlu0 %1978
        %1980 = vrot.lane.b32.xlu0 %v1146, 64
        %v1981 = vpop.permute.xlu0 %1980
        %v1982 = vsel %vm1215, %v1979, 0
        %v1984 = vsel %vm1215, %v1981, 0
        %1986 = vmatprep.subr.mxu0 0.0
        %1987 = vmatpush1.xpose.msra.mxu0 %v1984
        %1988 = vmatprep.subr.mxu0 0.0
        %1989 = vmatpush1.xpose.msra.mxu0 0.0
        %1990 = vmatprep.subr.mxu0 0.0
        %1991 = vmatpush1.xpose.msra.mxu0 0.0
        %1992 = vmatprep.subr.mxu0 0.0
        %1993 = vmatpush1.xpose.msra.mxu0 0.0
        %1994 = vmatprep.subr.mxu0 0.0
        %1995 = vmatpush1.xpose.msra.mxu0 0.0
        %1996 = vmatprep.subr.mxu0 0.0
        %1997 = vmatpush1.xpose.msra.mxu0 0.0
        %1998 = vmatprep.subr.mxu0 0.0
        %1999 = vmatpush1.xpose.msra.mxu0 0.0
        %2000 = vmatprep.subr.mxu0 0.0
        %2001 = vmatpush1.xpose.msra.mxu0 0.0
        %2002 = vmatprep.subr.mxu0 0.0
        %2003 = vmatpush1.xpose.msra.mxu0 0.0
        %2004 = vmatprep.subr.mxu0 0.0
        %2005 = vmatpush1.xpose.msra.mxu0 0.0
        %2006 = vmatprep.subr.mxu0 0.0
        %2007 = vmatpush1.xpose.msra.mxu0 0.0
        %2008 = vmatprep.subr.mxu0 0.0
        %2009 = vmatpush1.xpose.msra.mxu0 0.0
        %2010 = vmatprep.subr.mxu0 0.0
        %2011 = vmatpush1.xpose.msra.mxu0 0.0
        %2012 = vmatprep.subr.mxu0 0.0
        %2013 = vmatpush1.xpose.msra.mxu0 0.0
        %2014 = vmatprep.subr.mxu0 0.0
        %2015 = vmatpush1.xpose.msra.mxu0 0.0
        %2016 = vmatprep.subr.mxu0 0.0
        %2017 = vmatpush1.xpose.msra.mxu0 0.0
        %2018 = vmatprep.subr.mxu0 0.0
        %2019 = vmatpush1.xpose.msra.mxu0 0.0
        %2020 = vmatprep.subr.mxu0 0.0
        %2021 = vmatpush1.xpose.msra.mxu0 0.0
        %2022 = vmatprep.subr.mxu0 0.0
        %2023 = vmatpush1.xpose.msra.mxu0 0.0
        %2024 = vmatprep.subr.mxu0 0.0
        %2025 = vmatpush1.xpose.msra.mxu0 0.0
        %2026 = vmatprep.subr.mxu0 0.0
        %2027 = vmatpush1.xpose.msra.mxu0 0.0
        %2028 = vmatprep.subr.mxu0 0.0
        %2029 = vmatpush1.xpose.msra.mxu0 0.0
        %2030 = vmatprep.subr.mxu0 0.0
        %2031 = vmatpush1.xpose.msra.mxu0 0.0
        %2032 = vmatprep.subr.mxu0 0.0
        %2033 = vmatpush1.xpose.msra.mxu0 0.0
        %2034 = vmatprep.subr.mxu0 0.0
        %2035 = vmatpush1.xpose.msra.mxu0 0.0
        %2036 = vmatprep.subr.mxu0 0.0
        %2037 = vmatpush1.xpose.msra.mxu0 0.0
        %2038 = vmatprep.subr.mxu0 0.0
        %2039 = vmatpush1.xpose.msra.mxu0 0.0
        %2040 = vmatprep.subr.mxu0 0.0
        %2041 = vmatpush1.xpose.msra.mxu0 0.0
        %2042 = vmatprep.subr.mxu0 0.0
        %2043 = vmatpush1.xpose.msra.mxu0 0.0
        %2044 = vmatprep.subr.mxu0 0.0
        %2045 = vmatpush1.xpose.msra.mxu0 0.0
        %2046 = vmatprep.subr.mxu0 0.0
        %2047 = vmatpush1.xpose.msra.mxu0 0.0
        %2048 = vmatprep.subr.mxu0 0.0
        %2049 = vmatpush1.xpose.msra.mxu0 0.0
        %2050 = vmatprep.mubr.f32.mxu0 0.0
        %2051 = vmatmul.mubr.f32.gmra.mrb[0].mxu0 %v1982
        %v2052 = vpop.f32.mrb[0].mxu0
        %v2053 = vadd.f32 0.0, %v2052
        %v2054 = vpop.f32.mrb[0].mxu0
        %2055 = vdwg.mxu0
        %v2056 = vmul.f32 %v1975, 0.17677669
        %v2057 = vmul.f32 %v2053, 0.17677669
        %v2058 = vadd.f32 %v2056, %v1373
        %v2059 = vadd.f32 %v2057, %v1377
        %v2060 = vsel %vm1382, %v2058, -inf
        %2061 = vmax.xlane.f32.xlu0 %v2060
        %v2062 = vpop.xlane.xlu0 %2061
        %v2063 = vsel %vm1382, %v2059, -inf
        %2064 = vmax.xlane.f32.xlu0 %v2063
        %v2065 = vpop.xlane.xlu0 %2064
        %v2066 = vsub.f32 %v2058, %v2062
        %v2067 = vsub.f32 %v2059, %v2065
        %v2068 = vmul.f32 %v2066, 1.442695
        %v2069 = vpow.pop %v2068
        %v2070 = vmul.f32 %v2067, 1.442695
        %v2071 = vpow.pop %v2070
        %v2072 = vsel %vm1382, %v2069, 0.0
        %2073 = vadd.xlane.f32.xlu0 %v2072
        %v2074 = vpop.xlane.xlu0 %2073
        %v2075 = vsel %vm1382, %v2071, 0.0
        %2076 = vadd.xlane.f32.xlu0 %v2075
        %v2077 = vpop.xlane.xlu0 %2076
        %v2078 = vrcp.pop %v2074
        %v2079 = vrcp.pop %v2077
        %v2080 = vmul.f32 %v2069, %v2078
        %v2081 = vmul.f32 %v2071, %v2079
        %2082 = vrot.lane.b32.xlu0 %v1183, 64
        %v2083 = vpop.permute.xlu0 %2082
        %v2086 = vsel %vm1382, %v2080, 0
        %2088 = vmatprep.subr.mxu0 0.0
        %2089 = vmatpush1.msra.mxu0 %v2083
        %2090 = vmatprep.subr.mxu0 0.0
        %2091 = vmatpush1.msra.mxu0 0.0
        %2092 = vmatprep.subr.mxu0 0.0
        %2093 = vmatpush1.msra.mxu0 0.0
        %2094 = vmatprep.subr.mxu0 0.0
        %2095 = vmatpush1.msra.mxu0 0.0
        %2096 = vmatprep.subr.mxu0 0.0
        %2097 = vmatpush1.msra.mxu0 0.0
        %2098 = vmatprep.subr.mxu0 0.0
        %2099 = vmatpush1.msra.mxu0 0.0
        %2100 = vmatprep.subr.mxu0 0.0
        %2101 = vmatpush1.msra.mxu0 0.0
        %2102 = vmatprep.subr.mxu0 0.0
        %2103 = vmatpush1.msra.mxu0 0.0
        %2104 = vmatprep.subr.mxu0 0.0
        %2105 = vmatpush1.msra.mxu0 0.0
        %2106 = vmatprep.subr.mxu0 0.0
        %2107 = vmatpush1.msra.mxu0 0.0
        %2108 = vmatprep.subr.mxu0 0.0
        %2109 = vmatpush1.msra.mxu0 0.0
        %2110 = vmatprep.subr.mxu0 0.0
        %2111 = vmatpush1.msra.mxu0 0.0
        %2112 = vmatprep.subr.mxu0 0.0
        %2113 = vmatpush1.msra.mxu0 0.0
        %2114 = vmatprep.subr.mxu0 0.0
        %2115 = vmatpush1.msra.mxu0 0.0
        %2116 = vmatprep.subr.mxu0 0.0
        %2117 = vmatpush1.msra.mxu0 0.0
        %2118 = vmatprep.subr.mxu0 0.0
        %2119 = vmatpush1.msra.mxu0 0.0
        %2120 = vmatprep.subr.mxu0 0.0
        %2121 = vmatpush1.msra.mxu0 0.0
        %2122 = vmatprep.subr.mxu0 0.0
        %2123 = vmatpush1.msra.mxu0 0.0
        %2124 = vmatprep.subr.mxu0 0.0
        %2125 = vmatpush1.msra.mxu0 0.0
        %2126 = vmatprep.subr.mxu0 0.0
        %2127 = vmatpush1.msra.mxu0 0.0
        %2128 = vmatprep.subr.mxu0 0.0
        %2129 = vmatpush1.msra.mxu0 0.0
        %2130 = vmatprep.subr.mxu0 0.0
        %2131 = vmatpush1.msra.mxu0 0.0
        %2132 = vmatprep.subr.mxu0 0.0
        %2133 = vmatpush1.msra.mxu0 0.0
        %2134 = vmatprep.subr.mxu0 0.0
        %2135 = vmatpush1.msra.mxu0 0.0
        %2136 = vmatprep.subr.mxu0 0.0
        %2137 = vmatpush1.msra.mxu0 0.0
        %2138 = vmatprep.subr.mxu0 0.0
        %2139 = vmatpush1.msra.mxu0 0.0
        %2140 = vmatprep.subr.mxu0 0.0
        %2141 = vmatpush1.msra.mxu0 0.0
        %2142 = vmatprep.subr.mxu0 0.0
        %2143 = vmatpush1.msra.mxu0 0.0
        %2144 = vmatprep.subr.mxu0 0.0
        %2145 = vmatpush1.msra.mxu0 0.0
        %2146 = vmatprep.subr.mxu0 0.0
        %2147 = vmatpush1.msra.mxu0 0.0
        %2148 = vmatprep.subr.mxu0 0.0
        %2149 = vmatpush1.msra.mxu0 0.0
        %2150 = vmatprep.subr.mxu0 0.0
        %2151 = vmatpush1.msra.mxu0 0.0
        %2152 = vmatprep.mubr.f32.mxu0 0.0
        %2153 = vmatmul.mubr.f32.gmra.mrb[0].mxu0 %v2086
        %v2154 = vpop.f32.mrb[0].mxu0
        %v2155 = vadd.f32 0.0, %v2154
        %v2156 = vpop.f32.mrb[0].mxu0
        %2157 = vdwg.mxu0
        %2158 = vrot.lane.b32.xlu0 %v1186, 64
        %v2159 = vpop.permute.xlu0 %2158
        %v2162 = vsel %vm1382, %v2081, 0
        %2164 = vmatprep.subr.mxu0 0.0
        %2165 = vmatpush1.msra.mxu0 %v2159
        %2166 = vmatprep.subr.mxu0 0.0
        %2167 = vmatpush1.msra.mxu0 0.0
        %2168 = vmatprep.subr.mxu0 0.0
        %2169 = vmatpush1.msra.mxu0 0.0
        %2170 = vmatprep.subr.mxu0 0.0
        %2171 = vmatpush1.msra.mxu0 0.0
        %2172 = vmatprep.subr.mxu0 0.0
        %2173 = vmatpush1.msra.mxu0 0.0
        %2174 = vmatprep.subr.mxu0 0.0
        %2175 = vmatpush1.msra.mxu0 0.0
        %2176 = vmatprep.subr.mxu0 0.0
        %2177 = vmatpush1.msra.mxu0 0.0
        %2178 = vmatprep.subr.mxu0 0.0
        %2179 = vmatpush1.msra.mxu0 0.0
        %2180 = vmatprep.subr.mxu0 0.0
        %2181 = vmatpush1.msra.mxu0 0.0
        %2182 = vmatprep.subr.mxu0 0.0
        %2183 = vmatpush1.msra.mxu0 0.0
        %2184 = vmatprep.subr.mxu0 0.0
        %2185 = vmatpush1.msra.mxu0 0.0
        %2186 = vmatprep.subr.mxu0 0.0
        %2187 = vmatpush1.msra.mxu0 0.0
        %2188 = vmatprep.subr.mxu0 0.0
        %2189 = vmatpush1.msra.mxu0 0.0
        %2190 = vmatprep.subr.mxu0 0.0
        %2191 = vmatpush1.msra.mxu0 0.0
        %2192 = vmatprep.subr.mxu0 0.0
        %2193 = vmatpush1.msra.mxu0 0.0
        %2194 = vmatprep.subr.mxu0 0.0
        %2195 = vmatpush1.msra.mxu0 0.0
        %2196 = vmatprep.subr.mxu0 0.0
        %2197 = vmatpush1.msra.mxu0 0.0
        %2198 = vmatprep.subr.mxu0 0.0
        %2199 = vmatpush1.msra.mxu0 0.0
        %2200 = vmatprep.subr.mxu0 0.0
        %2201 = vmatpush1.msra.mxu0 0.0
        %2202 = vmatprep.subr.mxu0 0.0
        %2203 = vmatpush1.msra.mxu0 0.0
        %2204 = vmatprep.subr.mxu0 0.0
        %2205 = vmatpush1.msra.mxu0 0.0
        %2206 = vmatprep.subr.mxu0 0.0
        %2207 = vmatpush1.msra.mxu0 0.0
        %2208 = vmatprep.subr.mxu0 0.0
        %2209 = vmatpush1.msra.mxu0 0.0
        %2210 = vmatprep.subr.mxu0 0.0
        %2211 = vmatpush1.msra.mxu0 0.0
        %2212 = vmatprep.subr.mxu0 0.0
        %2213 = vmatpush1.msra.mxu0 0.0
        %2214 = vmatprep.subr.mxu0 0.0
        %2215 = vmatpush1.msra.mxu0 0.0
        %2216 = vmatprep.subr.mxu0 0.0
        %2217 = vmatpush1.msra.mxu0 0.0
        %2218 = vmatprep.subr.mxu0 0.0
        %2219 = vmatpush1.msra.mxu0 0.0
        %2220 = vmatprep.subr.mxu0 0.0
        %2221 = vmatpush1.msra.mxu0 0.0
        %2222 = vmatprep.subr.mxu0 0.0
        %2223 = vmatpush1.msra.mxu0 0.0
        %2224 = vmatprep.subr.mxu0 0.0
        %2225 = vmatpush1.msra.mxu0 0.0
        %2226 = vmatprep.subr.mxu0 0.0
        %2227 = vmatpush1.msra.mxu0 0.0
        %2228 = vmatprep.mubr.f32.mxu0 0.0
        %2229 = vmatmul.mubr.f32.gmra.mrb[0].mxu0 %v2162
        %v2230 = vpop.f32.mrb[0].mxu0
        %v2231 = vadd.f32 0.0, %v2230
        %v2232 = vpop.f32.mrb[0].mxu0
        %2233 = vdwg.mxu0
        %2236 = vrot.lane.b32.xlu0 %v2155, 64
        %v2237 = vpop.permute.xlu0 %2236
        %2238 = vrot.lane.b32.xlu0 %v2231, 64
        %v2239 = vpop.permute.xlu0 %2238
        %vm2242 = vcmask 785920
        %2243 = vst.msk [vmem:[#allocation3] sm:$0xff] %vm2242, %v2237
        %2244 = vst.msk [vmem:[#allocation3 + $0x8] sm:$0xff] %vm2242, %v2239
        %2245 = vrot.lane.b32.xlu0 %v1140, 32
        %v2246 = vpop.permute.xlu0 %2245
        %2247 = vrot.lane.b32.xlu0 %v1142, 32
        %v2248 = vpop.permute.xlu0 %2247
        %v2249 = vsel %vm1215, %v2246, 0
        %v2251 = vsel %vm1215, %v2248, 0
        %2253 = vmatprep.subr.mxu0 0.0
        %2254 = vmatpush1.xpose.msra.mxu0 %v2251
        %2255 = vmatprep.subr.mxu0 0.0
        %2256 = vmatpush1.xpose.msra.mxu0 0.0
        %2257 = vmatprep.subr.mxu0 0.0
        %2258 = vmatpush1.xpose.msra.mxu0 0.0
        %2259 = vmatprep.subr.mxu0 0.0
        %2260 = vmatpush1.xpose.msra.mxu0 0.0
        %2261 = vmatprep.subr.mxu0 0.0
        %2262 = vmatpush1.xpose.msra.mxu0 0.0
        %2263 = vmatprep.subr.mxu0 0.0
        %2264 = vmatpush1.xpose.msra.mxu0 0.0
        %2265 = vmatprep.subr.mxu0 0.0
        %2266 = vmatpush1.xpose.msra.mxu0 0.0
        %2267 = vmatprep.subr.mxu0 0.0
        %2268 = vmatpush1.xpose.msra.mxu0 0.0
        %2269 = vmatprep.subr.mxu0 0.0
        %2270 = vmatpush1.xpose.msra.mxu0 0.0
        %2271 = vmatprep.subr.mxu0 0.0
        %2272 = vmatpush1.xpose.msra.mxu0 0.0
        %2273 = vmatprep.subr.mxu0 0.0
        %2274 = vmatpush1.xpose.msra.mxu0 0.0
        %2275 = vmatprep.subr.mxu0 0.0
        %2276 = vmatpush1.xpose.msra.mxu0 0.0
        %2277 = vmatprep.subr.mxu0 0.0
        %2278 = vmatpush1.xpose.msra.mxu0 0.0
        %2279 = vmatprep.subr.mxu0 0.0
        %2280 = vmatpush1.xpose.msra.mxu0 0.0
        %2281 = vmatprep.subr.mxu0 0.0
        %2282 = vmatpush1.xpose.msra.mxu0 0.0
        %2283 = vmatprep.subr.mxu0 0.0
        %2284 = vmatpush1.xpose.msra.mxu0 0.0
        %2285 = vmatprep.subr.mxu0 0.0
        %2286 = vmatpush1.xpose.msra.mxu0 0.0
        %2287 = vmatprep.subr.mxu0 0.0
        %2288 = vmatpush1.xpose.msra.mxu0 0.0
        %2289 = vmatprep.subr.mxu0 0.0
        %2290 = vmatpush1.xpose.msra.mxu0 0.0
        %2291 = vmatprep.subr.mxu0 0.0
        %2292 = vmatpush1.xpose.msra.mxu0 0.0
        %2293 = vmatprep.subr.mxu0 0.0
        %2294 = vmatpush1.xpose.msra.mxu0 0.0
        %2295 = vmatprep.subr.mxu0 0.0
        %2296 = vmatpush1.xpose.msra.mxu0 0.0
        %2297 = vmatprep.subr.mxu0 0.0
        %2298 = vmatpush1.xpose.msra.mxu0 0.0
        %2299 = vmatprep.subr.mxu0 0.0
        %2300 = vmatpush1.xpose.msra.mxu0 0.0
        %2301 = vmatprep.subr.mxu0 0.0
        %2302 = vmatpush1.xpose.msra.mxu0 0.0
        %2303 = vmatprep.subr.mxu0 0.0
        %2304 = vmatpush1.xpose.msra.mxu0 0.0
        %2305 = vmatprep.subr.mxu0 0.0
        %2306 = vmatpush1.xpose.msra.mxu0 0.0
        %2307 = vmatprep.subr.mxu0 0.0
        %2308 = vmatpush1.xpose.msra.mxu0 0.0
        %2309 = vmatprep.subr.mxu0 0.0
        %2310 = vmatpush1.xpose.msra.mxu0 0.0
        %2311 = vmatprep.subr.mxu0 0.0
        %2312 = vmatpush1.xpose.msra.mxu0 0.0
        %2313 = vmatprep.subr.mxu0 0.0
        %2314 = vmatpush1.xpose.msra.mxu0 0.0
        %2315 = vmatprep.subr.mxu0 0.0
        %2316 = vmatpush1.xpose.msra.mxu0 0.0
        %2317 = vmatprep.mubr.f32.mxu0 0.0
        %2318 = vmatmul.mubr.f32.gmra.mrb[0].mxu0 %v2249
        %v2319 = vpop.f32.mrb[0].mxu0
        %v2320 = vadd.f32 0.0, %v2319
        %v2321 = vpop.f32.mrb[0].mxu0
        %2322 = vdwg.mxu0
        %2323 = vrot.lane.b32.xlu0 %v1144, 32
        %v2324 = vpop.permute.xlu0 %2323
        %2325 = vrot.lane.b32.xlu0 %v1146, 32
        %v2326 = vpop.permute.xlu0 %2325
        %v2327 = vsel %vm1215, %v2324, 0
        %v2329 = vsel %vm1215, %v2326, 0
        %2331 = vmatprep.subr.mxu0 0.0
        %2332 = vmatpush1.xpose.msra.mxu0 %v2329
        %2333 = vmatprep.subr.mxu0 0.0
        %2334 = vmatpush1.xpose.msra.mxu0 0.0
        %2335 = vmatprep.subr.mxu0 0.0
        %2336 = vmatpush1.xpose.msra.mxu0 0.0
        %2337 = vmatprep.subr.mxu0 0.0
        %2338 = vmatpush1.xpose.msra.mxu0 0.0
        %2339 = vmatprep.subr.mxu0 0.0
        %2340 = vmatpush1.xpose.msra.mxu0 0.0
        %2341 = vmatprep.subr.mxu0 0.0
        %2342 = vmatpush1.xpose.msra.mxu0 0.0
        %2343 = vmatprep.subr.mxu0 0.0
        %2344 = vmatpush1.xpose.msra.mxu0 0.0
        %2345 = vmatprep.subr.mxu0 0.0
        %2346 = vmatpush1.xpose.msra.mxu0 0.0
        %2347 = vmatprep.subr.mxu0 0.0
        %2348 = vmatpush1.xpose.msra.mxu0 0.0
        %2349 = vmatprep.subr.mxu0 0.0
        %2350 = vmatpush1.xpose.msra.mxu0 0.0
        %2351 = vmatprep.subr.mxu0 0.0
        %2352 = vmatpush1.xpose.msra.mxu0 0.0
        %2353 = vmatprep.subr.mxu0 0.0
        %2354 = vmatpush1.xpose.msra.mxu0 0.0
        %2355 = vmatprep.subr.mxu0 0.0
        %2356 = vmatpush1.xpose.msra.mxu0 0.0
        %2357 = vmatprep.subr.mxu0 0.0
        %2358 = vmatpush1.xpose.msra.mxu0 0.0
        %2359 = vmatprep.subr.mxu0 0.0
        %2360 = vmatpush1.xpose.msra.mxu0 0.0
        %2361 = vmatprep.subr.mxu0 0.0
        %2362 = vmatpush1.xpose.msra.mxu0 0.0
        %2363 = vmatprep.subr.mxu0 0.0
        %2364 = vmatpush1.xpose.msra.mxu0 0.0
        %2365 = vmatprep.subr.mxu0 0.0
        %2366 = vmatpush1.xpose.msra.mxu0 0.0
        %2367 = vmatprep.subr.mxu0 0.0
        %2368 = vmatpush1.xpose.msra.mxu0 0.0
        %2369 = vmatprep.subr.mxu0 0.0
        %2370 = vmatpush1.xpose.msra.mxu0 0.0
        %2371 = vmatprep.subr.mxu0 0.0
        %2372 = vmatpush1.xpose.msra.mxu0 0.0
        %2373 = vmatprep.subr.mxu0 0.0
        %2374 = vmatpush1.xpose.msra.mxu0 0.0
        %2375 = vmatprep.subr.mxu0 0.0
        %2376 = vmatpush1.xpose.msra.mxu0 0.0
        %2377 = vmatprep.subr.mxu0 0.0
        %2378 = vmatpush1.xpose.msra.mxu0 0.0
        %2379 = vmatprep.subr.mxu0 0.0
        %2380 = vmatpush1.xpose.msra.mxu0 0.0
        %2381 = vmatprep.subr.mxu0 0.0
        %2382 = vmatpush1.xpose.msra.mxu0 0.0
        %2383 = vmatprep.subr.mxu0 0.0
        %2384 = vmatpush1.xpose.msra.mxu0 0.0
        %2385 = vmatprep.subr.mxu0 0.0
        %2386 = vmatpush1.xpose.msra.mxu0 0.0
        %2387 = vmatprep.subr.mxu0 0.0
        %2388 = vmatpush1.xpose.msra.mxu0 0.0
        %2389 = vmatprep.subr.mxu0 0.0
        %2390 = vmatpush1.xpose.msra.mxu0 0.0
        %2391 = vmatprep.subr.mxu0 0.0
        %2392 = vmatpush1.xpose.msra.mxu0 0.0
        %2393 = vmatprep.subr.mxu0 0.0
        %2394 = vmatpush1.xpose.msra.mxu0 0.0
        %2395 = vmatprep.mubr.f32.mxu0 0.0
        %2396 = vmatmul.mubr.f32.gmra.mrb[0].mxu0 %v2327
        %v2397 = vpop.f32.mrb[0].mxu0
        %v2398 = vadd.f32 0.0, %v2397
        %v2399 = vpop.f32.mrb[0].mxu0
        %2400 = vdwg.mxu0
        %v2401 = vmul.f32 %v2320, 0.17677669
        %v2402 = vmul.f32 %v2398, 0.17677669
        %v2403 = vadd.f32 %v2401, %v1373
        %v2404 = vadd.f32 %v2402, %v1377
        %v2405 = vsel %vm1382, %v2403, -inf
        %2406 = vmax.xlane.f32.xlu0 %v2405
        %v2407 = vpop.xlane.xlu0 %2406
        %v2408 = vsel %vm1382, %v2404, -inf
        %2409 = vmax.xlane.f32.xlu0 %v2408
        %v2410 = vpop.xlane.xlu0 %2409
        %v2411 = vsub.f32 %v2403, %v2407
        %v2412 = vsub.f32 %v2404, %v2410
        %v2413 = vmul.f32 %v2411, 1.442695
        %v2414 = vpow.pop %v2413
        %v2415 = vmul.f32 %v2412, 1.442695
        %v2416 = vpow.pop %v2415
        %v2417 = vsel %vm1382, %v2414, 0.0
        %2418 = vadd.xlane.f32.xlu0 %v2417
        %v2419 = vpop.xlane.xlu0 %2418
        %v2420 = vsel %vm1382, %v2416, 0.0
        %2421 = vadd.xlane.f32.xlu0 %v2420
        %v2422 = vpop.xlane.xlu0 %2421
        %v2423 = vrcp.pop %v2419
        %v2424 = vrcp.pop %v2422
        %v2425 = vmul.f32 %v2414, %v2423
        %v2426 = vmul.f32 %v2416, %v2424
        %2427 = vrot.lane.b32.xlu0 %v1183, 32
        %v2428 = vpop.permute.xlu0 %2427
        %v2431 = vsel %vm1382, %v2425, 0
        %2433 = vmatprep.subr.mxu0 0.0
        %2434 = vmatpush1.msra.mxu0 %v2428
        %2435 = vmatprep.subr.mxu0 0.0
        %2436 = vmatpush1.msra.mxu0 0.0
        %2437 = vmatprep.subr.mxu0 0.0
        %2438 = vmatpush1.msra.mxu0 0.0
        %2439 = vmatprep.subr.mxu0 0.0
        %2440 = vmatpush1.msra.mxu0 0.0
        %2441 = vmatprep.subr.mxu0 0.0
        %2442 = vmatpush1.msra.mxu0 0.0
        %2443 = vmatprep.subr.mxu0 0.0
        %2444 = vmatpush1.msra.mxu0 0.0
        %2445 = vmatprep.subr.mxu0 0.0
        %2446 = vmatpush1.msra.mxu0 0.0
        %2447 = vmatprep.subr.mxu0 0.0
        %2448 = vmatpush1.msra.mxu0 0.0
        %2449 = vmatprep.subr.mxu0 0.0
        %2450 = vmatpush1.msra.mxu0 0.0
        %2451 = vmatprep.subr.mxu0 0.0
        %2452 = vmatpush1.msra.mxu0 0.0
        %2453 = vmatprep.subr.mxu0 0.0
        %2454 = vmatpush1.msra.mxu0 0.0
        %2455 = vmatprep.subr.mxu0 0.0
        %2456 = vmatpush1.msra.mxu0 0.0
        %2457 = vmatprep.subr.mxu0 0.0
        %2458 = vmatpush1.msra.mxu0 0.0
        %2459 = vmatprep.subr.mxu0 0.0
        %2460 = vmatpush1.msra.mxu0 0.0
        %2461 = vmatprep.subr.mxu0 0.0
        %2462 = vmatpush1.msra.mxu0 0.0
        %2463 = vmatprep.subr.mxu0 0.0
        %2464 = vmatpush1.msra.mxu0 0.0
        %2465 = vmatprep.subr.mxu0 0.0
        %2466 = vmatpush1.msra.mxu0 0.0
        %2467 = vmatprep.subr.mxu0 0.0
        %2468 = vmatpush1.msra.mxu0 0.0
        %2469 = vmatprep.subr.mxu0 0.0
        %2470 = vmatpush1.msra.mxu0 0.0
        %2471 = vmatprep.subr.mxu0 0.0
        %2472 = vmatpush1.msra.mxu0 0.0
        %2473 = vmatprep.subr.mxu0 0.0
        %2474 = vmatpush1.msra.mxu0 0.0
        %2475 = vmatprep.subr.mxu0 0.0
        %2476 = vmatpush1.msra.mxu0 0.0
        %2477 = vmatprep.subr.mxu0 0.0
        %2478 = vmatpush1.msra.mxu0 0.0
        %2479 = vmatprep.subr.mxu0 0.0
        %2480 = vmatpush1.msra.mxu0 0.0
        %2481 = vmatprep.subr.mxu0 0.0
        %2482 = vmatpush1.msra.mxu0 0.0
        %2483 = vmatprep.subr.mxu0 0.0
        %2484 = vmatpush1.msra.mxu0 0.0
        %2485 = vmatprep.subr.mxu0 0.0
        %2486 = vmatpush1.msra.mxu0 0.0
        %2487 = vmatprep.subr.mxu0 0.0
        %2488 = vmatpush1.msra.mxu0 0.0
        %2489 = vmatprep.subr.mxu0 0.0
        %2490 = vmatpush1.msra.mxu0 0.0
        %2491 = vmatprep.subr.mxu0 0.0
        %2492 = vmatpush1.msra.mxu0 0.0
        %2493 = vmatprep.subr.mxu0 0.0
        %2494 = vmatpush1.msra.mxu0 0.0
        %2495 = vmatprep.subr.mxu0 0.0
        %2496 = vmatpush1.msra.mxu0 0.0
        %2497 = vmatprep.mubr.f32.mxu0 0.0
        %2498 = vmatmul.mubr.f32.gmra.mrb[0].mxu0 %v2431
        %v2499 = vpop.f32.mrb[0].mxu0
        %v2500 = vadd.f32 0.0, %v2499
        %v2501 = vpop.f32.mrb[0].mxu0
        %2502 = vdwg.mxu0
        %2503 = vrot.lane.b32.xlu0 %v1186, 32
        %v2504 = vpop.permute.xlu0 %2503
        %v2507 = vsel %vm1382, %v2426, 0
        %2509 = vmatprep.subr.mxu0 0.0
        %2510 = vmatpush1.msra.mxu0 %v2504
        %2511 = vmatprep.subr.mxu0 0.0
        %2512 = vmatpush1.msra.mxu0 0.0
        %2513 = vmatprep.subr.mxu0 0.0
        %2514 = vmatpush1.msra.mxu0 0.0
        %2515 = vmatprep.subr.mxu0 0.0
        %2516 = vmatpush1.msra.mxu0 0.0
        %2517 = vmatprep.subr.mxu0 0.0
        %2518 = vmatpush1.msra.mxu0 0.0
        %2519 = vmatprep.subr.mxu0 0.0
        %2520 = vmatpush1.msra.mxu0 0.0
        %2521 = vmatprep.subr.mxu0 0.0
        %2522 = vmatpush1.msra.mxu0 0.0
        %2523 = vmatprep.subr.mxu0 0.0
        %2524 = vmatpush1.msra.mxu0 0.0
        %2525 = vmatprep.subr.mxu0 0.0
        %2526 = vmatpush1.msra.mxu0 0.0
        %2527 = vmatprep.subr.mxu0 0.0
        %2528 = vmatpush1.msra.mxu0 0.0
        %2529 = vmatprep.subr.mxu0 0.0
        %2530 = vmatpush1.msra.mxu0 0.0
        %2531 = vmatprep.subr.mxu0 0.0
        %2532 = vmatpush1.msra.mxu0 0.0
        %2533 = vmatprep.subr.mxu0 0.0
        %2534 = vmatpush1.msra.mxu0 0.0
        %2535 = vmatprep.subr.mxu0 0.0
        %2536 = vmatpush1.msra.mxu0 0.0
        %2537 = vmatprep.subr.mxu0 0.0
        %2538 = vmatpush1.msra.mxu0 0.0
        %2539 = vmatprep.subr.mxu0 0.0
        %2540 = vmatpush1.msra.mxu0 0.0
        %2541 = vmatprep.subr.mxu0 0.0
        %2542 = vmatpush1.msra.mxu0 0.0
        %2543 = vmatprep.subr.mxu0 0.0
        %2544 = vmatpush1.msra.mxu0 0.0
        %2545 = vmatprep.subr.mxu0 0.0
        %2546 = vmatpush1.msra.mxu0 0.0
        %2547 = vmatprep.subr.mxu0 0.0
        %2548 = vmatpush1.msra.mxu0 0.0
        %2549 = vmatprep.subr.mxu0 0.0
        %2550 = vmatpush1.msra.mxu0 0.0
        %2551 = vmatprep.subr.mxu0 0.0
        %2552 = vmatpush1.msra.mxu0 0.0
        %2553 = vmatprep.subr.mxu0 0.0
        %2554 = vmatpush1.msra.mxu0 0.0
        %2555 = vmatprep.subr.mxu0 0.0
        %2556 = vmatpush1.msra.mxu0 0.0
        %2557 = vmatprep.subr.mxu0 0.0
        %2558 = vmatpush1.msra.mxu0 0.0
        %2559 = vmatprep.subr.mxu0 0.0
        %2560 = vmatpush1.msra.mxu0 0.0
        %2561 = vmatprep.subr.mxu0 0.0
        %2562 = vmatpush1.msra.mxu0 0.0
        %2563 = vmatprep.subr.mxu0 0.0
        %2564 = vmatpush1.msra.mxu0 0.0
        %2565 = vmatprep.subr.mxu0 0.0
        %2566 = vmatpush1.msra.mxu0 0.0
        %2567 = vmatprep.subr.mxu0 0.0
        %2568 = vmatpush1.msra.mxu0 0.0
        %2569 = vmatprep.subr.mxu0 0.0
        %2570 = vmatpush1.msra.mxu0 0.0
        %2571 = vmatprep.subr.mxu0 0.0
        %2572 = vmatpush1.msra.mxu0 0.0
        %2573 = vmatprep.mubr.f32.mxu0 0.0
        %2574 = vmatmul.mubr.f32.gmra.mrb[0].mxu0 %v2507
        %v2575 = vpop.f32.mrb[0].mxu0
        %v2576 = vadd.f32 0.0, %v2575
        %v2577 = vpop.f32.mrb[0].mxu0
        %2578 = vdwg.mxu0
        %2581 = vrot.lane.b32.xlu0 %v2500, 96
        %v2582 = vpop.permute.xlu0 %2581
        %2583 = vrot.lane.b32.xlu0 %v2576, 96
        %v2584 = vpop.permute.xlu0 %2583
        %vm2587 = vcmask 1048320
        %2588 = vst.msk [vmem:[#allocation3] sm:$0xff] %vm2587, %v2582
        %2589 = vst.msk [vmem:[#allocation3 + $0x8] sm:$0xff] %vm2587, %v2584
        %v2590 = vld [vmem:[#allocation3] sm:$0xff]
        %v2591 = vld [vmem:[#allocation3 + $0x8] sm:$0xff]
        %v2592 = vld [vmem:[%s738] sm:$0xf]
        %v2593 = vld [vmem:[%s738 + $0x4] sm:$0xf]
        %v2594 = vld [vmem:[%s738 + $0x8] sm:$0xf]
        %v2595 = vld [vmem:[%s738 + $0xc] sm:$0xf]
        %v2596 = vld [vmem:[%s738 + $0x10] sm:$0xf]
        %v2597 = vld [vmem:[%s738 + $0x14] sm:$0xf]
        %v2598 = vld [vmem:[%s738 + $0x18] sm:$0xf]
        %v2599 = vld [vmem:[%s738 + $0x1c] sm:$0xf]
        %v2600 = vld [vmem:[%s738 + $0x20] sm:$0xf]
        %v2601 = vld [vmem:[%s738 + $0x24] sm:$0xf]
        %v2602 = vld [vmem:[%s738 + $0x28] sm:$0xf]
        %v2603 = vld [vmem:[%s738 + $0x2c] sm:$0xf]
        %v2604 = vld [vmem:[%s738 + $0x30] sm:$0xf]
        %v2605 = vld [vmem:[%s738 + $0x34] sm:$0xf]
        %v2606 = vld [vmem:[%s738 + $0x38] sm:$0xf]
        %v2607 = vld [vmem:[%s738 + $0x3c] sm:$0xf]
        %v2608 = vld [vmem:[%s855] sm:$0x1]
        %v2609 = vpack.c.bf16 %v2591, %v2590
        %v2611 = vlaneseq
        %v2612 = vshrl.u32 %v2611, 7
        %v2613 = vsub.s32 0, %v2612
        %v2614 = vrot.slane %v2608, %v2613
        %v2632 = vunpack.c.l.b16 %v2592
        %v2633 = vunpack.c.l.b16 %v2593
        %v2634 = vunpack.c.l.b16 %v2594
        %v2635 = vunpack.c.l.b16 %v2595
        %v2636 = vunpack.c.l.b16 %v2596
        %v2637 = vunpack.c.l.b16 %v2597
        %v2638 = vunpack.c.l.b16 %v2598
        %v2639 = vunpack.c.l.b16 %v2599
        %v2640 = vunpack.c.l.b16 %v2600
        %v2641 = vunpack.c.l.b16 %v2601
        %v2642 = vunpack.c.l.b16 %v2602
        %v2643 = vunpack.c.l.b16 %v2603
        %v2644 = vunpack.c.l.b16 %v2604
        %v2645 = vunpack.c.l.b16 %v2605
        %v2646 = vunpack.c.l.b16 %v2606
        %v2647 = vunpack.c.l.b16 %v2607
        %v2648 = vpack.c.b16 %v2633, %v2632
        %v2649 = vpack.c.b16 %v2635, %v2634
        %v2650 = vpack.c.b16 %v2637, %v2636
        %v2651 = vpack.c.b16 %v2639, %v2638
        %v2652 = vpack.c.b16 %v2641, %v2640
        %v2653 = vpack.c.b16 %v2643, %v2642
        %v2654 = vpack.c.b16 %v2645, %v2644
        %v2655 = vpack.c.b16 %v2647, %v2646
        %2664 = vmatprep.subr.bf16.mxu0 0
        %2665 = vmatpush1.bf16.msra.mxu0 %v2648
        %2666 = vmatprep.subr.bf16.mxu0 0
        %2667 = vmatpush1.bf16.msra.mxu0 %v2649
        %2668 = vmatprep.subr.bf16.mxu0 0
        %2669 = vmatpush1.bf16.msra.mxu0 %v2650
        %2670 = vmatprep.subr.bf16.mxu0 0
        %2671 = vmatpush1.bf16.msra.mxu0 %v2651
        %2672 = vmatprep.subr.bf16.mxu0 0
        %2673 = vmatpush1.bf16.msra.mxu0 %v2652
        %2674 = vmatprep.subr.bf16.mxu0 0
        %2675 = vmatpush1.bf16.msra.mxu0 %v2653
        %2676 = vmatprep.subr.bf16.mxu0 0
        %2677 = vmatpush1.bf16.msra.mxu0 %v2654
        %2678 = vmatprep.subr.bf16.mxu0 0
        %2679 = vmatpush1.bf16.msra.mxu0 %v2655
        %2680 = vmatprep.subr.bf16.mxu0 0
        %2681 = vmatpush1.bf16.msra.mxu0 0
        %2682 = vmatprep.subr.bf16.mxu0 0
        %2683 = vmatpush1.bf16.msra.mxu0 0
        %2684 = vmatprep.subr.bf16.mxu0 0
        %2685 = vmatpush1.bf16.msra.mxu0 0
        %2686 = vmatprep.subr.bf16.mxu0 0
        %2687 = vmatpush1.bf16.msra.mxu0 0
        %2688 = vmatprep.subr.bf16.mxu0 0
        %2689 = vmatpush1.bf16.msra.mxu0 0
        %2690 = vmatprep.subr.bf16.mxu0 0
        %2691 = vmatpush1.bf16.msra.mxu0 0
        %2692 = vmatprep.subr.bf16.mxu0 0
        %2693 = vmatpush1.bf16.msra.mxu0 0
        %2694 = vmatprep.subr.bf16.mxu0 0
        %2695 = vmatpush1.bf16.msra.mxu0 0
        %2696 = vmatprep.mubr.bf16.mxu0 0
        %2697 = vmatmul.mubr.bf16.gmra.mrb[0].mxu0 %v2609
        %v2698 = vpop.f32.mrb[0].mxu0
        %v2699 = vadd.f32 %v2614, %v2698
        %v2700 = vpop.f32.mrb[0].mxu0
        %v2701 = vpop.f32.mrb[0].mxu0
        %v2702 = vadd.f32 %v2614, %v2701
        %v2703 = vpop.f32.mrb[0].mxu0
        %2704 = vdwg.mxu0
        %v2705 = vadd.f32 %v2699, %v925
        %v2706 = vadd.f32 %v2702, %v926
        %v2707 = vld [vmem:[%s858] sm:$0x1]
        %v2708 = vld [vmem:[%s861] sm:$0x1]
        %2709 = vadd.xlane.f32.xlu0 %v2705
        %v2710 = vpop.xlane.xlu0 %2709
        %2711 = vadd.xlane.f32.xlu0 %v2706
        %v2712 = vpop.xlane.xlu0 %2711
        %v2713 = vrcp.pop 128.0
        %v2714 = vmul.f32 %v2710, %v2713
        %v2715 = vmul.f32 %v2712, %v2713
        %v2716 = vsub.f32 %v2705, %v2714
        %v2717 = vsub.f32 %v2706, %v2715
        %v2718 = vmul.f32 %v2716, %v2716
        %v2719 = vmul.f32 %v2717, %v2717
        %2720 = vadd.xlane.f32.xlu0 %v2718
        %v2721 = vpop.xlane.xlu0 %2720
        %2722 = vadd.xlane.f32.xlu0 %v2719
        %v2723 = vpop.xlane.xlu0 %2722
        %v2724 = vmul.f32 %v2721, %v2713
        %v2725 = vmul.f32 %v2723, %v2713
        %v2726 = vadd.f32 %v2724, 1e-12
        %v2727 = vadd.f32 %v2725, 1e-12
        %v2728 = vrsqrt.pop %v2726
        %v2729 = vrsqrt.pop %v2727
        %v2730 = vmul.f32 %v2716, %v2728
        %v2731 = vmul.f32 %v2717, %v2729
        %v2733 = vlaneseq
        %v2734 = vshrl.u32 %v2733, 7
        %v2735 = vsub.s32 0, %v2734
        %v2736 = vrot.slane %v2707, %v2735
        %v2738 = vmul.f32 %v2730, %v2736
        %v2739 = vmul.f32 %v2731, %v2736
        %v2741 = vlaneseq
        %v2742 = vshrl.u32 %v2741, 7
        %v2743 = vsub.s32 0, %v2742
        %v2744 = vrot.slane %v2708, %v2743
        %v2746 = vadd.f32 %v2738, %v2744
        %v2747 = vadd.f32 %v2739, %v2744
        %v2748 = vld [vmem:[%s747] sm:$0xff]
        %v2749 = vld [vmem:[%s747 + $0x8] sm:$0xff]
        %v2750 = vld [vmem:[%s747 + $0x10] sm:$0xff]
        %v2751 = vld [vmem:[%s747 + $0x18] sm:$0xff]
        %v2752 = vld [vmem:[%s747 + $0x20] sm:$0xff]
        %v2753 = vld [vmem:[%s747 + $0x28] sm:$0xff]
        %v2754 = vld [vmem:[%s747 + $0x30] sm:$0xff]
        %v2755 = vld [vmem:[%s747 + $0x38] sm:$0xff]
        %v2756 = vld [vmem:[%s747 + $0x40] sm:$0xff]
        %v2757 = vld [vmem:[%s747 + $0x48] sm:$0xff]
        %v2758 = vld [vmem:[%s747 + $0x50] sm:$0xff]
        %v2759 = vld [vmem:[%s747 + $0x58] sm:$0xff]
        %v2760 = vld [vmem:[%s747 + $0x60] sm:$0xff]
        %v2761 = vld [vmem:[%s747 + $0x68] sm:$0xff]
        %v2762 = vld [vmem:[%s747 + $0x70] sm:$0xff]
        %v2763 = vld [vmem:[%s747 + $0x78] sm:$0xff]
        %v2764 = vld [vmem:[%s747 + $0x80] sm:$0xff]
        %v2765 = vld [vmem:[%s747 + $0x88] sm:$0xff]
        %v2766 = vld [vmem:[%s747 + $0x90] sm:$0xff]
        %v2767 = vld [vmem:[%s747 + $0x98] sm:$0xff]
        %v2768 = vld [vmem:[%s747 + $0xa0] sm:$0xff]
        %v2769 = vld [vmem:[%s747 + $0xa8] sm:$0xff]
        %v2770 = vld [vmem:[%s747 + $0xb0] sm:$0xff]
        %v2771 = vld [vmem:[%s747 + $0xb8] sm:$0xff]
        %v2772 = vld [vmem:[%s747 + $0xc0] sm:$0xff]
        %v2773 = vld [vmem:[%s747 + $0xc8] sm:$0xff]
        %v2774 = vld [vmem:[%s747 + $0xd0] sm:$0xff]
        %v2775 = vld [vmem:[%s747 + $0xd8] sm:$0xff]
        %v2776 = vld [vmem:[%s747 + $0xe0] sm:$0xff]
        %v2777 = vld [vmem:[%s747 + $0xe8] sm:$0xff]
        %v2778 = vld [vmem:[%s747 + $0xf0] sm:$0xff]
        %v2779 = vld [vmem:[%s747 + $0xf8] sm:$0xff]
        %v2780 = vld [vmem:[%s865] sm:$0xf]
        %v2781 = vpack.c.bf16 %v2747, %v2746
        %v2783 = vlaneseq
        %v2784 = vshrl.u32 %v2783, 7
        %v2785 = vsub.s32 0, %v2784
        %v2786 = vrot.slane %v2780, %v2785
        %v2787 = vlaneseq
        %v2788 = vshrl.u32 %v2787, 7
        %v2789 = vsub.s32 1, %v2788
        %v2790 = vrot.slane %v2780, %v2789
        %v2791 = vlaneseq
        %v2792 = vshrl.u32 %v2791, 7
        %v2793 = vsub.s32 2, %v2792
        %v2794 = vrot.slane %v2780, %v2793
        %v2795 = vlaneseq
        %v2796 = vshrl.u32 %v2795, 7
        %v2797 = vsub.s32 3, %v2796
        %v2798 = vrot.slane %v2780, %v2797
        %v2835 = vunpack.c.l.b16 %v2748
        %v2836 = vunpack.c.h.b16 %v2748
        %v2837 = vunpack.c.l.b16 %v2749
        %v2838 = vunpack.c.h.b16 %v2749
        %v2839 = vunpack.c.l.b16 %v2750
        %v2840 = vunpack.c.h.b16 %v2750
        %v2841 = vunpack.c.l.b16 %v2751
        %v2842 = vunpack.c.h.b16 %v2751
        %v2843 = vunpack.c.l.b16 %v2752
        %v2844 = vunpack.c.h.b16 %v2752
        %v2845 = vunpack.c.l.b16 %v2753
        %v2846 = vunpack.c.h.b16 %v2753
        %v2847 = vunpack.c.l.b16 %v2754
        %v2848 = vunpack.c.h.b16 %v2754
        %v2849 = vunpack.c.l.b16 %v2755
        %v2850 = vunpack.c.h.b16 %v2755
        %v2851 = vunpack.c.l.b16 %v2756
        %v2852 = vunpack.c.h.b16 %v2756
        %v2853 = vunpack.c.l.b16 %v2757
        %v2854 = vunpack.c.h.b16 %v2757
        %v2855 = vunpack.c.l.b16 %v2758
        %v2856 = vunpack.c.h.b16 %v2758
        %v2857 = vunpack.c.l.b16 %v2759
        %v2858 = vunpack.c.h.b16 %v2759
        %v2859 = vunpack.c.l.b16 %v2760
        %v2860 = vunpack.c.h.b16 %v2760
        %v2861 = vunpack.c.l.b16 %v2761
        %v2862 = vunpack.c.h.b16 %v2761
        %v2863 = vunpack.c.l.b16 %v2762
        %v2864 = vunpack.c.h.b16 %v2762
        %v2865 = vunpack.c.l.b16 %v2763
        %v2866 = vunpack.c.h.b16 %v2763
        %v2867 = vunpack.c.l.b16 %v2764
        %v2868 = vunpack.c.h.b16 %v2764
        %v2869 = vunpack.c.l.b16 %v2765
        %v2870 = vunpack.c.h.b16 %v2765
        %v2871 = vunpack.c.l.b16 %v2766
        %v2872 = vunpack.c.h.b16 %v2766
        %v2873 = vunpack.c.l.b16 %v2767
        %v2874 = vunpack.c.h.b16 %v2767
        %v2875 = vunpack.c.l.b16 %v2768
        %v2876 = vunpack.c.h.b16 %v2768
        %v2877 = vunpack.c.l.b16 %v2769
        %v2878 = vunpack.c.h.b16 %v2769
        %v2879 = vunpack.c.l.b16 %v2770
        %v2880 = vunpack.c.h.b16 %v2770
        %v2881 = vunpack.c.l.b16 %v2771
        %v2882 = vunpack.c.h.b16 %v2771
        %v2883 = vunpack.c.l.b16 %v2772
        %v2884 = vunpack.c.h.b16 %v2772
        %v2885 = vunpack.c.l.b16 %v2773
        %v2886 = vunpack.c.h.b16 %v2773
        %v2887 = vunpack.c.l.b16 %v2774
        %v2888 = vunpack.c.h.b16 %v2774
        %v2889 = vunpack.c.l.b16 %v2775
        %v2890 = vunpack.c.h.b16 %v2775
        %v2891 = vunpack.c.l.b16 %v2776
        %v2892 = vunpack.c.h.b16 %v2776
        %v2893 = vunpack.c.l.b16 %v2777
        %v2894 = vunpack.c.h.b16 %v2777
        %v2895 = vunpack.c.l.b16 %v2778
        %v2896 = vunpack.c.h.b16 %v2778
        %v2897 = vunpack.c.l.b16 %v2779
        %v2898 = vunpack.c.h.b16 %v2779
        %v2899 = vpack.c.b16 %v2839, %v2835
        %v2900 = vpack.c.b16 %v2840, %v2836
        %v2901 = vpack.c.b16 %v2841, %v2837
        %v2902 = vpack.c.b16 %v2842, %v2838
        %v2903 = vpack.c.b16 %v2847, %v2843
        %v2904 = vpack.c.b16 %v2848, %v2844
        %v2905 = vpack.c.b16 %v2849, %v2845
        %v2906 = vpack.c.b16 %v2850, %v2846
        %v2907 = vpack.c.b16 %v2855, %v2851
        %v2908 = vpack.c.b16 %v2856, %v2852
        %v2909 = vpack.c.b16 %v2857, %v2853
        %v2910 = vpack.c.b16 %v2858, %v2854
        %v2911 = vpack.c.b16 %v2863, %v2859
        %v2912 = vpack.c.b16 %v2864, %v2860
        %v2913 = vpack.c.b16 %v2865, %v2861
        %v2914 = vpack.c.b16 %v2866, %v2862
        %v2915 = vpack.c.b16 %v2871, %v2867
        %v2916 = vpack.c.b16 %v2872, %v2868
        %v2917 = vpack.c.b16 %v2873, %v2869
        %v2918 = vpack.c.b16 %v2874, %v2870
        %v2919 = vpack.c.b16 %v2879, %v2875
        %v2920 = vpack.c.b16 %v2880, %v2876
        %v2921 = vpack.c.b16 %v2881, %v2877
        %v2922 = vpack.c.b16 %v2882, %v2878
        %v2923 = vpack.c.b16 %v2887, %v2883
        %v2924 = vpack.c.b16 %v2888, %v2884
        %v2925 = vpack.c.b16 %v2889, %v2885
        %v2926 = vpack.c.b16 %v2890, %v2886
        %v2927 = vpack.c.b16 %v2895, %v2891
        %v2928 = vpack.c.b16 %v2896, %v2892
        %v2929 = vpack.c.b16 %v2897, %v2893
        %v2930 = vpack.c.b16 %v2898, %v2894
        %2963 = vmatprep.subr.bf16.mxu0 %v2900
        %2964 = vmatpush1.bf16.msra.mxu0 %v2899
        %2965 = vmatprep.subr.bf16.mxu0 %v2904
        %2966 = vmatpush1.bf16.msra.mxu0 %v2903
        %2967 = vmatprep.subr.bf16.mxu0 %v2908
        %2968 = vmatpush1.bf16.msra.mxu0 %v2907
        %2969 = vmatprep.subr.bf16.mxu0 %v2912
        %2970 = vmatpush1.bf16.msra.mxu0 %v2911
        %2971 = vmatprep.subr.bf16.mxu0 %v2916
        %2972 = vmatpush1.bf16.msra.mxu0 %v2915
        %2973 = vmatprep.subr.bf16.mxu0 %v2920
        %2974 = vmatpush1.bf16.msra.mxu0 %v2919
        %2975 = vmatprep.subr.bf16.mxu0 %v2924
        %2976 = vmatpush1.bf16.msra.mxu0 %v2923
        %2977 = vmatprep.subr.bf16.mxu0 %v2928
        %2978 = vmatpush1.bf16.msra.mxu0 %v2927
        %2979 = vmatprep.subr.bf16.mxu0 0
        %2980 = vmatpush1.bf16.msra.mxu0 0
        %2981 = vmatprep.subr.bf16.mxu0 0
        %2982 = vmatpush1.bf16.msra.mxu0 0
        %2983 = vmatprep.subr.bf16.mxu0 0
        %2984 = vmatpush1.bf16.msra.mxu0 0
        %2985 = vmatprep.subr.bf16.mxu0 0
        %2986 = vmatpush1.bf16.msra.mxu0 0
        %2987 = vmatprep.subr.bf16.mxu0 0
        %2988 = vmatpush1.bf16.msra.mxu0 0
        %2989 = vmatprep.subr.bf16.mxu0 0
        %2990 = vmatpush1.bf16.msra.mxu0 0
        %2991 = vmatprep.subr.bf16.mxu0 0
        %2992 = vmatpush1.bf16.msra.mxu0 0
        %2993 = vmatprep.subr.bf16.mxu0 0
        %2994 = vmatpush1.bf16.msra.mxu0 0
        %2995 = vmatprep.mubr.bf16.mxu0 0
        %2996 = vmatmul.mubr.bf16.gmra.mrb[0].mxu0 %v2781
        %v2997 = vpop.f32.mrb[0].mxu0
        %v2998 = vadd.f32 %v2786, %v2997
        %v2999 = vpop.f32.mrb[0].mxu0
        %v3000 = vadd.f32 %v2790, %v2999
        %v3001 = vpop.f32.mrb[0].mxu0
        %v3002 = vadd.f32 %v2786, %v3001
        %v3003 = vpop.f32.mrb[0].mxu0
        %v3004 = vadd.f32 %v2790, %v3003
        %3005 = vdwg.mxu0
        %3006 = vmatprep.subr.bf16.mxu0 %v2902
        %3007 = vmatpush1.bf16.msra.mxu0 %v2901
        %3008 = vmatprep.subr.bf16.mxu0 %v2906
        %3009 = vmatpush1.bf16.msra.mxu0 %v2905
        %3010 = vmatprep.subr.bf16.mxu0 %v2910
        %3011 = vmatpush1.bf16.msra.mxu0 %v2909
        %3012 = vmatprep.subr.bf16.mxu0 %v2914
        %3013 = vmatpush1.bf16.msra.mxu0 %v2913
        %3014 = vmatprep.subr.bf16.mxu0 %v2918
        %3015 = vmatpush1.bf16.msra.mxu0 %v2917
        %3016 = vmatprep.subr.bf16.mxu0 %v2922
        %3017 = vmatpush1.bf16.msra.mxu0 %v2921
        %3018 = vmatprep.subr.bf16.mxu0 %v2926
        %3019 = vmatpush1.bf16.msra.mxu0 %v2925
        %3020 = vmatprep.subr.bf16.mxu0 %v2930
        %3021 = vmatpush1.bf16.msra.mxu0 %v2929
        %3022 = vmatprep.subr.bf16.mxu0 0
        %3023 = vmatpush1.bf16.msra.mxu0 0
        %3024 = vmatprep.subr.bf16.mxu0 0
        %3025 = vmatpush1.bf16.msra.mxu0 0
        %3026 = vmatprep.subr.bf16.mxu0 0
        %3027 = vmatpush1.bf16.msra.mxu0 0
        %3028 = vmatprep.subr.bf16.mxu0 0
        %3029 = vmatpush1.bf16.msra.mxu0 0
        %3030 = vmatprep.subr.bf16.mxu0 0
        %3031 = vmatpush1.bf16.msra.mxu0 0
        %3032 = vmatprep.subr.bf16.mxu0 0
        %3033 = vmatpush1.bf16.msra.mxu0 0
        %3034 = vmatprep.subr.bf16.mxu0 0
        %3035 = vmatpush1.bf16.msra.mxu0 0
        %3036 = vmatprep.subr.bf16.mxu0 0
        %3037 = vmatpush1.bf16.msra.mxu0 0
        %3038 = vmatprep.mubr.bf16.mxu0 0
        %3039 = vmatmul.mubr.bf16.gmra.mrb[0].mxu0 %v2781
        %v3040 = vpop.f32.mrb[0].mxu0
        %v3041 = vadd.f32 %v2794, %v3040
        %v3042 = vpop.f32.mrb[0].mxu0
        %v3043 = vadd.f32 %v2798, %v3042
        %v3044 = vpop.f32.mrb[0].mxu0
        %v3045 = vadd.f32 %v2794, %v3044
        %v3046 = vpop.f32.mrb[0].mxu0
        %v3047 = vadd.f32 %v2798, %v3046
        %3048 = vdwg.mxu0
        %v3049 = vmul.f32 %v2998, %v2998
        %v3050 = vmul.f32 %v3000, %v3000
        %v3051 = vmul.f32 %v3041, %v3041
        %v3052 = vmul.f32 %v3043, %v3043
        %v3053 = vmul.f32 %v3002, %v3002
        %v3054 = vmul.f32 %v3004, %v3004
        %v3055 = vmul.f32 %v3045, %v3045
        %v3056 = vmul.f32 %v3047, %v3047
        %v3057 = vmul.f32 %v2998, %v3049
        %v3058 = vmul.f32 %v3000, %v3050
        %v3059 = vmul.f32 %v3041, %v3051
        %v3060 = vmul.f32 %v3043, %v3052
        %v3061 = vmul.f32 %v3002, %v3053
        %v3062 = vmul.f32 %v3004, %v3054
        %v3063 = vmul.f32 %v3045, %v3055
        %v3064 = vmul.f32 %v3047, %v3056
        %v3065 = vmul.f32 %v3057, 0.044715
        %v3066 = vmul.f32 %v3058, 0.044715
        %v3067 = vmul.f32 %v3059, 0.044715
        %v3068 = vmul.f32 %v3060, 0.044715
        %v3069 = vmul.f32 %v3061, 0.044715
        %v3070 = vmul.f32 %v3062, 0.044715
        %v3071 = vmul.f32 %v3063, 0.044715
        %v3072 = vmul.f32 %v3064, 0.044715
        %v3073 = vadd.f32 %v2998, %v3065
        %v3074 = vadd.f32 %v3000, %v3066
        %v3075 = vadd.f32 %v3041, %v3067
        %v3076 = vadd.f32 %v3043, %v3068
        %v3077 = vadd.f32 %v3002, %v3069
        %v3078 = vadd.f32 %v3004, %v3070
        %v3079 = vadd.f32 %v3045, %v3071
        %v3080 = vadd.f32 %v3047, %v3072
        %v3081 = vmul.f32 %v3073, 0.7978846
        %v3082 = vmul.f32 %v3074, 0.7978846
        %v3083 = vmul.f32 %v3075, 0.7978846
        %v3084 = vmul.f32 %v3076, 0.7978846
        %v3085 = vmul.f32 %v3077, 0.7978846
        %v3086 = vmul.f32 %v3078, 0.7978846
        %v3087 = vmul.f32 %v3079, 0.7978846
        %v3088 = vmul.f32 %v3080, 0.7978846
        %v3089 = vtanh.pop %v3081
        %v3090 = vtanh.pop %v3082
        %v3091 = vtanh.pop %v3083
        %v3092 = vtanh.pop %v3084
        %v3093 = vtanh.pop %v3085
        %v3094 = vtanh.pop %v3086
        %v3095 = vtanh.pop %v3087
        %v3096 = vtanh.pop %v3088
        %v3097 = vadd.f32 %v3089, 1.0
        %v3098 = vadd.f32 %v3090, 1.0
        %v3099 = vadd.f32 %v3091, 1.0
        %v3100 = vadd.f32 %v3092, 1.0
        %v3101 = vadd.f32 %v3093, 1.0
        %v3102 = vadd.f32 %v3094, 1.0
        %v3103 = vadd.f32 %v3095, 1.0
        %v3104 = vadd.f32 %v3096, 1.0
        %v3105 = vmul.f32 %v3097, 0.5
        %v3106 = vmul.f32 %v3098, 0.5
        %v3107 = vmul.f32 %v3099, 0.5
        %v3108 = vmul.f32 %v3100, 0.5
        %v3109 = vmul.f32 %v3101, 0.5
        %v3110 = vmul.f32 %v3102, 0.5
        %v3111 = vmul.f32 %v3103, 0.5
        %v3112 = vmul.f32 %v3104, 0.5
        %v3113 = vmul.f32 %v2998, %v3105
        %v3114 = vmul.f32 %v3000, %v3106
        %v3115 = vmul.f32 %v3041, %v3107
        %v3116 = vmul.f32 %v3043, %v3108
        %v3117 = vmul.f32 %v3002, %v3109
        %v3118 = vmul.f32 %v3004, %v3110
        %v3119 = vmul.f32 %v3045, %v3111
        %v3120 = vmul.f32 %v3047, %v3112
        %v3121 = vld [vmem:[%s756] sm:$0xf]
        %v3122 = vld [vmem:[%s756 + $0x4] sm:$0xf]
        %v3123 = vld [vmem:[%s756 + $0x8] sm:$0xf]
        %v3124 = vld [vmem:[%s756 + $0xc] sm:$0xf]
        %v3125 = vld [vmem:[%s756 + $0x10] sm:$0xf]
        %v3126 = vld [vmem:[%s756 + $0x14] sm:$0xf]
        %v3127 = vld [vmem:[%s756 + $0x18] sm:$0xf]
        %v3128 = vld [vmem:[%s756 + $0x1c] sm:$0xf]
        %v3129 = vld [vmem:[%s756 + $0x20] sm:$0xf]
        %v3130 = vld [vmem:[%s756 + $0x24] sm:$0xf]
        %v3131 = vld [vmem:[%s756 + $0x28] sm:$0xf]
        %v3132 = vld [vmem:[%s756 + $0x2c] sm:$0xf]
        %v3133 = vld [vmem:[%s756 + $0x30] sm:$0xf]
        %v3134 = vld [vmem:[%s756 + $0x34] sm:$0xf]
        %v3135 = vld [vmem:[%s756 + $0x38] sm:$0xf]
        %v3136 = vld [vmem:[%s756 + $0x3c] sm:$0xf]
        %v3137 = vld [vmem:[%s756 + $0x40] sm:$0xf]
        %v3138 = vld [vmem:[%s756 + $0x44] sm:$0xf]
        %v3139 = vld [vmem:[%s756 + $0x48] sm:$0xf]
        %v3140 = vld [vmem:[%s756 + $0x4c] sm:$0xf]
        %v3141 = vld [vmem:[%s756 + $0x50] sm:$0xf]
        %v3142 = vld [vmem:[%s756 + $0x54] sm:$0xf]
        %v3143 = vld [vmem:[%s756 + $0x58] sm:$0xf]
        %v3144 = vld [vmem:[%s756 + $0x5c] sm:$0xf]
        %v3145 = vld [vmem:[%s756 + $0x60] sm:$0xf]
        %v3146 = vld [vmem:[%s756 + $0x64] sm:$0xf]
        %v3147 = vld [vmem:[%s756 + $0x68] sm:$0xf]
        %v3148 = vld [vmem:[%s756 + $0x6c] sm:$0xf]
        %v3149 = vld [vmem:[%s756 + $0x70] sm:$0xf]
        %v3150 = vld [vmem:[%s756 + $0x74] sm:$0xf]
        %v3151 = vld [vmem:[%s756 + $0x78] sm:$0xf]
        %v3152 = vld [vmem:[%s756 + $0x7c] sm:$0xf]
        %v3153 = vld [vmem:[%s756 + $0x80] sm:$0xf]
        %v3154 = vld [vmem:[%s756 + $0x84] sm:$0xf]
        %v3155 = vld [vmem:[%s756 + $0x88] sm:$0xf]
        %v3156 = vld [vmem:[%s756 + $0x8c] sm:$0xf]
        %v3157 = vld [vmem:[%s756 + $0x90] sm:$0xf]
        %v3158 = vld [vmem:[%s756 + $0x94] sm:$0xf]
        %v3159 = vld [vmem:[%s756 + $0x98] sm:$0xf]
        %v3160 = vld [vmem:[%s756 + $0x9c] sm:$0xf]
        %v3161 = vld [vmem:[%s756 + $0xa0] sm:$0xf]
        %v3162 = vld [vmem:[%s756 + $0xa4] sm:$0xf]
        %v3163 = vld [vmem:[%s756 + $0xa8] sm:$0xf]
        %v3164 = vld [vmem:[%s756 + $0xac] sm:$0xf]
        %v3165 = vld [vmem:[%s756 + $0xb0] sm:$0xf]
        %v3166 = vld [vmem:[%s756 + $0xb4] sm:$0xf]
        %v3167 = vld [vmem:[%s756 + $0xb8] sm:$0xf]
        %v3168 = vld [vmem:[%s756 + $0xbc] sm:$0xf]
        %v3169 = vld [vmem:[%s756 + $0xc0] sm:$0xf]
        %v3170 = vld [vmem:[%s756 + $0xc4] sm:$0xf]
        %v3171 = vld [vmem:[%s756 + $0xc8] sm:$0xf]
        %v3172 = vld [vmem:[%s756 + $0xcc] sm:$0xf]
        %v3173 = vld [vmem:[%s756 + $0xd0] sm:$0xf]
        %v3174 = vld [vmem:[%s756 + $0xd4] sm:$0xf]
        %v3175 = vld [vmem:[%s756 + $0xd8] sm:$0xf]
        %v3176 = vld [vmem:[%s756 + $0xdc] sm:$0xf]
        %v3177 = vld [vmem:[%s756 + $0xe0] sm:$0xf]
        %v3178 = vld [vmem:[%s756 + $0xe4] sm:$0xf]
        %v3179 = vld [vmem:[%s756 + $0xe8] sm:$0xf]
        %v3180 = vld [vmem:[%s756 + $0xec] sm:$0xf]
        %v3181 = vld [vmem:[%s756 + $0xf0] sm:$0xf]
        %v3182 = vld [vmem:[%s756 + $0xf4] sm:$0xf]
        %v3183 = vld [vmem:[%s756 + $0xf8] sm:$0xf]
        %v3184 = vld [vmem:[%s756 + $0xfc] sm:$0xf]
        %v3185 = vld [vmem:[%s868] sm:$0x1]
        %v3186 = vpack.c.bf16 %v3117, %v3113
        %v3187 = vpack.c.bf16 %v3118, %v3114
        %v3188 = vpack.c.bf16 %v3119, %v3115
        %v3189 = vpack.c.bf16 %v3120, %v3116
        %v3191 = vlaneseq
        %v3192 = vshrl.u32 %v3191, 7
        %v3193 = vsub.s32 0, %v3192
        %v3194 = vrot.slane %v3185, %v3193
        %v3260 = vunpack.c.l.b16 %v3121
        %v3261 = vunpack.c.l.b16 %v3122
        %v3262 = vunpack.c.l.b16 %v3123
        %v3263 = vunpack.c.l.b16 %v3124
        %v3264 = vunpack.c.l.b16 %v3125
        %v3265 = vunpack.c.l.b16 %v3126
        %v3266 = vunpack.c.l.b16 %v3127
        %v3267 = vunpack.c.l.b16 %v3128
        %v3268 = vunpack.c.l.b16 %v3129
        %v3269 = vunpack.c.l.b16 %v3130
        %v3270 = vunpack.c.l.b16 %v3131
        %v3271 = vunpack.c.l.b16 %v3132
        %v3272 = vunpack.c.l.b16 %v3133
        %v3273 = vunpack.c.l.b16 %v3134
        %v3274 = vunpack.c.l.b16 %v3135
        %v3275 = vunpack.c.l.b16 %v3136
        %v3276 = vunpack.c.l.b16 %v3137
        %v3277 = vunpack.c.l.b16 %v3138
        %v3278 = vunpack.c.l.b16 %v3139
        %v3279 = vunpack.c.l.b16 %v3140
        %v3280 = vunpack.c.l.b16 %v3141
        %v3281 = vunpack.c.l.b16 %v3142
        %v3282 = vunpack.c.l.b16 %v3143
        %v3283 = vunpack.c.l.b16 %v3144
        %v3284 = vunpack.c.l.b16 %v3145
        %v3285 = vunpack.c.l.b16 %v3146
        %v3286 = vunpack.c.l.b16 %v3147
        %v3287 = vunpack.c.l.b16 %v3148
        %v3288 = vunpack.c.l.b16 %v3149
        %v3289 = vunpack.c.l.b16 %v3150
        %v3290 = vunpack.c.l.b16 %v3151
        %v3291 = vunpack.c.l.b16 %v3152
        %v3292 = vunpack.c.l.b16 %v3153
        %v3293 = vunpack.c.l.b16 %v3154
        %v3294 = vunpack.c.l.b16 %v3155
        %v3295 = vunpack.c.l.b16 %v3156
        %v3296 = vunpack.c.l.b16 %v3157
        %v3297 = vunpack.c.l.b16 %v3158
        %v3298 = vunpack.c.l.b16 %v3159
        %v3299 = vunpack.c.l.b16 %v3160
        %v3300 = vunpack.c.l.b16 %v3161
        %v3301 = vunpack.c.l.b16 %v3162
        %v3302 = vunpack.c.l.b16 %v3163
        %v3303 = vunpack.c.l.b16 %v3164
        %v3304 = vunpack.c.l.b16 %v3165
        %v3305 = vunpack.c.l.b16 %v3166
        %v3306 = vunpack.c.l.b16 %v3167
        %v3307 = vunpack.c.l.b16 %v3168
        %v3308 = vunpack.c.l.b16 %v3169
        %v3309 = vunpack.c.l.b16 %v3170
        %v3310 = vunpack.c.l.b16 %v3171
        %v3311 = vunpack.c.l.b16 %v3172
        %v3312 = vunpack.c.l.b16 %v3173
        %v3313 = vunpack.c.l.b16 %v3174
        %v3314 = vunpack.c.l.b16 %v3175
        %v3315 = vunpack.c.l.b16 %v3176
        %v3316 = vunpack.c.l.b16 %v3177
        %v3317 = vunpack.c.l.b16 %v3178
        %v3318 = vunpack.c.l.b16 %v3179
        %v3319 = vunpack.c.l.b16 %v3180
        %v3320 = vunpack.c.l.b16 %v3181
        %v3321 = vunpack.c.l.b16 %v3182
        %v3322 = vunpack.c.l.b16 %v3183
        %v3323 = vunpack.c.l.b16 %v3184
        %v3324 = vpack.c.b16 %v3261, %v3260
        %v3325 = vpack.c.b16 %v3263, %v3262
        %v3326 = vpack.c.b16 %v3265, %v3264
        %v3327 = vpack.c.b16 %v3267, %v3266
        %v3328 = vpack.c.b16 %v3269, %v3268
        %v3329 = vpack.c.b16 %v3271, %v3270
        %v3330 = vpack.c.b16 %v3273, %v3272
        %v3331 = vpack.c.b16 %v3275, %v3274
        %v3332 = vpack.c.b16 %v3277, %v3276
        %v3333 = vpack.c.b16 %v3279, %v3278
        %v3334 = vpack.c.b16 %v3281, %v3280
        %v3335 = vpack.c.b16 %v3283, %v3282
        %v3336 = vpack.c.b16 %v3285, %v3284
        %v3337 = vpack.c.b16 %v3287, %v3286
        %v3338 = vpack.c.b16 %v3289, %v3288
        %v3339 = vpack.c.b16 %v3291, %v3290
        %v3340 = vpack.c.b16 %v3293, %v3292
        %v3341 = vpack.c.b16 %v3295, %v3294
        %v3342 = vpack.c.b16 %v3297, %v3296
        %v3343 = vpack.c.b16 %v3299, %v3298
        %v3344 = vpack.c.b16 %v3301, %v3300
        %v3345 = vpack.c.b16 %v3303, %v3302
        %v3346 = vpack.c.b16 %v3305, %v3304
        %v3347 = vpack.c.b16 %v3307, %v3306
        %v3348 = vpack.c.b16 %v3309, %v3308
        %v3349 = vpack.c.b16 %v3311, %v3310
        %v3350 = vpack.c.b16 %v3313, %v3312
        %v3351 = vpack.c.b16 %v3315, %v3314
        %v3352 = vpack.c.b16 %v3317, %v3316
        %v3353 = vpack.c.b16 %v3319, %v3318
        %v3354 = vpack.c.b16 %v3321, %v3320
        %v3355 = vpack.c.b16 %v3323, %v3322
        %3388 = vmatprep.subr.bf16.mxu0 0
        %3389 = vmatpush1.bf16.msra.mxu0 %v3324
        %3390 = vmatprep.subr.bf16.mxu0 0
        %3391 = vmatpush1.bf16.msra.mxu0 %v3325
        %3392 = vmatprep.subr.bf16.mxu0 0
        %3393 = vmatpush1.bf16.msra.mxu0 %v3326
        %3394 = vmatprep.subr.bf16.mxu0 0
        %3395 = vmatpush1.bf16.msra.mxu0 %v3327
        %3396 = vmatprep.subr.bf16.mxu0 0
        %3397 = vmatpush1.bf16.msra.mxu0 %v3328
        %3398 = vmatprep.subr.bf16.mxu0 0
        %3399 = vmatpush1.bf16.msra.mxu0 %v3329
        %3400 = vmatprep.subr.bf16.mxu0 0
        %3401 = vmatpush1.bf16.msra.mxu0 %v3330
        %3402 = vmatprep.subr.bf16.mxu0 0
        %3403 = vmatpush1.bf16.msra.mxu0 %v3331
        %3404 = vmatprep.subr.bf16.mxu0 0
        %3405 = vmatpush1.bf16.msra.mxu0 %v3332
        %3406 = vmatprep.subr.bf16.mxu0 0
        %3407 = vmatpush1.bf16.msra.mxu0 %v3333
        %3408 = vmatprep.subr.bf16.mxu0 0
        %3409 = vmatpush1.bf16.msra.mxu0 %v3334
        %3410 = vmatprep.subr.bf16.mxu0 0
        %3411 = vmatpush1.bf16.msra.mxu0 %v3335
        %3412 = vmatprep.subr.bf16.mxu0 0
        %3413 = vmatpush1.bf16.msra.mxu0 %v3336
        %3414 = vmatprep.subr.bf16.mxu0 0
        %3415 = vmatpush1.bf16.msra.mxu0 %v3337
        %3416 = vmatprep.subr.bf16.mxu0 0
        %3417 = vmatpush1.bf16.msra.mxu0 %v3338
        %3418 = vmatprep.subr.bf16.mxu0 0
        %3419 = vmatpush1.bf16.msra.mxu0 %v3339
        %3420 = vmatprep.mubr.bf16.mxu0 %v3187
        %3421 = vmatmul.mubr.bf16.gmra.mrb[0].mxu0 %v3186
        %v3422 = vpop.f32.mrb[0].mxu0
        %v3423 = vadd.f32 %v3194, %v3422
        %v3424 = vpop.f32.mrb[0].mxu0
        %v3425 = vpop.f32.mrb[0].mxu0
        %v3426 = vadd.f32 %v3194, %v3425
        %v3427 = vpop.f32.mrb[0].mxu0
        %3428 = vdwg.mxu0
        %3429 = vmatprep.subr.bf16.mxu0 0
        %3430 = vmatpush1.bf16.msra.mxu0 %v3340
        %3431 = vmatprep.subr.bf16.mxu0 0
        %3432 = vmatpush1.bf16.msra.mxu0 %v3341
        %3433 = vmatprep.subr.bf16.mxu0 0
        %3434 = vmatpush1.bf16.msra.mxu0 %v3342
        %3435 = vmatprep.subr.bf16.mxu0 0
        %3436 = vmatpush1.bf16.msra.mxu0 %v3343
        %3437 = vmatprep.subr.bf16.mxu0 0
        %3438 = vmatpush1.bf16.msra.mxu0 %v3344
        %3439 = vmatprep.subr.bf16.mxu0 0
        %3440 = vmatpush1.bf16.msra.mxu0 %v3345
        %3441 = vmatprep.subr.bf16.mxu0 0
        %3442 = vmatpush1.bf16.msra.mxu0 %v3346
        %3443 = vmatprep.subr.bf16.mxu0 0
        %3444 = vmatpush1.bf16.msra.mxu0 %v3347
        %3445 = vmatprep.subr.bf16.mxu0 0
        %3446 = vmatpush1.bf16.msra.mxu0 %v3348
        %3447 = vmatprep.subr.bf16.mxu0 0
        %3448 = vmatpush1.bf16.msra.mxu0 %v3349
        %3449 = vmatprep.subr.bf16.mxu0 0
        %3450 = vmatpush1.bf16.msra.mxu0 %v3350
        %3451 = vmatprep.subr.bf16.mxu0 0
        %3452 = vmatpush1.bf16.msra.mxu0 %v3351
        %3453 = vmatprep.subr.bf16.mxu0 0
        %3454 = vmatpush1.bf16.msra.mxu0 %v3352
        %3455 = vmatprep.subr.bf16.mxu0 0
        %3456 = vmatpush1.bf16.msra.mxu0 %v3353
        %3457 = vmatprep.subr.bf16.mxu0 0
        %3458 = vmatpush1.bf16.msra.mxu0 %v3354
        %3459 = vmatprep.subr.bf16.mxu0 0
        %3460 = vmatpush1.bf16.msra.mxu0 %v3355
        %3461 = vmatprep.mubr.bf16.mxu0 %v3189
        %3462 = vmatmul.mubr.bf16.gmra.mrb[0].mxu0 %v3188
        %v3463 = vpop.f32.mrb[0].mxu0
        %v3464 = vadd.f32 %v3423, %v3463
        %v3465 = vpop.f32.mrb[0].mxu0
        %v3466 = vpop.f32.mrb[0].mxu0
        %v3467 = vadd.f32 %v3426, %v3466
        %v3468 = vpop.f32.mrb[0].mxu0
        %3469 = vdwg.mxu0
        %v3470 = vadd.f32 %v3464, %v2746
        %v3471 = vadd.f32 %v3467, %v2747
        %v3472 = vld [vmem:[%s871] sm:$0x1]
        %v3473 = vld [vmem:[%s874] sm:$0x1]
        %3474 = vadd.xlane.f32.xlu0 %v3470
        %v3475 = vpop.xlane.xlu0 %3474
        %3476 = vadd.xlane.f32.xlu0 %v3471
        %v3477 = vpop.xlane.xlu0 %3476
        %v3478 = vmul.f32 %v3475, %v2713
        %v3479 = vmul.f32 %v3477, %v2713
        %v3480 = vsub.f32 %v3470, %v3478
        %v3481 = vsub.f32 %v3471, %v3479
        %v3482 = vmul.f32 %v3480, %v3480
        %v3483 = vmul.f32 %v3481, %v3481
        %3484 = vadd.xlane.f32.xlu0 %v3482
        %v3485 = vpop.xlane.xlu0 %3484
        %3486 = vadd.xlane.f32.xlu0 %v3483
        %v3487 = vpop.xlane.xlu0 %3486
        %v3488 = vmul.f32 %v3485, %v2713
        %v3489 = vmul.f32 %v3487, %v2713
        %v3490 = vadd.f32 %v3488, 1e-12
        %v3491 = vadd.f32 %v3489, 1e-12
        %v3492 = vrsqrt.pop %v3490
        %v3493 = vrsqrt.pop %v3491
        %v3494 = vmul.f32 %v3480, %v3492
        %v3495 = vmul.f32 %v3481, %v3493
        %v3497 = vlaneseq
        %v3498 = vshrl.u32 %v3497, 7
        %v3499 = vsub.s32 0, %v3498
        %v3500 = vrot.slane %v3472, %v3499
        %v3502 = vmul.f32 %v3494, %v3500
        %v3503 = vmul.f32 %v3495, %v3500
        %v3505 = vlaneseq
        %v3506 = vshrl.u32 %v3505, 7
        %v3507 = vsub.s32 0, %v3506
        %v3508 = vrot.slane %v3473, %v3507
        %v3510 = vadd.f32 %v3502, %v3508
        %v3511 = vadd.f32 %v3503, %v3508
        %3512 = vst [vmem:[#allocation2] sm:$0xff] %v3510
        %3513 = vst [vmem:[#allocation2 + $0x8] sm:$0xff] %v3511
        %p3514 = scmp.eq.s32.totalorder %s33, 1
        // Predicated region
        $region133: #{tpu_custom_call.1} parent=91 // pred_check
          %p3515 = pneg %p3514
        $region134: #{tpu_custom_call.1} parent=91 // pred_check_branch
          %3517 = sbr.rel (%p3515) target = $region136
        $region135: #{tpu_custom_call.1} parent=91 // pred_region
          %v3518 = vld [vmem:[#allocation16] sm:$0xf]
          %v3519 = vld [vmem:[#allocation16 + $0x4] sm:$0xf]
          %v3520 = vld [vmem:[#allocation16 + $0x8] sm:$0xf]
          %v3521 = vld [vmem:[#allocation16 + $0xc] sm:$0xf]
          %v3522 = vld [vmem:[#allocation16 + $0x10] sm:$0xf]
          %v3523 = vld [vmem:[#allocation16 + $0x14] sm:$0xf]
          %v3524 = vld [vmem:[#allocation16 + $0x18] sm:$0xf]
          %v3525 = vld [vmem:[#allocation16 + $0x1c] sm:$0xf]
          %v3526 = vld [vmem:[#allocation16 + $0x20] sm:$0xf]
          %v3527 = vld [vmem:[#allocation16 + $0x24] sm:$0xf]
          %v3528 = vld [vmem:[#allocation16 + $0x28] sm:$0xf]
          %v3529 = vld [vmem:[#allocation16 + $0x2c] sm:$0xf]
          %v3530 = vld [vmem:[#allocation16 + $0x30] sm:$0xf]
          %v3531 = vld [vmem:[#allocation16 + $0x34] sm:$0xf]
          %v3532 = vld [vmem:[#allocation16 + $0x38] sm:$0xf]
          %v3533 = vld [vmem:[#allocation16 + $0x3c] sm:$0xf]
          %v3534 = vld [vmem:[%s17] sm:$0x1]
          %v3535 = vpack.c.bf16 %v3510, %v3510
          %v3536 = vpack.c.bf16 %v3511, %v3511
          %v3538 = vlaneseq
          %v3539 = vshrl.u32 %v3538, 7
          %v3540 = vsub.s32 0, %v3539
          %v3541 = vrot.slane %v3534, %v3540
          %v3545 = vunpack.c.l.b16 %v3535
          %v3546 = vunpack.c.l.b16 %v3536
          %v3547 = vrot.slane %v3546, 7
          %vm3548 = vcmask 1041409
          %v3549 = vsel %vm3548, %v3547, %v3545
          %v3550 = vpack.c.b16 %v3549, %v3549
          %v3568 = vunpack.c.l.b16 %v3518
          %v3569 = vunpack.c.l.b16 %v3519
          %v3570 = vunpack.c.l.b16 %v3520
          %v3571 = vunpack.c.l.b16 %v3521
          %v3572 = vunpack.c.l.b16 %v3522
          %v3573 = vunpack.c.l.b16 %v3523
          %v3574 = vunpack.c.l.b16 %v3524
          %v3575 = vunpack.c.l.b16 %v3525
          %v3576 = vunpack.c.l.b16 %v3526
          %v3577 = vunpack.c.l.b16 %v3527
          %v3578 = vunpack.c.l.b16 %v3528
          %v3579 = vunpack.c.l.b16 %v3529
          %v3580 = vunpack.c.l.b16 %v3530
          %v3581 = vunpack.c.l.b16 %v3531
          %v3582 = vunpack.c.l.b16 %v3532
          %v3583 = vunpack.c.l.b16 %v3533
          %v3584 = vpack.c.b16 %v3569, %v3568
          %v3585 = vpack.c.b16 %v3571, %v3570
          %v3586 = vpack.c.b16 %v3573, %v3572
          %v3587 = vpack.c.b16 %v3575, %v3574
          %v3588 = vpack.c.b16 %v3577, %v3576
          %v3589 = vpack.c.b16 %v3579, %v3578
          %v3590 = vpack.c.b16 %v3581, %v3580
          %v3591 = vpack.c.b16 %v3583, %v3582
          %3600 = vmatprep.subr.bf16.mxu0 0
          %3601 = vmatpush1.bf16.msra.mxu0 %v3584
          %3602 = vmatprep.subr.bf16.mxu0 0
          %3603 = vmatpush1.bf16.msra.mxu0 %v3585
          %3604 = vmatprep.subr.bf16.mxu0 0
          %3605 = vmatpush1.bf16.msra.mxu0 %v3586
          %3606 = vmatprep.subr.bf16.mxu0 0
          %3607 = vmatpush1.bf16.msra.mxu0 %v3587
          %3608 = vmatprep.subr.bf16.mxu0 0
          %3609 = vmatpush1.bf16.msra.mxu0 %v3588
          %3610 = vmatprep.subr.bf16.mxu0 0
          %3611 = vmatpush1.bf16.msra.mxu0 %v3589
          %3612 = vmatprep.subr.bf16.mxu0 0
          %3613 = vmatpush1.bf16.msra.mxu0 %v3590
          %3614 = vmatprep.subr.bf16.mxu0 0
          %3615 = vmatpush1.bf16.msra.mxu0 %v3591
          %3616 = vmatprep.subr.bf16.mxu0 0
          %3617 = vmatpush1.bf16.msra.mxu0 0
          %3618 = vmatprep.subr.bf16.mxu0 0
          %3619 = vmatpush1.bf16.msra.mxu0 0
          %3620 = vmatprep.subr.bf16.mxu0 0
          %3621 = vmatpush1.bf16.msra.mxu0 0
          %3622 = vmatprep.subr.bf16.mxu0 0
          %3623 = vmatpush1.bf16.msra.mxu0 0
          %3624 = vmatprep.subr.bf16.mxu0 0
          %3625 = vmatpush1.bf16.msra.mxu0 0
          %3626 = vmatprep.subr.bf16.mxu0 0
          %3627 = vmatpush1.bf16.msra.mxu0 0
          %3628 = vmatprep.subr.bf16.mxu0 0
          %3629 = vmatpush1.bf16.msra.mxu0 0
          %3630 = vmatprep.subr.bf16.mxu0 0
          %3631 = vmatpush1.bf16.msra.mxu0 0
          %3632 = vmatprep.mubr.bf16.mxu0 0
          %3633 = vmatmul.mubr.bf16.gmra.mrb[0].mxu0 %v3550
          %v3634 = vpop.f32.mrb[0].mxu0
          %v3635 = vadd.f32 %v3541, %v3634
          %v3636 = vpop.f32.mrb[0].mxu0
          %v3637 = vpop.f32.mrb[0].mxu0
          %v3638 = vpop.f32.mrb[0].mxu0
          %3639 = vdwg.mxu0
          %v3640 = vtanh.pop %v3635
          %3641 = vst [vmem:[#allocation17] sm:$0x3] %v3640
        $region136: #{tpu_custom_call.1} parent=91 // pred_fallthru
          _
        // Predicated region
        $region137: #{tpu_custom_call.1} parent=91 // pred_check
          %p3642 = pneg %p484
        $region138: #{tpu_custom_call.1} parent=91 // pred_check_branch
          %3644 = sbr.rel (%p3642) target = $region140
        $region139: #{tpu_custom_call.1} parent=91 // pred_region
          %s3646 = ssub.s32 32, 32
          %3647 = vsyncadd [#allocation6], %s3646
          %s3649 = sshll.u32 [#allocation17], 4
          %s3650 = int_to_ptr.vmem [resolvable:$true] %s3649
          %3652 = dma.vmem_to_hbm [thread:$0]  %s3650, 32, %s18, [#allocation6]
        $region140: #{tpu_custom_call.1} parent=91 // pred_fallthru
          _
        // Predicated region
        $region141: #{tpu_custom_call.1} parent=91 // pred_check
          %p3653 = pneg %p484
        $region142: #{tpu_custom_call.1} parent=91 // pred_check_branch
          %3655 = sbr.rel (%p3653) target = $region144
        $region143: #{tpu_custom_call.1} parent=91 // pred_region
          %3656 = dma.done [#allocation6], 32
        $region144: #{tpu_custom_call.1} parent=91 // pred_fallthru
          _
      $region92: #{tpu_custom_call.1} parent=5 // pred_fallthru
        _
      %p3657 = scmp.le.s32.totalorder 2, %s28
      // Predicated region
      $region145: #{tpu_custom_call.1} parent=5 // pred_check
        %p3658 = pneg %p3657
      $region146: #{tpu_custom_call.1} parent=5 // pred_check_branch
        %3660 = sbr.rel (%p3658) target = $region148
      $region147: #{tpu_custom_call.1} parent=5 // pred_region
        %s3661 = ssub.s32 %s28, 2
      $region148: #{tpu_custom_call.1} parent=5 // pred_fallthru
        _
    $region6: #{tpu_custom_call.1} parent=1 // loop_footer
      %s32 = sadd.s32 1, %s28
    $region7: #{tpu_custom_call.1} parent=1 // loop_footer_branch
      %27 = sbr.rel target = $region3
    $region8: #{tpu_custom_call.1} parent=1 // loop_exit
      _
    %3662 = vsyncpa [#allocation5], 1
    %s3663 = scalar_lea.sflag [#allocation5], 1
    %3664 = vsyncpa %s3663, 1
    %3665 = vsyncpa [#allocation8], 1
    %3666 = vsyncpa [#allocation11], 1
    %3667 = vsyncpa [#allocation6], 1
    %s3668 = scalar_lea.sflag [#allocation6], 1
    %3669 = vsyncpa %s3668, 1

</llo_original>
